<compile_context>
chip_gen: v6e
topology: v6e:2x2x1
jax: 0.10.0
libtpu: 0.0.40
codegen_flags: <defaults>
</compile_context>

<pallas_src>
import numpy as np
import jax
import jax.numpy as jnp
from jax import lax
from jax.experimental import pallas as pl
from jax.experimental.pallas import tpu as pltpu

# --- module hyper-parameters (spike_args / NetworkBuilder args) ----------------
THRESH = 0.5           # spike_args['thresh']
DECAY = 0.2            # spike_args['decay']
RANDKILL = 1.0         # self.randKill
SPIKE_WINDOW = 4       # self.spike_window
B = 2                  # train_batch_size
IN_CH = 4              # input_channels
H = W = 16             # input_size
OUT_CH = 8             # CONV_8
KSIZE, STRIDE, PAD = 3, 1, 1
NUM_CLASSES = 10       # FC_10
HO, WO = H // 2, W // 2
Q = HO * WO                        # 64 pooled pixels per image
KDIM = IN_CH * KSIZE * KSIZE       # 36 im2col rows
FC_IN = OUT_CH * Q                 # 512
NPAD = 128                         # class lanes per batch element (10 -> 128)
LANES = 4 * B * Q                  # 512 conv lanes: d*128 + b*64 + q


# ------------------------------ fused Pallas kernel ----------------------------
def _snn_fused_kernel(patches_ref, wc_ref, bc_ref, vfc_ref, bfc_ref,
                      out_ref, mem0_ref):
    wc = wc_ref[...]                                    # (8, 36)
    bc = jnp.broadcast_to(bc_ref[...], (OUT_CH, LANES))  # hoisted bias broadcast
    bfc = bfc_ref[...]                                   # (1, 256)

    cmem = jnp.zeros((OUT_CH, LANES), jnp.float32)
    cspk = jnp.zeros((OUT_CH, LANES), jnp.float32)
    fmem = jnp.zeros((1, B * NPAD), jnp.float32)
    fspk = jnp.zeros((1, B * NPAD), jnp.float32)
    fsum = jnp.zeros((1, B * NPAD), jnp.float32)
    mem0 = None

    for t in range(SPIKE_WINDOW):
        # ---- conv2d (one lane-dense im2col matmul) + LIF ----------------------
        z = jnp.dot(wc, patches_ref[t],
                    preferred_element_type=jnp.float32) + bc        # (8, 512)
        cmem = cmem * DECAY * (1.0 - cspk) + z
        cspk = (cmem > THRESH).astype(jnp.float32)
        if t == 0:
            mem0 = cmem                                             # debug output

        # ---- AvgPool2x2 = mean of the 4 quadrant lane-slices (128-aligned) ----
        pooled = 0.25 * (cspk[:, 0:128] + cspk[:, 128:256]
                         + cspk[:, 256:384] + cspk[:, 384:512])     # (8, 128)

        # ---- FC + LIF: per-channel accumulating (1,128)@(128,256) matmuls -----
        # vfc_ref[c] is block-diagonal over batch, so both batch elements are
        # handled in one matmul; class dim is padded to 128 lanes per batch.
        fz = bfc                                                     # (1, 256)
        for c in range(OUT_CH):
            fz = fz + jnp.dot(pooled[c:c + 1, :], vfc_ref[c],
                              preferred_element_type=jnp.float32)
        fmem = fmem * DECAY * (1.0 - fspk) + fz
        fspk = (fmem > THRESH).astype(jnp.float32)
        fsum = fsum + fspk

    out_ref[...] = fsum * (1.0 / SPIKE_WINDOW)
    mem0_ref[...] = mem0


# ------------------------------ host-side glue ---------------------------------
def _im2col_quadrants(x):
    """x: (B, Cin, H, W) spikes -> (B, 4, Cin*9, Ho*Wo) patch matrices.

    Output [b, d, k, q] with d = dh*2+dw, k = ci*9 + kh*3 + kw, q = ho*Wo + wo
    equals x_padded[b, ci, 2*ho+dh+kh, 2*wo+dw+kw]  (3x3 conv, pad=1, stride=1).
    """
    nb = x.shape[0]
    xp = jnp.pad(x, ((0, 0), (0, 0), (PAD, PAD), (PAD, PAD)))
    cols = jnp.stack([xp[:, :, kh:kh + H, kw:kw + W]
                      for kh in range(KSIZE) for kw in range(KSIZE)], axis=2)
    cols = cols.reshape(nb, IN_CH, KSIZE * KSIZE, HO, 2, WO, 2)   # (B,Cin,9,ho,dh,wo,dw)
    cols = jnp.transpose(cols, (0, 4, 6, 1, 2, 3, 5))             # (B,dh,dw,Cin,9,ho,wo)
    return cols.reshape(nb, 4, KDIM, Q)


@jax.jit
def snn_forward(inp, rands, conv_w, conv_b, fc_w, fc_b):
    """NetworkBuilder.forward for the SNN network (labels=None)."""
    # ---- one-time weight preprocessing ----------------------------------------
    wc = conv_w.reshape(OUT_CH, KDIM)                   # (8, 36)
    bc = conv_b.reshape(OUT_CH, 1)                      # (8, 1)

    # FC weight permuted to consume the pooled (c, b*64+q) layout directly,
    # block-diagonal over batch, class dim padded 10 -> 128 lanes per batch.
    v = jnp.transpose(fc_w.reshape(NUM_CLASSES, OUT_CH, Q), (1, 2, 0))  # (8,64,10)
    vfc = jnp.zeros((OUT_CH, B * Q, B * NPAD), jnp.float32)             # (8,128,256)
    bfc = jnp.zeros((1, B * NPAD), jnp.float32)                         # (1,256)
    for b in range(B):
        vfc = vfc.at[:, b * Q:(b + 1) * Q, b * NPAD:b * NPAD + NUM_CLASSES].set(v)
        bfc = bfc.at[0, b * NPAD:b * NPAD + NUM_CLASSES].set(fc_b)

    # ---- Bernoulli input spikes + im2col, lane layout d*128 + b*64 + q --------
    xs = (inp[None] > rands * RANDKILL).astype(jnp.float32)        # (T, B, Cin, H, W)
    p = jnp.stack([_im2col_quadrants(xs[t])
                   for t in range(SPIKE_WINDOW)])                  # (T, B, 4, 36, 64)
    patches = jnp.transpose(p, (0, 3, 2, 1, 4)).reshape(
        SPIKE_WINDOW, KDIM, LANES)                                 # (T, 36, 512)

    out_flat, mem0 = pl.pallas_call(
        _snn_fused_kernel,
        out_shape=[
            jax.ShapeDtypeStruct((1, B * NPAD), jnp.float32),      # sumspike / T
            jax.ShapeDtypeStruct((OUT_CH, LANES), jnp.float32),    # conv mem after t=0
        ],
        grid_spec=pltpu.PrefetchScalarGridSpec(
            num_scalar_prefetch=0,
            grid=(1,),                                             # single invocation
            in_specs=[
                pl.BlockSpec((SPIKE_WINDOW, KDIM, LANES), lambda i: (0, 0, 0)),
                pl.BlockSpec((OUT_CH, KDIM), lambda i: (0, 0)),
                pl.BlockSpec((OUT_CH, 1), lambda i: (0, 0)),
                pl.BlockSpec((OUT_CH, B * Q, B * NPAD), lambda i: (0, 0, 0)),
                pl.BlockSpec((1, B * NPAD), lambda i: (0, 0)),
            ],
            out_specs=[
                pl.BlockSpec((1, B * NPAD), lambda i: (0, 0)),
                pl.BlockSpec((OUT_CH, LANES), lambda i: (0, 0)),
            ],
        ),
        compiler_params=pltpu.CompilerParams(
            dimension_semantics=("arbitrary",)),
    )(patches, wc, bc, vfc, bfc)

    out = out_flat.reshape(B, NPAD)[:, :NUM_CLASSES]               # (2, 10)
    return out, mem0


# ------------------------------ pure-JAX reference ------------------------------
def reference_forward(inp, rands, conv_w, conv_b, fc_w, fc_b):
    conv_mem = jnp.zeros((B, OUT_CH, H, W), jnp.float32)
    conv_spk = jnp.zeros_like(conv_mem)
    fc_mem = jnp.zeros((B, NUM_CLASSES), jnp.float32)
    fc_spk = jnp.zeros_like(fc_mem)
    fc_sum = jnp.zeros_like(fc_mem)
    for t in range(SPIKE_WINDOW):
        x = (inp > rands[t] * RANDKILL).astype(jnp.float32)
        z = lax.conv_general_dilated(
            x, conv_w, (STRIDE, STRIDE), ((PAD, PAD), (PAD, PAD)),
            dimension_numbers=('NCHW', 'OIHW', 'NCHW'),
            precision=lax.Precision.HIGHEST) + conv_b[None, :, None, None]
        conv_mem = conv_mem * DECAY * (1.0 - conv_spk) + z
        conv_spk = (conv_mem > THRESH).astype(jnp.float32)
        pooled = conv_spk.reshape(B, OUT_CH, HO, 2, WO, 2).mean(axis=(3, 5))
        fc_in = pooled.reshape(B, -1)                    # PyTorch NCHW flatten
        zf = jnp.dot(fc_in, fc_w.T, precision=lax.Precision.HIGHEST) + fc_b[None, :]
        fc_mem = fc_mem * DECAY * (1.0 - fc_spk) + zf
        fc_spk = (fc_mem > THRESH).astype(jnp.float32)
        fc_sum = fc_sum + fc_spk
    return fc_sum / SPIKE_WINDOW


# ------------------------------ main ---------------------------------------------
if __name__ == "__main__":
    key = jax.random.PRNGKey(0)
    k1, k2, k3, k4, k5, krand = jax.random.split(key, 6)

    conv_w = jax.random.normal(k1, (OUT_CH, IN_CH, KSIZE, KSIZE), jnp.float32) * 0.2
    conv_b = jax.random.normal(k2, (OUT_CH,), jnp.float32) * 0.1
    fc_w = jax.random.normal(k3, (NUM_CLASSES, FC_IN), jnp.float32) * 0.05
    fc_b = jax.random.normal(k4, (NUM_CLASSES,), jnp.float32) * 0.1
    inp = jax.random.uniform(k5, (B, IN_CH, H, W), jnp.float32)

    rand_keys = jax.random.split(krand, SPIKE_WINDOW)
    rands = jnp.stack([jax.random.uniform(rk, inp.shape, jnp.float32)
                       for rk in rand_keys])                      # (T, B, Cin, H, W)

    # --- fused forward pass -------------------------------------------------------
    out, mem_t0 = snn_forward(inp, rands, conv_w, conv_b, fc_w, fc_b)
    out = jax.block_until_ready(out)
    mem_t0 = jax.block_until_ready(mem_t0)

    # --- structural checks on the rate-coded output --------------------------------
    out_np = np.asarray(out)
    assert out_np.shape == (B, NUM_CLASSES)
    assert np.all(np.isfinite(out_np))
    assert out_np.min() >= -1e-6 and out_np.max() <= 1.0 + 1e-6
    # sumspike/spike_window is quantized to multiples of 1/4
    assert np.allclose(out_np * SPIKE_WINDOW, np.round(out_np * SPIKE_WINDOW), atol=1e-5)

    # --- strict check on the continuous conv membrane after t=0 --------------------
    # (MXU f32 matmul at default precision vs. HIGHEST-precision XLA reference:
    #  atol/rtol 1e-3 absorbs the pass-count difference at these weight scales.)
    x0 = (inp > rands[0] * RANDKILL).astype(jnp.float32)
    ref_conv0 = lax.conv_general_dilated(
        x0, conv_w, (STRIDE, STRIDE), ((PAD, PAD), (PAD, PAD)),
        dimension_numbers=('NCHW', 'OIHW', 'NCHW'),
        precision=lax.Precision.HIGHEST) + conv_b[None, :, None, None]
    # kernel layout [c, d*128 + b*64 + q] with d=(dh,dw), q=(ho,wo) -> NCHW
    mem_t0_nchw = (np.asarray(mem_t0)
                   .reshape(OUT_CH, 2, 2, B, HO, WO)
                   .transpose(3, 0, 4, 1, 5, 2)
                   .reshape(B, OUT_CH, H, W))
    np.testing.assert_allclose(mem_t0_nchw, np.asarray(ref_conv0), atol=1e-3, rtol=1e-3)

    # --- lenient full-forward check (threshold decisions may flip on exact f32 ties)
    ref = np.asarray(reference_forward(inp, rands, conv_w, conv_b, fc_w, fc_b))
    diff = np.abs(out_np - ref)
    assert diff.mean() <= 0.05
    assert int((diff > 1e-4).sum()) <= 2

    print("KERNEL_OK")
</pallas_src>

<mosaic_0001>
module attributes {stable_mosaic.version = 11 : i64} {
  func.func @_snn_fused_kernel(%arg0: i32, %arg1: memref<4x36x512xf32, #tpu.memory_space<vmem>>, %arg2: memref<8x36xf32, #tpu.memory_space<vmem>>, %arg3: memref<8x1xf32, #tpu.memory_space<vmem>>, %arg4: memref<8x128x256xf32, #tpu.memory_space<vmem>>, %arg5: memref<1x256xf32, #tpu.memory_space<vmem>>, %arg6: memref<1x256xf32, #tpu.memory_space<vmem>>, %arg7: memref<8x512xf32, #tpu.memory_space<vmem>>) attributes {dimension_semantics = [#tpu.dimension_semantics<arbitrary>], iteration_bounds = array<i64: 1>, scalar_prefetch = 0 : i64, scratch_operands = 0 : i64, tpu.core_type = #tpu.core_type<tc>, window_params = [{pipeline_mode = #tpu.pipeline_mode<synchronous>, transform_indices = @transform_0, window_bounds = array<i64: 4, 36, 512>}, {pipeline_mode = #tpu.pipeline_mode<synchronous>, transform_indices = @transform_1, window_bounds = array<i64: 8, 36>}, {pipeline_mode = #tpu.pipeline_mode<synchronous>, transform_indices = @transform_2, window_bounds = array<i64: 8, 1>}, {pipeline_mode = #tpu.pipeline_mode<synchronous>, transform_indices = @transform_3, window_bounds = array<i64: 8, 128, 256>}, {pipeline_mode = #tpu.pipeline_mode<synchronous>, transform_indices = @transform_4, window_bounds = array<i64: 1, 256>}, {pipeline_mode = #tpu.pipeline_mode<synchronous>, transform_indices = @transform_5, window_bounds = array<i64: 1, 256>}, {pipeline_mode = #tpu.pipeline_mode<synchronous>, transform_indices = @transform_6, window_bounds = array<i64: 8, 512>}]} {
    %c0 = arith.constant 0 : index
    %c0_0 = arith.constant 0 : index
    %0 = vector.load %arg2[%c0, %c0_0] : memref<8x36xf32, #tpu.memory_space<vmem>>, vector<8x36xf32>
    %c0_1 = arith.constant 0 : index
    %c0_2 = arith.constant 0 : index
    %1 = vector.load %arg3[%c0_1, %c0_2] : memref<8x1xf32, #tpu.memory_space<vmem>>, vector<8x1xf32>
    %2 = vector.shape_cast %1 : vector<8x1xf32> to vector<8x1xf32>
    %3 = vector.broadcast %2 : vector<8x1xf32> to vector<8x512xf32>
    %c0_3 = arith.constant 0 : index
    %c0_4 = arith.constant 0 : index
    %4 = vector.load %arg5[%c0_3, %c0_4] : memref<1x256xf32, #tpu.memory_space<vmem>>, vector<1x256xf32>
    %cst = arith.constant 0.000000e+00 : f32
    %5 = vector.broadcast %cst : f32 to vector<8x512xf32>
    %cst_5 = arith.constant 0.000000e+00 : f32
    %6 = vector.broadcast %cst_5 : f32 to vector<8x512xf32>
    %cst_6 = arith.constant 0.000000e+00 : f32
    %7 = vector.broadcast %cst_6 : f32 to vector<1x256xf32>
    %cst_7 = arith.constant 0.000000e+00 : f32
    %8 = vector.broadcast %cst_7 : f32 to vector<1x256xf32>
    %cst_8 = arith.constant 0.000000e+00 : f32
    %9 = vector.broadcast %cst_8 : f32 to vector<1x256xf32>
    %c0_9 = arith.constant 0 : index
    %c0_10 = arith.constant 0 : index
    %c0_11 = arith.constant 0 : index
    %10 = vector.load %arg1[%c0_9, %c0_10, %c0_11] : memref<4x36x512xf32, #tpu.memory_space<vmem>>, vector<1x36x512xf32>
    %11 = vector.shape_cast %10 : vector<1x36x512xf32> to vector<36x512xf32>
    %cst_12 = arith.constant dense<0.000000e+00> : vector<8x512xf32>
    %12 = tpu.matmul %0, %11, %cst_12 {dimension_numbers = #tpu.dot_dimension_numbers<[1], [0], [0], [1], [0, 0, 1, 1], [], []>} : vector<8x36xf32>, vector<36x512xf32>, vector<8x512xf32> -> vector<8x512xf32>
    %13 = arith.addf %12, %3 : vector<8x512xf32>
    %cst_13 = arith.constant 2.000000e-01 : f32
    %14 = vector.broadcast %cst_13 : f32 to vector<8x512xf32>
    %15 = arith.mulf %5, %14 : vector<8x512xf32>
    %cst_14 = arith.constant 1.000000e+00 : f32
    %16 = vector.broadcast %cst_14 : f32 to vector<8x512xf32>
    %17 = arith.subf %16, %6 : vector<8x512xf32>
    %18 = arith.mulf %15, %17 : vector<8x512xf32>
    %19 = arith.addf %18, %13 : vector<8x512xf32>
    %cst_15 = arith.constant 5.000000e-01 : f32
    %20 = vector.broadcast %cst_15 : f32 to vector<8x512xf32>
    %21 = arith.cmpf ogt, %19, %20 : vector<8x512xf32>
    %22 = arith.extui %21 : vector<8x512xi1> to vector<8x512xi32>
    %23 = arith.sitofp %22 : vector<8x512xi32> to vector<8x512xf32>
    %24 = vector.extract_strided_slice %23 {offsets = [0, 0], sizes = [8, 128], strides = [1, 1]} : vector<8x512xf32> to vector<8x128xf32>
    %25 = vector.extract_strided_slice %23 {offsets = [0, 128], sizes = [8, 128], strides = [1, 1]} : vector<8x512xf32> to vector<8x128xf32>
    %26 = arith.addf %24, %25 : vector<8x128xf32>
    %27 = vector.extract_strided_slice %23 {offsets = [0, 256], sizes = [8, 128], strides = [1, 1]} : vector<8x512xf32> to vector<8x128xf32>
    %28 = arith.addf %26, %27 : vector<8x128xf32>
    %29 = vector.extract_strided_slice %23 {offsets = [0, 384], sizes = [8, 128], strides = [1, 1]} : vector<8x512xf32> to vector<8x128xf32>
    %30 = arith.addf %28, %29 : vector<8x128xf32>
    %cst_16 = arith.constant 2.500000e-01 : f32
    %31 = vector.broadcast %cst_16 : f32 to vector<8x128xf32>
    %32 = arith.mulf %31, %30 : vector<8x128xf32>
    %33 = vector.extract_strided_slice %32 {offsets = [0, 0], sizes = [1, 128], strides = [1, 1]} : vector<8x128xf32> to vector<1x128xf32>
    %c0_17 = arith.constant 0 : index
    %c0_18 = arith.constant 0 : index
    %c0_19 = arith.constant 0 : index
    %34 = vector.load %arg4[%c0_17, %c0_18, %c0_19] : memref<8x128x256xf32, #tpu.memory_space<vmem>>, vector<1x128x256xf32>
    %35 = vector.shape_cast %34 : vector<1x128x256xf32> to vector<128x256xf32>
    %cst_20 = arith.constant dense<0.000000e+00> : vector<1x256xf32>
    %36 = tpu.matmul %33, %35, %cst_20 {dimension_numbers = #tpu.dot_dimension_numbers<[1], [0], [0], [1], [0, 0, 1, 1], [], []>} : vector<1x128xf32>, vector<128x256xf32>, vector<1x256xf32> -> vector<1x256xf32>
    %37 = arith.addf %4, %36 : vector<1x256xf32>
    %38 = vector.extract_strided_slice %32 {offsets = [1, 0], sizes = [1, 128], strides = [1, 1]} : vector<8x128xf32> to vector<1x128xf32>
    %c1 = arith.constant 1 : index
    %c0_21 = arith.constant 0 : index
    %c0_22 = arith.constant 0 : index
    %39 = vector.load %arg4[%c1, %c0_21, %c0_22] : memref<8x128x256xf32, #tpu.memory_space<vmem>>, vector<1x128x256xf32>
    %40 = vector.shape_cast %39 : vector<1x128x256xf32> to vector<128x256xf32>
    %cst_23 = arith.constant dense<0.000000e+00> : vector<1x256xf32>
    %41 = tpu.matmul %38, %40, %cst_23 {dimension_numbers = #tpu.dot_dimension_numbers<[1], [0], [0], [1], [0, 0, 1, 1], [], []>} : vector<1x128xf32>, vector<128x256xf32>, vector<1x256xf32> -> vector<1x256xf32>
    %42 = arith.addf %37, %41 : vector<1x256xf32>
    %43 = vector.extract_strided_slice %32 {offsets = [2, 0], sizes = [1, 128], strides = [1, 1]} : vector<8x128xf32> to vector<1x128xf32>
    %c2 = arith.constant 2 : index
    %c0_24 = arith.constant 0 : index
    %c0_25 = arith.constant 0 : index
    %44 = vector.load %arg4[%c2, %c0_24, %c0_25] : memref<8x128x256xf32, #tpu.memory_space<vmem>>, vector<1x128x256xf32>
    %45 = vector.shape_cast %44 : vector<1x128x256xf32> to vector<128x256xf32>
    %cst_26 = arith.constant dense<0.000000e+00> : vector<1x256xf32>
    %46 = tpu.matmul %43, %45, %cst_26 {dimension_numbers = #tpu.dot_dimension_numbers<[1], [0], [0], [1], [0, 0, 1, 1], [], []>} : vector<1x128xf32>, vector<128x256xf32>, vector<1x256xf32> -> vector<1x256xf32>
    %47 = arith.addf %42, %46 : vector<1x256xf32>
    %48 = vector.extract_strided_slice %32 {offsets = [3, 0], sizes = [1, 128], strides = [1, 1]} : vector<8x128xf32> to vector<1x128xf32>
    %c3 = arith.constant 3 : index
    %c0_27 = arith.constant 0 : index
    %c0_28 = arith.constant 0 : index
    %49 = vector.load %arg4[%c3, %c0_27, %c0_28] : memref<8x128x256xf32, #tpu.memory_space<vmem>>, vector<1x128x256xf32>
    %50 = vector.shape_cast %49 : vector<1x128x256xf32> to vector<128x256xf32>
    %cst_29 = arith.constant dense<0.000000e+00> : vector<1x256xf32>
    %51 = tpu.matmul %48, %50, %cst_29 {dimension_numbers = #tpu.dot_dimension_numbers<[1], [0], [0], [1], [0, 0, 1, 1], [], []>} : vector<1x128xf32>, vector<128x256xf32>, vector<1x256xf32> -> vector<1x256xf32>
    %52 = arith.addf %47, %51 : vector<1x256xf32>
    %53 = vector.extract_strided_slice %32 {offsets = [4, 0], sizes = [1, 128], strides = [1, 1]} : vector<8x128xf32> to vector<1x128xf32>
    %c4 = arith.constant 4 : index
    %c0_30 = arith.constant 0 : index
    %c0_31 = arith.constant 0 : index
    %54 = vector.load %arg4[%c4, %c0_30, %c0_31] : memref<8x128x256xf32, #tpu.memory_space<vmem>>, vector<1x128x256xf32>
    %55 = vector.shape_cast %54 : vector<1x128x256xf32> to vector<128x256xf32>
    %cst_32 = arith.constant dense<0.000000e+00> : vector<1x256xf32>
    %56 = tpu.matmul %53, %55, %cst_32 {dimension_numbers = #tpu.dot_dimension_numbers<[1], [0], [0], [1], [0, 0, 1, 1], [], []>} : vector<1x128xf32>, vector<128x256xf32>, vector<1x256xf32> -> vector<1x256xf32>
    %57 = arith.addf %52, %56 : vector<1x256xf32>
    %58 = vector.extract_strided_slice %32 {offsets = [5, 0], sizes = [1, 128], strides = [1, 1]} : vector<8x128xf32> to vector<1x128xf32>
    %c5 = arith.constant 5 : index
    %c0_33 = arith.constant 0 : index
    %c0_34 = arith.constant 0 : index
    %59 = vector.load %arg4[%c5, %c0_33, %c0_34] : memref<8x128x256xf32, #tpu.memory_space<vmem>>, vector<1x128x256xf32>
    %60 = vector.shape_cast %59 : vector<1x128x256xf32> to vector<128x256xf32>
    %cst_35 = arith.constant dense<0.000000e+00> : vector<1x256xf32>
    %61 = tpu.matmul %58, %60, %cst_35 {dimension_numbers = #tpu.dot_dimension_numbers<[1], [0], [0], [1], [0, 0, 1, 1], [], []>} : vector<1x128xf32>, vector<128x256xf32>, vector<1x256xf32> -> vector<1x256xf32>
    %62 = arith.addf %57, %61 : vector<1x256xf32>
    %63 = vector.extract_strided_slice %32 {offsets = [6, 0], sizes = [1, 128], strides = [1, 1]} : vector<8x128xf32> to vector<1x128xf32>
    %c6 = arith.constant 6 : index
    %c0_36 = arith.constant 0 : index
    %c0_37 = arith.constant 0 : index
    %64 = vector.load %arg4[%c6, %c0_36, %c0_37] : memref<8x128x256xf32, #tpu.memory_space<vmem>>, vector<1x128x256xf32>
    %65 = vector.shape_cast %64 : vector<1x128x256xf32> to vector<128x256xf32>
    %cst_38 = arith.constant dense<0.000000e+00> : vector<1x256xf32>
    %66 = tpu.matmul %63, %65, %cst_38 {dimension_numbers = #tpu.dot_dimension_numbers<[1], [0], [0], [1], [0, 0, 1, 1], [], []>} : vector<1x128xf32>, vector<128x256xf32>, vector<1x256xf32> -> vector<1x256xf32>
    %67 = arith.addf %62, %66 : vector<1x256xf32>
    %68 = vector.extract_strided_slice %32 {offsets = [7, 0], sizes = [1, 128], strides = [1, 1]} : vector<8x128xf32> to vector<1x128xf32>
    %c7 = arith.constant 7 : index
    %c0_39 = arith.constant 0 : index
    %c0_40 = arith.constant 0 : index
    %69 = vector.load %arg4[%c7, %c0_39, %c0_40] : memref<8x128x256xf32, #tpu.memory_space<vmem>>, vector<1x128x256xf32>
    %70 = vector.shape_cast %69 : vector<1x128x256xf32> to vector<128x256xf32>
    %cst_41 = arith.constant dense<0.000000e+00> : vector<1x256xf32>
    %71 = tpu.matmul %68, %70, %cst_41 {dimension_numbers = #tpu.dot_dimension_numbers<[1], [0], [0], [1], [0, 0, 1, 1], [], []>} : vector<1x128xf32>, vector<128x256xf32>, vector<1x256xf32> -> vector<1x256xf32>
    %72 = arith.addf %67, %71 : vector<1x256xf32>
    %cst_42 = arith.constant 2.000000e-01 : f32
    %73 = vector.broadcast %cst_42 : f32 to vector<1x256xf32>
    %74 = arith.mulf %7, %73 : vector<1x256xf32>
    %cst_43 = arith.constant 1.000000e+00 : f32
    %75 = vector.broadcast %cst_43 : f32 to vector<1x256xf32>
    %76 = arith.subf %75, %8 : vector<1x256xf32>
    %77 = arith.mulf %74, %76 : vector<1x256xf32>
    %78 = arith.addf %77, %72 : vector<1x256xf32>
    %cst_44 = arith.constant 5.000000e-01 : f32
    %79 = vector.broadcast %cst_44 : f32 to vector<1x256xf32>
    %80 = arith.cmpf ogt, %78, %79 : vector<1x256xf32>
    %81 = arith.extui %80 : vector<1x256xi1> to vector<1x256xi32>
    %82 = arith.sitofp %81 : vector<1x256xi32> to vector<1x256xf32>
    %83 = arith.addf %9, %82 : vector<1x256xf32>
    %c1_45 = arith.constant 1 : index
    %c0_46 = arith.constant 0 : index
    %c0_47 = arith.constant 0 : index
    %84 = vector.load %arg1[%c1_45, %c0_46, %c0_47] : memref<4x36x512xf32, #tpu.memory_space<vmem>>, vector<1x36x512xf32>
    %85 = vector.shape_cast %84 : vector<1x36x512xf32> to vector<36x512xf32>
    %cst_48 = arith.constant dense<0.000000e+00> : vector<8x512xf32>
    %86 = tpu.matmul %0, %85, %cst_48 {dimension_numbers = #tpu.dot_dimension_numbers<[1], [0], [0], [1], [0, 0, 1, 1], [], []>} : vector<8x36xf32>, vector<36x512xf32>, vector<8x512xf32> -> vector<8x512xf32>
    %87 = arith.addf %86, %3 : vector<8x512xf32>
    %cst_49 = arith.constant 2.000000e-01 : f32
    %88 = vector.broadcast %cst_49 : f32 to vector<8x512xf32>
    %89 = arith.mulf %19, %88 : vector<8x512xf32>
    %cst_50 = arith.constant 1.000000e+00 : f32
    %90 = vector.broadcast %cst_50 : f32 to vector<8x512xf32>
    %91 = arith.subf %90, %23 : vector<8x512xf32>
    %92 = arith.mulf %89, %91 : vector<8x512xf32>
    %93 = arith.addf %92, %87 : vector<8x512xf32>
    %cst_51 = arith.constant 5.000000e-01 : f32
    %94 = vector.broadcast %cst_51 : f32 to vector<8x512xf32>
    %95 = arith.cmpf ogt, %93, %94 : vector<8x512xf32>
    %96 = arith.extui %95 : vector<8x512xi1> to vector<8x512xi32>
    %97 = arith.sitofp %96 : vector<8x512xi32> to vector<8x512xf32>
    %98 = vector.extract_strided_slice %97 {offsets = [0, 0], sizes = [8, 128], strides = [1, 1]} : vector<8x512xf32> to vector<8x128xf32>
    %99 = vector.extract_strided_slice %97 {offsets = [0, 128], sizes = [8, 128], strides = [1, 1]} : vector<8x512xf32> to vector<8x128xf32>
    %100 = arith.addf %98, %99 : vector<8x128xf32>
    %101 = vector.extract_strided_slice %97 {offsets = [0, 256], sizes = [8, 128], strides = [1, 1]} : vector<8x512xf32> to vector<8x128xf32>
    %102 = arith.addf %100, %101 : vector<8x128xf32>
    %103 = vector.extract_strided_slice %97 {offsets = [0, 384], sizes = [8, 128], strides = [1, 1]} : vector<8x512xf32> to vector<8x128xf32>
    %104 = arith.addf %102, %103 : vector<8x128xf32>
    %cst_52 = arith.constant 2.500000e-01 : f32
    %105 = vector.broadcast %cst_52 : f32 to vector<8x128xf32>
    %106 = arith.mulf %105, %104 : vector<8x128xf32>
    %107 = vector.extract_strided_slice %106 {offsets = [0, 0], sizes = [1, 128], strides = [1, 1]} : vector<8x128xf32> to vector<1x128xf32>
    %c0_53 = arith.constant 0 : index
    %c0_54 = arith.constant 0 : index
    %c0_55 = arith.constant 0 : index
    %108 = vector.load %arg4[%c0_53, %c0_54, %c0_55] : memref<8x128x256xf32, #tpu.memory_space<vmem>>, vector<1x128x256xf32>
    %109 = vector.shape_cast %108 : vector<1x128x256xf32> to vector<128x256xf32>
    %cst_56 = arith.constant dense<0.000000e+00> : vector<1x256xf32>
    %110 = tpu.matmul %107, %109, %cst_56 {dimension_numbers = #tpu.dot_dimension_numbers<[1], [0], [0], [1], [0, 0, 1, 1], [], []>} : vector<1x128xf32>, vector<128x256xf32>, vector<1x256xf32> -> vector<1x256xf32>
    %111 = arith.addf %4, %110 : vector<1x256xf32>
    %112 = vector.extract_strided_slice %106 {offsets = [1, 0], sizes = [1, 128], strides = [1, 1]} : vector<8x128xf32> to vector<1x128xf32>
    %c1_57 = arith.constant 1 : index
    %c0_58 = arith.constant 0 : index
    %c0_59 = arith.constant 0 : index
    %113 = vector.load %arg4[%c1_57, %c0_58, %c0_59] : memref<8x128x256xf32, #tpu.memory_space<vmem>>, vector<1x128x256xf32>
    %114 = vector.shape_cast %113 : vector<1x128x256xf32> to vector<128x256xf32>
    %cst_60 = arith.constant dense<0.000000e+00> : vector<1x256xf32>
    %115 = tpu.matmul %112, %114, %cst_60 {dimension_numbers = #tpu.dot_dimension_numbers<[1], [0], [0], [1], [0, 0, 1, 1], [], []>} : vector<1x128xf32>, vector<128x256xf32>, vector<1x256xf32> -> vector<1x256xf32>
    %116 = arith.addf %111, %115 : vector<1x256xf32>
    %117 = vector.extract_strided_slice %106 {offsets = [2, 0], sizes = [1, 128], strides = [1, 1]} : vector<8x128xf32> to vector<1x128xf32>
    %c2_61 = arith.constant 2 : index
    %c0_62 = arith.constant 0 : index
    %c0_63 = arith.constant 0 : index
    %118 = vector.load %arg4[%c2_61, %c0_62, %c0_63] : memref<8x128x256xf32, #tpu.memory_space<vmem>>, vector<1x128x256xf32>
    %119 = vector.shape_cast %118 : vector<1x128x256xf32> to vector<128x256xf32>
    %cst_64 = arith.constant dense<0.000000e+00> : vector<1x256xf32>
    %120 = tpu.matmul %117, %119, %cst_64 {dimension_numbers = #tpu.dot_dimension_numbers<[1], [0], [0], [1], [0, 0, 1, 1], [], []>} : vector<1x128xf32>, vector<128x256xf32>, vector<1x256xf32> -> vector<1x256xf32>
    %121 = arith.addf %116, %120 : vector<1x256xf32>
    %122 = vector.extract_strided_slice %106 {offsets = [3, 0], sizes = [1, 128], strides = [1, 1]} : vector<8x128xf32> to vector<1x128xf32>
    %c3_65 = arith.constant 3 : index
    %c0_66 = arith.constant 0 : index
    %c0_67 = arith.constant 0 : index
    %123 = vector.load %arg4[%c3_65, %c0_66, %c0_67] : memref<8x128x256xf32, #tpu.memory_space<vmem>>, vector<1x128x256xf32>
    %124 = vector.shape_cast %123 : vector<1x128x256xf32> to vector<128x256xf32>
    %cst_68 = arith.constant dense<0.000000e+00> : vector<1x256xf32>
    %125 = tpu.matmul %122, %124, %cst_68 {dimension_numbers = #tpu.dot_dimension_numbers<[1], [0], [0], [1], [0, 0, 1, 1], [], []>} : vector<1x128xf32>, vector<128x256xf32>, vector<1x256xf32> -> vector<1x256xf32>
    %126 = arith.addf %121, %125 : vector<1x256xf32>
    %127 = vector.extract_strided_slice %106 {offsets = [4, 0], sizes = [1, 128], strides = [1, 1]} : vector<8x128xf32> to vector<1x128xf32>
    %c4_69 = arith.constant 4 : index
    %c0_70 = arith.constant 0 : index
    %c0_71 = arith.constant 0 : index
    %128 = vector.load %arg4[%c4_69, %c0_70, %c0_71] : memref<8x128x256xf32, #tpu.memory_space<vmem>>, vector<1x128x256xf32>
    %129 = vector.shape_cast %128 : vector<1x128x256xf32> to vector<128x256xf32>
    %cst_72 = arith.constant dense<0.000000e+00> : vector<1x256xf32>
    %130 = tpu.matmul %127, %129, %cst_72 {dimension_numbers = #tpu.dot_dimension_numbers<[1], [0], [0], [1], [0, 0, 1, 1], [], []>} : vector<1x128xf32>, vector<128x256xf32>, vector<1x256xf32> -> vector<1x256xf32>
    %131 = arith.addf %126, %130 : vector<1x256xf32>
    %132 = vector.extract_strided_slice %106 {offsets = [5, 0], sizes = [1, 128], strides = [1, 1]} : vector<8x128xf32> to vector<1x128xf32>
    %c5_73 = arith.constant 5 : index
    %c0_74 = arith.constant 0 : index
    %c0_75 = arith.constant 0 : index
    %133 = vector.load %arg4[%c5_73, %c0_74, %c0_75] : memref<8x128x256xf32, #tpu.memory_space<vmem>>, vector<1x128x256xf32>
    %134 = vector.shape_cast %133 : vector<1x128x256xf32> to vector<128x256xf32>
    %cst_76 = arith.constant dense<0.000000e+00> : vector<1x256xf32>
    %135 = tpu.matmul %132, %134, %cst_76 {dimension_numbers = #tpu.dot_dimension_numbers<[1], [0], [0], [1], [0, 0, 1, 1], [], []>} : vector<1x128xf32>, vector<128x256xf32>, vector<1x256xf32> -> vector<1x256xf32>
    %136 = arith.addf %131, %135 : vector<1x256xf32>
    %137 = vector.extract_strided_slice %106 {offsets = [6, 0], sizes = [1, 128], strides = [1, 1]} : vector<8x128xf32> to vector<1x128xf32>
    %c6_77 = arith.constant 6 : index
    %c0_78 = arith.constant 0 : index
    %c0_79 = arith.constant 0 : index
    %138 = vector.load %arg4[%c6_77, %c0_78, %c0_79] : memref<8x128x256xf32, #tpu.memory_space<vmem>>, vector<1x128x256xf32>
    %139 = vector.shape_cast %138 : vector<1x128x256xf32> to vector<128x256xf32>
    %cst_80 = arith.constant dense<0.000000e+00> : vector<1x256xf32>
    %140 = tpu.matmul %137, %139, %cst_80 {dimension_numbers = #tpu.dot_dimension_numbers<[1], [0], [0], [1], [0, 0, 1, 1], [], []>} : vector<1x128xf32>, vector<128x256xf32>, vector<1x256xf32> -> vector<1x256xf32>
    %141 = arith.addf %136, %140 : vector<1x256xf32>
    %142 = vector.extract_strided_slice %106 {offsets = [7, 0], sizes = [1, 128], strides = [1, 1]} : vector<8x128xf32> to vector<1x128xf32>
    %c7_81 = arith.constant 7 : index
    %c0_82 = arith.constant 0 : index
    %c0_83 = arith.constant 0 : index
    %143 = vector.load %arg4[%c7_81, %c0_82, %c0_83] : memref<8x128x256xf32, #tpu.memory_space<vmem>>, vector<1x128x256xf32>
    %144 = vector.shape_cast %143 : vector<1x128x256xf32> to vector<128x256xf32>
    %cst_84 = arith.constant dense<0.000000e+00> : vector<1x256xf32>
    %145 = tpu.matmul %142, %144, %cst_84 {dimension_numbers = #tpu.dot_dimension_numbers<[1], [0], [0], [1], [0, 0, 1, 1], [], []>} : vector<1x128xf32>, vector<128x256xf32>, vector<1x256xf32> -> vector<1x256xf32>
    %146 = arith.addf %141, %145 : vector<1x256xf32>
    %cst_85 = arith.constant 2.000000e-01 : f32
    %147 = vector.broadcast %cst_85 : f32 to vector<1x256xf32>
    %148 = arith.mulf %78, %147 : vector<1x256xf32>
    %cst_86 = arith.constant 1.000000e+00 : f32
    %149 = vector.broadcast %cst_86 : f32 to vector<1x256xf32>
    %150 = arith.subf %149, %82 : vector<1x256xf32>
    %151 = arith.mulf %148, %150 : vector<1x256xf32>
    %152 = arith.addf %151, %146 : vector<1x256xf32>
    %cst_87 = arith.constant 5.000000e-01 : f32
    %153 = vector.broadcast %cst_87 : f32 to vector<1x256xf32>
    %154 = arith.cmpf ogt, %152, %153 : vector<1x256xf32>
    %155 = arith.extui %154 : vector<1x256xi1> to vector<1x256xi32>
    %156 = arith.sitofp %155 : vector<1x256xi32> to vector<1x256xf32>
    %157 = arith.addf %83, %156 : vector<1x256xf32>
    %c2_88 = arith.constant 2 : index
    %c0_89 = arith.constant 0 : index
    %c0_90 = arith.constant 0 : index
    %158 = vector.load %arg1[%c2_88, %c0_89, %c0_90] : memref<4x36x512xf32, #tpu.memory_space<vmem>>, vector<1x36x512xf32>
    %159 = vector.shape_cast %158 : vector<1x36x512xf32> to vector<36x512xf32>
    %cst_91 = arith.constant dense<0.000000e+00> : vector<8x512xf32>
    %160 = tpu.matmul %0, %159, %cst_91 {dimension_numbers = #tpu.dot_dimension_numbers<[1], [0], [0], [1], [0, 0, 1, 1], [], []>} : vector<8x36xf32>, vector<36x512xf32>, vector<8x512xf32> -> vector<8x512xf32>
    %161 = arith.addf %160, %3 : vector<8x512xf32>
    %cst_92 = arith.constant 2.000000e-01 : f32
    %162 = vector.broadcast %cst_92 : f32 to vector<8x512xf32>
    %163 = arith.mulf %93, %162 : vector<8x512xf32>
    %cst_93 = arith.constant 1.000000e+00 : f32
    %164 = vector.broadcast %cst_93 : f32 to vector<8x512xf32>
    %165 = arith.subf %164, %97 : vector<8x512xf32>
    %166 = arith.mulf %163, %165 : vector<8x512xf32>
    %167 = arith.addf %166, %161 : vector<8x512xf32>
    %cst_94 = arith.constant 5.000000e-01 : f32
    %168 = vector.broadcast %cst_94 : f32 to vector<8x512xf32>
    %169 = arith.cmpf ogt, %167, %168 : vector<8x512xf32>
    %170 = arith.extui %169 : vector<8x512xi1> to vector<8x512xi32>
    %171 = arith.sitofp %170 : vector<8x512xi32> to vector<8x512xf32>
    %172 = vector.extract_strided_slice %171 {offsets = [0, 0], sizes = [8, 128], strides = [1, 1]} : vector<8x512xf32> to vector<8x128xf32>
    %173 = vector.extract_strided_slice %171 {offsets = [0, 128], sizes = [8, 128], strides = [1, 1]} : vector<8x512xf32> to vector<8x128xf32>
    %174 = arith.addf %172, %173 : vector<8x128xf32>
    %175 = vector.extract_strided_slice %171 {offsets = [0, 256], sizes = [8, 128], strides = [1, 1]} : vector<8x512xf32> to vector<8x128xf32>
    %176 = arith.addf %174, %175 : vector<8x128xf32>
    %177 = vector.extract_strided_slice %171 {offsets = [0, 384], sizes = [8, 128], strides = [1, 1]} : vector<8x512xf32> to vector<8x128xf32>
    %178 = arith.addf %176, %177 : vector<8x128xf32>
    %cst_95 = arith.constant 2.500000e-01 : f32
    %179 = vector.broadcast %cst_95 : f32 to vector<8x128xf32>
    %180 = arith.mulf %179, %178 : vector<8x128xf32>
    %181 = vector.extract_strided_slice %180 {offsets = [0, 0], sizes = [1, 128], strides = [1, 1]} : vector<8x128xf32> to vector<1x128xf32>
    %c0_96 = arith.constant 0 : index
    %c0_97 = arith.constant 0 : index
    %c0_98 = arith.constant 0 : index
    %182 = vector.load %arg4[%c0_96, %c0_97, %c0_98] : memref<8x128x256xf32, #tpu.memory_space<vmem>>, vector<1x128x256xf32>
    %183 = vector.shape_cast %182 : vector<1x128x256xf32> to vector<128x256xf32>
    %cst_99 = arith.constant dense<0.000000e+00> : vector<1x256xf32>
    %184 = tpu.matmul %181, %183, %cst_99 {dimension_numbers = #tpu.dot_dimension_numbers<[1], [0], [0], [1], [0, 0, 1, 1], [], []>} : vector<1x128xf32>, vector<128x256xf32>, vector<1x256xf32> -> vector<1x256xf32>
    %185 = arith.addf %4, %184 : vector<1x256xf32>
    %186 = vector.extract_strided_slice %180 {offsets = [1, 0], sizes = [1, 128], strides = [1, 1]} : vector<8x128xf32> to vector<1x128xf32>
    %c1_100 = arith.constant 1 : index
    %c0_101 = arith.constant 0 : index
    %c0_102 = arith.constant 0 : index
    %187 = vector.load %arg4[%c1_100, %c0_101, %c0_102] : memref<8x128x256xf32, #tpu.memory_space<vmem>>, vector<1x128x256xf32>
    %188 = vector.shape_cast %187 : vector<1x128x256xf32> to vector<128x256xf32>
    %cst_103 = arith.constant dense<0.000000e+00> : vector<1x256xf32>
    %189 = tpu.matmul %186, %188, %cst_103 {dimension_numbers = #tpu.dot_dimension_numbers<[1], [0], [0], [1], [0, 0, 1, 1], [], []>} : vector<1x128xf32>, vector<128x256xf32>, vector<1x256xf32> -> vector<1x256xf32>
    %190 = arith.addf %185, %189 : vector<1x256xf32>
    %191 = vector.extract_strided_slice %180 {offsets = [2, 0], sizes = [1, 128], strides = [1, 1]} : vector<8x128xf32> to vector<1x128xf32>
    %c2_104 = arith.constant 2 : index
    %c0_105 = arith.constant 0 : index
    %c0_106 = arith.constant 0 : index
    %192 = vector.load %arg4[%c2_104, %c0_105, %c0_106] : memref<8x128x256xf32, #tpu.memory_space<vmem>>, vector<1x128x256xf32>
    %193 = vector.shape_cast %192 : vector<1x128x256xf32> to vector<128x256xf32>
    %cst_107 = arith.constant dense<0.000000e+00> : vector<1x256xf32>
    %194 = tpu.matmul %191, %193, %cst_107 {dimension_numbers = #tpu.dot_dimension_numbers<[1], [0], [0], [1], [0, 0, 1, 1], [], []>} : vector<1x128xf32>, vector<128x256xf32>, vector<1x256xf32> -> vector<1x256xf32>
    %195 = arith.addf %190, %194 : vector<1x256xf32>
    %196 = vector.extract_strided_slice %180 {offsets = [3, 0], sizes = [1, 128], strides = [1, 1]} : vector<8x128xf32> to vector<1x128xf32>
    %c3_108 = arith.constant 3 : index
    %c0_109 = arith.constant 0 : index
    %c0_110 = arith.constant 0 : index
    %197 = vector.load %arg4[%c3_108, %c0_109, %c0_110] : memref<8x128x256xf32, #tpu.memory_space<vmem>>, vector<1x128x256xf32>
    %198 = vector.shape_cast %197 : vector<1x128x256xf32> to vector<128x256xf32>
    %cst_111 = arith.constant dense<0.000000e+00> : vector<1x256xf32>
    %199 = tpu.matmul %196, %198, %cst_111 {dimension_numbers = #tpu.dot_dimension_numbers<[1], [0], [0], [1], [0, 0, 1, 1], [], []>} : vector<1x128xf32>, vector<128x256xf32>, vector<1x256xf32> -> vector<1x256xf32>
    %200 = arith.addf %195, %199 : vector<1x256xf32>
    %201 = vector.extract_strided_slice %180 {offsets = [4, 0], sizes = [1, 128], strides = [1, 1]} : vector<8x128xf32> to vector<1x128xf32>
    %c4_112 = arith.constant 4 : index
    %c0_113 = arith.constant 0 : index
    %c0_114 = arith.constant 0 : index
    %202 = vector.load %arg4[%c4_112, %c0_113, %c0_114] : memref<8x128x256xf32, #tpu.memory_space<vmem>>, vector<1x128x256xf32>
    %203 = vector.shape_cast %202 : vector<1x128x256xf32> to vector<128x256xf32>
    %cst_115 = arith.constant dense<0.000000e+00> : vector<1x256xf32>
    %204 = tpu.matmul %201, %203, %cst_115 {dimension_numbers = #tpu.dot_dimension_numbers<[1], [0], [0], [1], [0, 0, 1, 1], [], []>} : vector<1x128xf32>, vector<128x256xf32>, vector<1x256xf32> -> vector<1x256xf32>
    %205 = arith.addf %200, %204 : vector<1x256xf32>
    %206 = vector.extract_strided_slice %180 {offsets = [5, 0], sizes = [1, 128], strides = [1, 1]} : vector<8x128xf32> to vector<1x128xf32>
    %c5_116 = arith.constant 5 : index
    %c0_117 = arith.constant 0 : index
    %c0_118 = arith.constant 0 : index
    %207 = vector.load %arg4[%c5_116, %c0_117, %c0_118] : memref<8x128x256xf32, #tpu.memory_space<vmem>>, vector<1x128x256xf32>
    %208 = vector.shape_cast %207 : vector<1x128x256xf32> to vector<128x256xf32>
    %cst_119 = arith.constant dense<0.000000e+00> : vector<1x256xf32>
    %209 = tpu.matmul %206, %208, %cst_119 {dimension_numbers = #tpu.dot_dimension_numbers<[1], [0], [0], [1], [0, 0, 1, 1], [], []>} : vector<1x128xf32>, vector<128x256xf32>, vector<1x256xf32> -> vector<1x256xf32>
    %210 = arith.addf %205, %209 : vector<1x256xf32>
    %211 = vector.extract_strided_slice %180 {offsets = [6, 0], sizes = [1, 128], strides = [1, 1]} : vector<8x128xf32> to vector<1x128xf32>
    %c6_120 = arith.constant 6 : index
    %c0_121 = arith.constant 0 : index
    %c0_122 = arith.constant 0 : index
    %212 = vector.load %arg4[%c6_120, %c0_121, %c0_122] : memref<8x128x256xf32, #tpu.memory_space<vmem>>, vector<1x128x256xf32>
    %213 = vector.shape_cast %212 : vector<1x128x256xf32> to vector<128x256xf32>
    %cst_123 = arith.constant dense<0.000000e+00> : vector<1x256xf32>
    %214 = tpu.matmul %211, %213, %cst_123 {dimension_numbers = #tpu.dot_dimension_numbers<[1], [0], [0], [1], [0, 0, 1, 1], [], []>} : vector<1x128xf32>, vector<128x256xf32>, vector<1x256xf32> -> vector<1x256xf32>
    %215 = arith.addf %210, %214 : vector<1x256xf32>
    %216 = vector.extract_strided_slice %180 {offsets = [7, 0], sizes = [1, 128], strides = [1, 1]} : vector<8x128xf32> to vector<1x128xf32>
    %c7_124 = arith.constant 7 : index
    %c0_125 = arith.constant 0 : index
    %c0_126 = arith.constant 0 : index
    %217 = vector.load %arg4[%c7_124, %c0_125, %c0_126] : memref<8x128x256xf32, #tpu.memory_space<vmem>>, vector<1x128x256xf32>
    %218 = vector.shape_cast %217 : vector<1x128x256xf32> to vector<128x256xf32>
    %cst_127 = arith.constant dense<0.000000e+00> : vector<1x256xf32>
    %219 = tpu.matmul %216, %218, %cst_127 {dimension_numbers = #tpu.dot_dimension_numbers<[1], [0], [0], [1], [0, 0, 1, 1], [], []>} : vector<1x128xf32>, vector<128x256xf32>, vector<1x256xf32> -> vector<1x256xf32>
    %220 = arith.addf %215, %219 : vector<1x256xf32>
    %cst_128 = arith.constant 2.000000e-01 : f32
    %221 = vector.broadcast %cst_128 : f32 to vector<1x256xf32>
    %222 = arith.mulf %152, %221 : vector<1x256xf32>
    %cst_129 = arith.constant 1.000000e+00 : f32
    %223 = vector.broadcast %cst_129 : f32 to vector<1x256xf32>
    %224 = arith.subf %223, %156 : vector<1x256xf32>
    %225 = arith.mulf %222, %224 : vector<1x256xf32>
    %226 = arith.addf %225, %220 : vector<1x256xf32>
    %cst_130 = arith.constant 5.000000e-01 : f32
    %227 = vector.broadcast %cst_130 : f32 to vector<1x256xf32>
    %228 = arith.cmpf ogt, %226, %227 : vector<1x256xf32>
    %229 = arith.extui %228 : vector<1x256xi1> to vector<1x256xi32>
    %230 = arith.sitofp %229 : vector<1x256xi32> to vector<1x256xf32>
    %231 = arith.addf %157, %230 : vector<1x256xf32>
    %c3_131 = arith.constant 3 : index
    %c0_132 = arith.constant 0 : index
    %c0_133 = arith.constant 0 : index
    %232 = vector.load %arg1[%c3_131, %c0_132, %c0_133] : memref<4x36x512xf32, #tpu.memory_space<vmem>>, vector<1x36x512xf32>
    %233 = vector.shape_cast %232 : vector<1x36x512xf32> to vector<36x512xf32>
    %cst_134 = arith.constant dense<0.000000e+00> : vector<8x512xf32>
    %234 = tpu.matmul %0, %233, %cst_134 {dimension_numbers = #tpu.dot_dimension_numbers<[1], [0], [0], [1], [0, 0, 1, 1], [], []>} : vector<8x36xf32>, vector<36x512xf32>, vector<8x512xf32> -> vector<8x512xf32>
    %235 = arith.addf %234, %3 : vector<8x512xf32>
    %cst_135 = arith.constant 2.000000e-01 : f32
    %236 = vector.broadcast %cst_135 : f32 to vector<8x512xf32>
    %237 = arith.mulf %167, %236 : vector<8x512xf32>
    %cst_136 = arith.constant 1.000000e+00 : f32
    %238 = vector.broadcast %cst_136 : f32 to vector<8x512xf32>
    %239 = arith.subf %238, %171 : vector<8x512xf32>
    %240 = arith.mulf %237, %239 : vector<8x512xf32>
    %241 = arith.addf %240, %235 : vector<8x512xf32>
    %cst_137 = arith.constant 5.000000e-01 : f32
    %242 = vector.broadcast %cst_137 : f32 to vector<8x512xf32>
    %243 = arith.cmpf ogt, %241, %242 : vector<8x512xf32>
    %244 = arith.extui %243 : vector<8x512xi1> to vector<8x512xi32>
    %245 = arith.sitofp %244 : vector<8x512xi32> to vector<8x512xf32>
    %246 = vector.extract_strided_slice %245 {offsets = [0, 0], sizes = [8, 128], strides = [1, 1]} : vector<8x512xf32> to vector<8x128xf32>
    %247 = vector.extract_strided_slice %245 {offsets = [0, 128], sizes = [8, 128], strides = [1, 1]} : vector<8x512xf32> to vector<8x128xf32>
    %248 = arith.addf %246, %247 : vector<8x128xf32>
    %249 = vector.extract_strided_slice %245 {offsets = [0, 256], sizes = [8, 128], strides = [1, 1]} : vector<8x512xf32> to vector<8x128xf32>
    %250 = arith.addf %248, %249 : vector<8x128xf32>
    %251 = vector.extract_strided_slice %245 {offsets = [0, 384], sizes = [8, 128], strides = [1, 1]} : vector<8x512xf32> to vector<8x128xf32>
    %252 = arith.addf %250, %251 : vector<8x128xf32>
    %cst_138 = arith.constant 2.500000e-01 : f32
    %253 = vector.broadcast %cst_138 : f32 to vector<8x128xf32>
    %254 = arith.mulf %253, %252 : vector<8x128xf32>
    %255 = vector.extract_strided_slice %254 {offsets = [0, 0], sizes = [1, 128], strides = [1, 1]} : vector<8x128xf32> to vector<1x128xf32>
    %c0_139 = arith.constant 0 : index
    %c0_140 = arith.constant 0 : index
    %c0_141 = arith.constant 0 : index
    %256 = vector.load %arg4[%c0_139, %c0_140, %c0_141] : memref<8x128x256xf32, #tpu.memory_space<vmem>>, vector<1x128x256xf32>
    %257 = vector.shape_cast %256 : vector<1x128x256xf32> to vector<128x256xf32>
    %cst_142 = arith.constant dense<0.000000e+00> : vector<1x256xf32>
    %258 = tpu.matmul %255, %257, %cst_142 {dimension_numbers = #tpu.dot_dimension_numbers<[1], [0], [0], [1], [0, 0, 1, 1], [], []>} : vector<1x128xf32>, vector<128x256xf32>, vector<1x256xf32> -> vector<1x256xf32>
    %259 = arith.addf %4, %258 : vector<1x256xf32>
    %260 = vector.extract_strided_slice %254 {offsets = [1, 0], sizes = [1, 128], strides = [1, 1]} : vector<8x128xf32> to vector<1x128xf32>
    %c1_143 = arith.constant 1 : index
    %c0_144 = arith.constant 0 : index
    %c0_145 = arith.constant 0 : index
    %261 = vector.load %arg4[%c1_143, %c0_144, %c0_145] : memref<8x128x256xf32, #tpu.memory_space<vmem>>, vector<1x128x256xf32>
    %262 = vector.shape_cast %261 : vector<1x128x256xf32> to vector<128x256xf32>
    %cst_146 = arith.constant dense<0.000000e+00> : vector<1x256xf32>
    %263 = tpu.matmul %260, %262, %cst_146 {dimension_numbers = #tpu.dot_dimension_numbers<[1], [0], [0], [1], [0, 0, 1, 1], [], []>} : vector<1x128xf32>, vector<128x256xf32>, vector<1x256xf32> -> vector<1x256xf32>
    %264 = arith.addf %259, %263 : vector<1x256xf32>
    %265 = vector.extract_strided_slice %254 {offsets = [2, 0], sizes = [1, 128], strides = [1, 1]} : vector<8x128xf32> to vector<1x128xf32>
    %c2_147 = arith.constant 2 : index
    %c0_148 = arith.constant 0 : index
    %c0_149 = arith.constant 0 : index
    %266 = vector.load %arg4[%c2_147, %c0_148, %c0_149] : memref<8x128x256xf32, #tpu.memory_space<vmem>>, vector<1x128x256xf32>
    %267 = vector.shape_cast %266 : vector<1x128x256xf32> to vector<128x256xf32>
    %cst_150 = arith.constant dense<0.000000e+00> : vector<1x256xf32>
    %268 = tpu.matmul %265, %267, %cst_150 {dimension_numbers = #tpu.dot_dimension_numbers<[1], [0], [0], [1], [0, 0, 1, 1], [], []>} : vector<1x128xf32>, vector<128x256xf32>, vector<1x256xf32> -> vector<1x256xf32>
    %269 = arith.addf %264, %268 : vector<1x256xf32>
    %270 = vector.extract_strided_slice %254 {offsets = [3, 0], sizes = [1, 128], strides = [1, 1]} : vector<8x128xf32> to vector<1x128xf32>
    %c3_151 = arith.constant 3 : index
    %c0_152 = arith.constant 0 : index
    %c0_153 = arith.constant 0 : index
    %271 = vector.load %arg4[%c3_151, %c0_152, %c0_153] : memref<8x128x256xf32, #tpu.memory_space<vmem>>, vector<1x128x256xf32>
    %272 = vector.shape_cast %271 : vector<1x128x256xf32> to vector<128x256xf32>
    %cst_154 = arith.constant dense<0.000000e+00> : vector<1x256xf32>
    %273 = tpu.matmul %270, %272, %cst_154 {dimension_numbers = #tpu.dot_dimension_numbers<[1], [0], [0], [1], [0, 0, 1, 1], [], []>} : vector<1x128xf32>, vector<128x256xf32>, vector<1x256xf32> -> vector<1x256xf32>
    %274 = arith.addf %269, %273 : vector<1x256xf32>
    %275 = vector.extract_strided_slice %254 {offsets = [4, 0], sizes = [1, 128], strides = [1, 1]} : vector<8x128xf32> to vector<1x128xf32>
    %c4_155 = arith.constant 4 : index
    %c0_156 = arith.constant 0 : index
    %c0_157 = arith.constant 0 : index
    %276 = vector.load %arg4[%c4_155, %c0_156, %c0_157] : memref<8x128x256xf32, #tpu.memory_space<vmem>>, vector<1x128x256xf32>
    %277 = vector.shape_cast %276 : vector<1x128x256xf32> to vector<128x256xf32>
    %cst_158 = arith.constant dense<0.000000e+00> : vector<1x256xf32>
    %278 = tpu.matmul %275, %277, %cst_158 {dimension_numbers = #tpu.dot_dimension_numbers<[1], [0], [0], [1], [0, 0, 1, 1], [], []>} : vector<1x128xf32>, vector<128x256xf32>, vector<1x256xf32> -> vector<1x256xf32>
    %279 = arith.addf %274, %278 : vector<1x256xf32>
    %280 = vector.extract_strided_slice %254 {offsets = [5, 0], sizes = [1, 128], strides = [1, 1]} : vector<8x128xf32> to vector<1x128xf32>
    %c5_159 = arith.constant 5 : index
    %c0_160 = arith.constant 0 : index
    %c0_161 = arith.constant 0 : index
    %281 = vector.load %arg4[%c5_159, %c0_160, %c0_161] : memref<8x128x256xf32, #tpu.memory_space<vmem>>, vector<1x128x256xf32>
    %282 = vector.shape_cast %281 : vector<1x128x256xf32> to vector<128x256xf32>
    %cst_162 = arith.constant dense<0.000000e+00> : vector<1x256xf32>
    %283 = tpu.matmul %280, %282, %cst_162 {dimension_numbers = #tpu.dot_dimension_numbers<[1], [0], [0], [1], [0, 0, 1, 1], [], []>} : vector<1x128xf32>, vector<128x256xf32>, vector<1x256xf32> -> vector<1x256xf32>
    %284 = arith.addf %279, %283 : vector<1x256xf32>
    %285 = vector.extract_strided_slice %254 {offsets = [6, 0], sizes = [1, 128], strides = [1, 1]} : vector<8x128xf32> to vector<1x128xf32>
    %c6_163 = arith.constant 6 : index
    %c0_164 = arith.constant 0 : index
    %c0_165 = arith.constant 0 : index
    %286 = vector.load %arg4[%c6_163, %c0_164, %c0_165] : memref<8x128x256xf32, #tpu.memory_space<vmem>>, vector<1x128x256xf32>
    %287 = vector.shape_cast %286 : vector<1x128x256xf32> to vector<128x256xf32>
    %cst_166 = arith.constant dense<0.000000e+00> : vector<1x256xf32>
    %288 = tpu.matmul %285, %287, %cst_166 {dimension_numbers = #tpu.dot_dimension_numbers<[1], [0], [0], [1], [0, 0, 1, 1], [], []>} : vector<1x128xf32>, vector<128x256xf32>, vector<1x256xf32> -> vector<1x256xf32>
    %289 = arith.addf %284, %288 : vector<1x256xf32>
    %290 = vector.extract_strided_slice %254 {offsets = [7, 0], sizes = [1, 128], strides = [1, 1]} : vector<8x128xf32> to vector<1x128xf32>
    %c7_167 = arith.constant 7 : index
    %c0_168 = arith.constant 0 : index
    %c0_169 = arith.constant 0 : index
    %291 = vector.load %arg4[%c7_167, %c0_168, %c0_169] : memref<8x128x256xf32, #tpu.memory_space<vmem>>, vector<1x128x256xf32>
    %292 = vector.shape_cast %291 : vector<1x128x256xf32> to vector<128x256xf32>
    %cst_170 = arith.constant dense<0.000000e+00> : vector<1x256xf32>
    %293 = tpu.matmul %290, %292, %cst_170 {dimension_numbers = #tpu.dot_dimension_numbers<[1], [0], [0], [1], [0, 0, 1, 1], [], []>} : vector<1x128xf32>, vector<128x256xf32>, vector<1x256xf32> -> vector<1x256xf32>
    %294 = arith.addf %289, %293 : vector<1x256xf32>
    %cst_171 = arith.constant 2.000000e-01 : f32
    %295 = vector.broadcast %cst_171 : f32 to vector<1x256xf32>
    %296 = arith.mulf %226, %295 : vector<1x256xf32>
    %cst_172 = arith.constant 1.000000e+00 : f32
    %297 = vector.broadcast %cst_172 : f32 to vector<1x256xf32>
    %298 = arith.subf %297, %230 : vector<1x256xf32>
    %299 = arith.mulf %296, %298 : vector<1x256xf32>
    %300 = arith.addf %299, %294 : vector<1x256xf32>
    %cst_173 = arith.constant 5.000000e-01 : f32
    %301 = vector.broadcast %cst_173 : f32 to vector<1x256xf32>
    %302 = arith.cmpf ogt, %300, %301 : vector<1x256xf32>
    %303 = arith.extui %302 : vector<1x256xi1> to vector<1x256xi32>
    %304 = arith.sitofp %303 : vector<1x256xi32> to vector<1x256xf32>
    %305 = arith.addf %231, %304 : vector<1x256xf32>
    %cst_174 = arith.constant 2.500000e-01 : f32
    %306 = vector.broadcast %cst_174 : f32 to vector<1x256xf32>
    %307 = arith.mulf %305, %306 : vector<1x256xf32>
    %c0_175 = arith.constant 0 : index
    %c0_176 = arith.constant 0 : index
    %308 = vector.load %arg6[%c0_175, %c0_176] : memref<1x256xf32, #tpu.memory_space<vmem>>, vector<1x256xf32>
    tpu.vector_store %arg6[%c0_175, %c0_176], %307 {strides = array<i32>} : memref<1x256xf32, #tpu.memory_space<vmem>>, vector<1x256xf32>,
    %c0_177 = arith.constant 0 : index
    %c0_178 = arith.constant 0 : index
    %309 = vector.load %arg7[%c0_177, %c0_178] : memref<8x512xf32, #tpu.memory_space<vmem>>, vector<8x512xf32>
    tpu.vector_store %arg7[%c0_177, %c0_178], %19 {strides = array<i32>} : memref<8x512xf32, #tpu.memory_space<vmem>>, vector<8x512xf32>,
    return
  }
  func.func @transform_0(%arg0: i32) -> (i32, i32, i32) {
    %c0_i32 = arith.constant 0 : i32
    %c0_i32_0 = arith.constant 0 : i32
    %c0_i32_1 = arith.constant 0 : i32
    %c0_i32_2 = arith.constant 0 : i32
    return %c0_i32, %c0_i32_0, %c0_i32_1 : i32, i32, i32
  }
  func.func @transform_1(%arg0: i32) -> (i32, i32) {
    %c0_i32 = arith.constant 0 : i32
    %c0_i32_0 = arith.constant 0 : i32
    %c0_i32_1 = arith.constant 0 : i32
    return %c0_i32, %c0_i32_0 : i32, i32
  }
  func.func @transform_2(%arg0: i32) -> (i32, i32) {
    %c0_i32 = arith.constant 0 : i32
    %c0_i32_0 = arith.constant 0 : i32
    %c0_i32_1 = arith.constant 0 : i32
    return %c0_i32, %c0_i32_0 : i32, i32
  }
  func.func @transform_3(%arg0: i32) -> (i32, i32, i32) {
    %c0_i32 = arith.constant 0 : i32
    %c0_i32_0 = arith.constant 0 : i32
    %c0_i32_1 = arith.constant 0 : i32
    %c0_i32_2 = arith.constant 0 : i32
    return %c0_i32, %c0_i32_0, %c0_i32_1 : i32, i32, i32
  }
  func.func @transform_4(%arg0: i32) -> (i32, i32) {
    %c0_i32 = arith.constant 0 : i32
    %c0_i32_0 = arith.constant 0 : i32
    %c0_i32_1 = arith.constant 0 : i32
    return %c0_i32, %c0_i32_0 : i32, i32
  }
  func.func @transform_5(%arg0: i32) -> (i32, i32) {
    %c0_i32 = arith.constant 0 : i32
    %c0_i32_0 = arith.constant 0 : i32
    %c0_i32_1 = arith.constant 0 : i32
    return %c0_i32, %c0_i32_0 : i32, i32
  }
  func.func @transform_6(%arg0: i32) -> (i32, i32) {
    %c0_i32 = arith.constant 0 : i32
    %c0_i32_0 = arith.constant 0 : i32
    %c0_i32_1 = arith.constant 0 : i32
    return %c0_i32, %c0_i32_0 : i32, i32
  }
}

</mosaic_0001>

<llo_original>
// kernel: snn_forward.1
$region0: #{snn_forward.1}
  #allocation0 [shape = 'u32[]', space=smem, size = 0x4, offset = 0x4, fixed_abs, tag = 'smem constant byte address 0x4 - core index']
  #allocation1 [shape = 'u32[144,128]{1,0:T(1,128)}', space=vmem, size = 0x12000, scoped, tag = 'internal scratch']
  %s0 = inlined_call_operand.vmem [shape: f32[4,36,512], index: 0, kind: input, shape index: {}]
  %s1 = inlined_call_operand.vmem [shape: f32[8,36], index: 1, kind: input, shape index: {}]
  %s2 = inlined_call_operand.vmem [shape: f32[8,1], index: 2, kind: input, shape index: {}]
  %s3 = inlined_call_operand.vmem [shape: f32[8,128,256], index: 3, kind: input, shape index: {}]
  %s4 = inlined_call_operand.vmem [shape: f32[1,256], index: 4, kind: input, shape index: {}]
  %s5 = inlined_call_operand.hbm [shape: f32[1,256], index: 5, kind: output, shape index: {0}]
  %s6 = inlined_call_operand.hbm [shape: f32[8,512], index: 6, kind: output, shape index: {1}]
  %7 = xla_tuple %s5, %s6
  %s8 = sld [smem:[#allocation0]]
  $region38: #{snn_forward.1} parent=0
    _
  %s10 = ssub.s32 1, %s8
  %s11 = scalar_select 0, %s10, %s8
  $region1: #{snn_forward.1} parent=0
    #allocation2 [shape = 'u8[1024]{0}', space=vmem, size = 0x400, scoped, tag = 'output window, operand 0, single buffered']
    #allocation3 [shape = 's32[1]{0}', space=sflag, size = 0x4, scoped, tag = 'scoped memory for snn_forward.1']
    #allocation4 [shape = 'u8[16384]{0}', space=vmem, size = 0x4000, scoped, tag = 'output window, operand 1, single buffered']
    #allocation5 [shape = 's32[1]{0}', space=sflag, size = 0x4, scoped, tag = 'scoped memory for snn_forward.1']
    %12 = vsyncpa [#allocation3], 0
    %13 = vsyncpa [#allocation5], 0
    // Predicated region
    $region2: #{snn_forward.1} parent=1 // pred_check
      _
    $region3: #{snn_forward.1} parent=1 // pred_check_branch
      %15 = sbr.rel (0) target = $region5
    $region4: #{snn_forward.1} parent=1 // pred_region
      _
    $region5: #{snn_forward.1} parent=1 // pred_fallthru
      _
    // Predicated region
    $region6: #{snn_forward.1} parent=1 // pred_check
      _
    $region7: #{snn_forward.1} parent=1 // pred_check_branch
      %17 = sbr.rel (0) target = $region9
    $region8: #{snn_forward.1} parent=1 // pred_region
      _
    $region9: #{snn_forward.1} parent=1 // pred_fallthru
      _
    // Predicated region
    $region10: #{snn_forward.1} parent=1 // pred_check
      _
    $region11: #{snn_forward.1} parent=1 // pred_check_branch
      %19 = sbr.rel (0) target = $region13
    $region12: #{snn_forward.1} parent=1 // pred_region
      _
    $region13: #{snn_forward.1} parent=1 // pred_fallthru
      _
    // Predicated region
    $region14: #{snn_forward.1} parent=1 // pred_check
      _
    $region15: #{snn_forward.1} parent=1 // pred_check_branch
      %21 = sbr.rel (0) target = $region17
    $region16: #{snn_forward.1} parent=1 // pred_region
      _
    $region17: #{snn_forward.1} parent=1 // pred_fallthru
      _
    // Predicated region
    $region18: #{snn_forward.1} parent=1 // pred_check
      _
    $region19: #{snn_forward.1} parent=1 // pred_check_branch
      %23 = sbr.rel (0) target = $region21
    $region20: #{snn_forward.1} parent=1 // pred_region
      _
    $region21: #{snn_forward.1} parent=1 // pred_fallthru
      _
    %v24 = vld [vmem:[%s1] sm:$0xff]
    %v25 = vld [vmem:[%s2] sm:$0xff]
    %27 = vset.pattern.permute.xlu0 0
    %28 = vperm.xlu0 %27, %v25
    %v29 = vpop.permute.xlu0 %28
    %v31 = vld [vmem:[%s4] sm:$0x3]
    %v32 = vld [vmem:[%s0] sm:$0xff]
    %v33 = vld [vmem:[%s0 + $0x8] sm:$0xff]
    %v34 = vld [vmem:[%s0 + $0x10] sm:$0xff]
    %v35 = vld [vmem:[%s0 + $0x18] sm:$0xff]
    %v36 = vld [vmem:[%s0 + $0x20] sm:$0xff]
    %v37 = vld [vmem:[%s0 + $0x28] sm:$0xff]
    %v38 = vld [vmem:[%s0 + $0x30] sm:$0xff]
    %v39 = vld [vmem:[%s0 + $0x38] sm:$0xff]
    %v40 = vld [vmem:[%s0 + $0x40] sm:$0xff]
    %v41 = vld [vmem:[%s0 + $0x48] sm:$0xff]
    %v42 = vld [vmem:[%s0 + $0x50] sm:$0xff]
    %v43 = vld [vmem:[%s0 + $0x58] sm:$0xff]
    %v44 = vld [vmem:[%s0 + $0x60] sm:$0xff]
    %v45 = vld [vmem:[%s0 + $0x68] sm:$0xff]
    %v46 = vld [vmem:[%s0 + $0x70] sm:$0xff]
    %v47 = vld [vmem:[%s0 + $0x78] sm:$0xff]
    %v48 = vld [vmem:[%s0 + $0x80] sm:$0xf]
    %v49 = vld [vmem:[%s0 + $0x88] sm:$0xf]
    %v50 = vld [vmem:[%s0 + $0x90] sm:$0xf]
    %v51 = vld [vmem:[%s0 + $0x98] sm:$0xf]
    %vm52 = vcmask 293888
    %v54 = vsel %vm52, %v24, 0
    %vm56 = vcmask 1043456
    %v58 = vsel %vm56, %v48, 0
    %v61 = vsel %vm56, %v49, 0
    %v64 = vsel %vm56, %v50, 0
    %v67 = vsel %vm56, %v51, 0
    %69 = vmatprep.subr.mxu0 0.0
    %70 = vmatpush1.msra.mxu0 0.0
    %71 = vmatprep.subr.mxu0 0.0
    %72 = vmatpush1.msra.mxu0 0.0
    %73 = vmatprep.subr.mxu0 0.0
    %74 = vmatpush1.msra.mxu0 0.0
    %75 = vmatprep.subr.mxu0 0.0
    %76 = vmatpush1.msra.mxu0 0.0
    %77 = vmatprep.subr.mxu0 0.0
    %78 = vmatpush1.msra.mxu0 0.0
    %79 = vmatprep.subr.mxu0 0.0
    %80 = vmatpush1.msra.mxu0 0.0
    %81 = vmatprep.subr.mxu0 0.0
    %82 = vmatpush1.msra.mxu0 0.0
    %83 = vmatprep.subr.mxu0 0.0
    %84 = vmatpush1.msra.mxu0 0.0
    %85 = vmatprep.subr.mxu0 0.0
    %86 = vmatpush1.msra.mxu0 0.0
    %87 = vmatprep.subr.mxu0 0.0
    %88 = vmatpush1.msra.mxu0 0.0
    %89 = vmatprep.subr.mxu0 0.0
    %90 = vmatpush1.msra.mxu0 0.0
    %91 = vmatprep.subr.mxu0 %v61
    %92 = vmatpush1.msra.mxu0 %v58
    %93 = vmatprep.subr.mxu0 %v45
    %94 = vmatpush1.msra.mxu0 %v44
    %95 = vmatprep.subr.mxu0 %v41
    %96 = vmatpush1.msra.mxu0 %v40
    %97 = vmatprep.subr.mxu0 %v37
    %98 = vmatpush1.msra.mxu0 %v36
    %99 = vmatprep.subr.mxu0 %v33
    %100 = vmatpush1.msra.mxu0 %v32
    %101 = vmatprep.subr.mxu0 0.0
    %102 = vmatpush2.msra.mxu0 0.0
    %103 = vmatprep.subr.mxu0 0.0
    %104 = vmatpush2.msra.mxu0 0.0
    %105 = vmatprep.subr.mxu0 0.0
    %106 = vmatpush2.msra.mxu0 0.0
    %107 = vmatprep.subr.mxu0 0.0
    %108 = vmatpush2.msra.mxu0 0.0
    %109 = vmatprep.subr.mxu0 0.0
    %110 = vmatpush2.msra.mxu0 0.0
    %111 = vmatprep.subr.mxu0 0.0
    %112 = vmatpush2.msra.mxu0 0.0
    %113 = vmatprep.subr.mxu0 0.0
    %114 = vmatpush2.msra.mxu0 0.0
    %115 = vmatprep.subr.mxu0 0.0
    %116 = vmatpush2.msra.mxu0 0.0
    %117 = vmatprep.subr.mxu0 0.0
    %118 = vmatpush2.msra.mxu0 0.0
    %119 = vmatprep.subr.mxu0 0.0
    %120 = vmatpush2.msra.mxu0 0.0
    %121 = vmatprep.subr.mxu0 0.0
    %122 = vmatpush2.msra.mxu0 0.0
    %123 = vmatprep.subr.mxu0 0.0
    %124 = vmatpush2.msra.mxu0 0.0
    %125 = vmatprep.subr.mxu0 0.0
    %126 = vmatpush2.msra.mxu0 0.0
    %127 = vmatprep.subr.mxu0 0.0
    %128 = vmatpush2.msra.mxu0 0.0
    %129 = vmatprep.subr.mxu0 0.0
    %130 = vmatpush2.msra.mxu0 0.0
    %131 = vmatprep.subr.mxu0 0.0
    %132 = vmatpush2.msra.mxu0 0.0
    %133 = vmatprep.mubr.f32.mxu0 0.0
    %134 = vmatmul.mubr.f32.gmra.mxu0 %v54
    %v135 = vpop.f32.mrf.mxu0
    %v136 = vadd.f32 %v29, %v135
    %v137 = vpop.f32.mrf.mxu0
    %v138 = vadd.f32 %v29, %v137
    %139 = vdwg.mxu0
    %140 = vmatprep.subr.mxu0 0.0
    %141 = vmatpush1.msra.mxu0 0.0
    %142 = vmatprep.subr.mxu0 0.0
    %143 = vmatpush1.msra.mxu0 0.0
    %144 = vmatprep.subr.mxu0 0.0
    %145 = vmatpush1.msra.mxu0 0.0
    %146 = vmatprep.subr.mxu0 0.0
    %147 = vmatpush1.msra.mxu0 0.0
    %148 = vmatprep.subr.mxu0 0.0
    %149 = vmatpush1.msra.mxu0 0.0
    %150 = vmatprep.subr.mxu0 0.0
    %151 = vmatpush1.msra.mxu0 0.0
    %152 = vmatprep.subr.mxu0 0.0
    %153 = vmatpush1.msra.mxu0 0.0
    %154 = vmatprep.subr.mxu0 0.0
    %155 = vmatpush1.msra.mxu0 0.0
    %156 = vmatprep.subr.mxu0 0.0
    %157 = vmatpush1.msra.mxu0 0.0
    %158 = vmatprep.subr.mxu0 0.0
    %159 = vmatpush1.msra.mxu0 0.0
    %160 = vmatprep.subr.mxu0 0.0
    %161 = vmatpush1.msra.mxu0 0.0
    %162 = vmatprep.subr.mxu0 %v67
    %163 = vmatpush1.msra.mxu0 %v64
    %164 = vmatprep.subr.mxu0 %v47
    %165 = vmatpush1.msra.mxu0 %v46
    %166 = vmatprep.subr.mxu0 %v43
    %167 = vmatpush1.msra.mxu0 %v42
    %168 = vmatprep.subr.mxu0 %v39
    %169 = vmatpush1.msra.mxu0 %v38
    %170 = vmatprep.subr.mxu0 %v35
    %171 = vmatpush1.msra.mxu0 %v34
    %172 = vmatprep.subr.mxu0 0.0
    %173 = vmatpush2.msra.mxu0 0.0
    %174 = vmatprep.subr.mxu0 0.0
    %175 = vmatpush2.msra.mxu0 0.0
    %176 = vmatprep.subr.mxu0 0.0
    %177 = vmatpush2.msra.mxu0 0.0
    %178 = vmatprep.subr.mxu0 0.0
    %179 = vmatpush2.msra.mxu0 0.0
    %180 = vmatprep.subr.mxu0 0.0
    %181 = vmatpush2.msra.mxu0 0.0
    %182 = vmatprep.subr.mxu0 0.0
    %183 = vmatpush2.msra.mxu0 0.0
    %184 = vmatprep.subr.mxu0 0.0
    %185 = vmatpush2.msra.mxu0 0.0
    %186 = vmatprep.subr.mxu0 0.0
    %187 = vmatpush2.msra.mxu0 0.0
    %188 = vmatprep.subr.mxu0 0.0
    %189 = vmatpush2.msra.mxu0 0.0
    %190 = vmatprep.subr.mxu0 0.0
    %191 = vmatpush2.msra.mxu0 0.0
    %192 = vmatprep.subr.mxu0 0.0
    %193 = vmatpush2.msra.mxu0 0.0
    %194 = vmatprep.subr.mxu0 0.0
    %195 = vmatpush2.msra.mxu0 0.0
    %196 = vmatprep.subr.mxu0 0.0
    %197 = vmatpush2.msra.mxu0 0.0
    %198 = vmatprep.subr.mxu0 0.0
    %199 = vmatpush2.msra.mxu0 0.0
    %200 = vmatprep.subr.mxu0 0.0
    %201 = vmatpush2.msra.mxu0 0.0
    %202 = vmatprep.subr.mxu0 0.0
    %203 = vmatpush2.msra.mxu0 0.0
    %204 = vmatprep.mubr.f32.mxu0 0.0
    %205 = vmatmul.mubr.f32.gmra.mxu0 %v54
    %v206 = vpop.f32.mrf.mxu0
    %v207 = vadd.f32 %v29, %v206
    %v208 = vpop.f32.mrf.mxu0
    %v209 = vadd.f32 %v29, %v208
    %210 = vdwg.mxu0
    %v211 = vadd.f32 %v136, 0.0
    %v212 = vadd.f32 %v138, 0.0
    %v213 = vadd.f32 %v207, 0.0
    %v214 = vadd.f32 %v209, 0.0
    %vm215 = vcmp.gt.f32.partialorder %v211, 0.5
    %vm216 = vcmp.gt.f32.partialorder %v212, 0.5
    %vm217 = vcmp.gt.f32.partialorder %v213, 0.5
    %vm218 = vcmp.gt.f32.partialorder %v214, 0.5
    %v219 = vsel %vm215, 1, 0
    %v220 = vsel %vm216, 1, 0
    %v221 = vsel %vm217, 1, 0
    %v222 = vsel %vm218, 1, 0
    %v223 = vcvt.s32.f32 %v219
    %v224 = vcvt.s32.f32 %v220
    %v225 = vcvt.s32.f32 %v221
    %v226 = vcvt.s32.f32 %v222
    %v227 = vadd.f32 %v223, %v224
    %v228 = vadd.f32 %v227, %v225
    %v229 = vadd.f32 %v228, %v226
    %v230 = vmul.f32 %v229, 0.25
    %v231 = vld [vmem:[%s3] sm:$0xff]
    %v232 = vld [vmem:[%s3 + $0x8] sm:$0xff]
    %v233 = vld [vmem:[%s3 + $0x10] sm:$0xff]
    %v234 = vld [vmem:[%s3 + $0x18] sm:$0xff]
    %v235 = vld [vmem:[%s3 + $0x20] sm:$0xff]
    %v236 = vld [vmem:[%s3 + $0x28] sm:$0xff]
    %v237 = vld [vmem:[%s3 + $0x30] sm:$0xff]
    %v238 = vld [vmem:[%s3 + $0x38] sm:$0xff]
    %v239 = vld [vmem:[%s3 + $0x40] sm:$0xff]
    %v240 = vld [vmem:[%s3 + $0x48] sm:$0xff]
    %v241 = vld [vmem:[%s3 + $0x50] sm:$0xff]
    %v242 = vld [vmem:[%s3 + $0x58] sm:$0xff]
    %v243 = vld [vmem:[%s3 + $0x60] sm:$0xff]
    %v244 = vld [vmem:[%s3 + $0x68] sm:$0xff]
    %v245 = vld [vmem:[%s3 + $0x70] sm:$0xff]
    %v246 = vld [vmem:[%s3 + $0x78] sm:$0xff]
    %v247 = vld [vmem:[%s3 + $0x80] sm:$0xff]
    %v248 = vld [vmem:[%s3 + $0x88] sm:$0xff]
    %v249 = vld [vmem:[%s3 + $0x90] sm:$0xff]
    %v250 = vld [vmem:[%s3 + $0x98] sm:$0xff]
    %v251 = vld [vmem:[%s3 + $0xa0] sm:$0xff]
    %v252 = vld [vmem:[%s3 + $0xa8] sm:$0xff]
    %v253 = vld [vmem:[%s3 + $0xb0] sm:$0xff]
    %v254 = vld [vmem:[%s3 + $0xb8] sm:$0xff]
    %v255 = vld [vmem:[%s3 + $0xc0] sm:$0xff]
    %v256 = vld [vmem:[%s3 + $0xc8] sm:$0xff]
    %v257 = vld [vmem:[%s3 + $0xd0] sm:$0xff]
    %v258 = vld [vmem:[%s3 + $0xd8] sm:$0xff]
    %v259 = vld [vmem:[%s3 + $0xe0] sm:$0xff]
    %v260 = vld [vmem:[%s3 + $0xe8] sm:$0xff]
    %v261 = vld [vmem:[%s3 + $0xf0] sm:$0xff]
    %v262 = vld [vmem:[%s3 + $0xf8] sm:$0xff]
    %263 = vmatprep.subr.mxu0 %v262
    %264 = vmatpush1.msra.mxu0 %v261
    %265 = vmatprep.subr.mxu0 %v260
    %266 = vmatpush1.msra.mxu0 %v259
    %267 = vmatprep.subr.mxu0 %v258
    %268 = vmatpush1.msra.mxu0 %v257
    %269 = vmatprep.subr.mxu0 %v256
    %270 = vmatpush1.msra.mxu0 %v255
    %271 = vmatprep.subr.mxu0 %v254
    %272 = vmatpush1.msra.mxu0 %v253
    %273 = vmatprep.subr.mxu0 %v252
    %274 = vmatpush1.msra.mxu0 %v251
    %275 = vmatprep.subr.mxu0 %v250
    %276 = vmatpush1.msra.mxu0 %v249
    %277 = vmatprep.subr.mxu0 %v248
    %278 = vmatpush1.msra.mxu0 %v247
    %279 = vmatprep.subr.mxu0 %v246
    %280 = vmatpush1.msra.mxu0 %v245
    %281 = vmatprep.subr.mxu0 %v244
    %282 = vmatpush1.msra.mxu0 %v243
    %283 = vmatprep.subr.mxu0 %v242
    %284 = vmatpush1.msra.mxu0 %v241
    %285 = vmatprep.subr.mxu0 %v240
    %286 = vmatpush1.msra.mxu0 %v239
    %287 = vmatprep.subr.mxu0 %v238
    %288 = vmatpush1.msra.mxu0 %v237
    %289 = vmatprep.subr.mxu0 %v236
    %290 = vmatpush1.msra.mxu0 %v235
    %291 = vmatprep.subr.mxu0 %v234
    %292 = vmatpush1.msra.mxu0 %v233
    %293 = vmatprep.subr.mxu0 %v232
    %294 = vmatpush1.msra.mxu0 %v231
    %295 = vmatprep.subr.mxu0 0.0
    %296 = vmatpush2.msra.mxu0 0.0
    %297 = vmatprep.subr.mxu0 0.0
    %298 = vmatpush2.msra.mxu0 0.0
    %299 = vmatprep.subr.mxu0 0.0
    %300 = vmatpush2.msra.mxu0 0.0
    %301 = vmatprep.subr.mxu0 0.0
    %302 = vmatpush2.msra.mxu0 0.0
    %303 = vmatprep.subr.mxu0 0.0
    %304 = vmatpush2.msra.mxu0 0.0
    %305 = vmatprep.subr.mxu0 0.0
    %306 = vmatpush2.msra.mxu0 0.0
    %307 = vmatprep.subr.mxu0 0.0
    %308 = vmatpush2.msra.mxu0 0.0
    %309 = vmatprep.subr.mxu0 0.0
    %310 = vmatpush2.msra.mxu0 0.0
    %311 = vmatprep.subr.mxu0 0.0
    %312 = vmatpush2.msra.mxu0 0.0
    %313 = vmatprep.subr.mxu0 0.0
    %314 = vmatpush2.msra.mxu0 0.0
    %315 = vmatprep.subr.mxu0 0.0
    %316 = vmatpush2.msra.mxu0 0.0
    %317 = vmatprep.subr.mxu0 0.0
    %318 = vmatpush2.msra.mxu0 0.0
    %319 = vmatprep.subr.mxu0 0.0
    %320 = vmatpush2.msra.mxu0 0.0
    %321 = vmatprep.subr.mxu0 0.0
    %322 = vmatpush2.msra.mxu0 0.0
    %323 = vmatprep.subr.mxu0 0.0
    %324 = vmatpush2.msra.mxu0 0.0
    %325 = vmatprep.subr.mxu0 0.0
    %326 = vmatpush2.msra.mxu0 0.0
    %327 = vmatprep.mubr.f32.mxu0 0.0
    %328 = vmatmul.mubr.f32.gmra.mxu0 %v230
    %v329 = vpop.f32.mrf.mxu0
    %v330 = vadd.f32 0.0, %v329
    %v331 = vpop.f32.mrf.mxu0
    %v332 = vadd.f32 0.0, %v331
    %333 = vdwg.mxu0
    %v336 = vcombine.low %v330, %v332
    %v338 = vunpack.c.l.s4 1966171168
    %v339 = vunpack.c.0.s8 %v338
    %v340 = vlaneseq
    %v341 = vshrl.u32 %v340, 7
    %v342 = vsub.s32 %v339, %v341
    %v343 = vrot.slane %v336, %v342
    %v345 = vunpack.c.l.s4 1966171168
    %v346 = vunpack.c.0.s8 %v345
    %v347 = vlaneseq
    %v348 = vshrl.u32 %v347, 7
    %v349 = vsub.s32 %v346, %v348
    %v350 = vrot.slane %v343, %v349
    %v352 = vadd.f32 %v31, %v350
    %s353 = scalar_lea.vmem %s3, 256
    %v354 = vld [vmem:[%s353] sm:$0xff]
    %v355 = vld [vmem:[%s353 + $0x8] sm:$0xff]
    %v356 = vld [vmem:[%s353 + $0x10] sm:$0xff]
    %v357 = vld [vmem:[%s353 + $0x18] sm:$0xff]
    %v358 = vld [vmem:[%s353 + $0x20] sm:$0xff]
    %v359 = vld [vmem:[%s353 + $0x28] sm:$0xff]
    %v360 = vld [vmem:[%s353 + $0x30] sm:$0xff]
    %v361 = vld [vmem:[%s353 + $0x38] sm:$0xff]
    %v362 = vld [vmem:[%s353 + $0x40] sm:$0xff]
    %v363 = vld [vmem:[%s353 + $0x48] sm:$0xff]
    %v364 = vld [vmem:[%s353 + $0x50] sm:$0xff]
    %v365 = vld [vmem:[%s353 + $0x58] sm:$0xff]
    %v366 = vld [vmem:[%s353 + $0x60] sm:$0xff]
    %v367 = vld [vmem:[%s353 + $0x68] sm:$0xff]
    %v368 = vld [vmem:[%s353 + $0x70] sm:$0xff]
    %v369 = vld [vmem:[%s353 + $0x78] sm:$0xff]
    %v370 = vld [vmem:[%s353 + $0x80] sm:$0xff]
    %v371 = vld [vmem:[%s353 + $0x88] sm:$0xff]
    %v372 = vld [vmem:[%s353 + $0x90] sm:$0xff]
    %v373 = vld [vmem:[%s353 + $0x98] sm:$0xff]
    %v374 = vld [vmem:[%s353 + $0xa0] sm:$0xff]
    %v375 = vld [vmem:[%s353 + $0xa8] sm:$0xff]
    %v376 = vld [vmem:[%s353 + $0xb0] sm:$0xff]
    %v377 = vld [vmem:[%s353 + $0xb8] sm:$0xff]
    %v378 = vld [vmem:[%s353 + $0xc0] sm:$0xff]
    %v379 = vld [vmem:[%s353 + $0xc8] sm:$0xff]
    %v380 = vld [vmem:[%s353 + $0xd0] sm:$0xff]
    %v381 = vld [vmem:[%s353 + $0xd8] sm:$0xff]
    %v382 = vld [vmem:[%s353 + $0xe0] sm:$0xff]
    %v383 = vld [vmem:[%s353 + $0xe8] sm:$0xff]
    %v384 = vld [vmem:[%s353 + $0xf0] sm:$0xff]
    %v385 = vld [vmem:[%s353 + $0xf8] sm:$0xff]
    %v387 = vrot.slane %v230, 1
    %389 = vmatprep.subr.mxu0 %v385
    %390 = vmatpush1.msra.mxu0 %v384
    %391 = vmatprep.subr.mxu0 %v383
    %392 = vmatpush1.msra.mxu0 %v382
    %393 = vmatprep.subr.mxu0 %v381
    %394 = vmatpush1.msra.mxu0 %v380
    %395 = vmatprep.subr.mxu0 %v379
    %396 = vmatpush1.msra.mxu0 %v378
    %397 = vmatprep.subr.mxu0 %v377
    %398 = vmatpush1.msra.mxu0 %v376
    %399 = vmatprep.subr.mxu0 %v375
    %400 = vmatpush1.msra.mxu0 %v374
    %401 = vmatprep.subr.mxu0 %v373
    %402 = vmatpush1.msra.mxu0 %v372
    %403 = vmatprep.subr.mxu0 %v371
    %404 = vmatpush1.msra.mxu0 %v370
    %405 = vmatprep.subr.mxu0 %v369
    %406 = vmatpush1.msra.mxu0 %v368
    %407 = vmatprep.subr.mxu0 %v367
    %408 = vmatpush1.msra.mxu0 %v366
    %409 = vmatprep.subr.mxu0 %v365
    %410 = vmatpush1.msra.mxu0 %v364
    %411 = vmatprep.subr.mxu0 %v363
    %412 = vmatpush1.msra.mxu0 %v362
    %413 = vmatprep.subr.mxu0 %v361
    %414 = vmatpush1.msra.mxu0 %v360
    %415 = vmatprep.subr.mxu0 %v359
    %416 = vmatpush1.msra.mxu0 %v358
    %417 = vmatprep.subr.mxu0 %v357
    %418 = vmatpush1.msra.mxu0 %v356
    %419 = vmatprep.subr.mxu0 %v355
    %420 = vmatpush1.msra.mxu0 %v354
    %421 = vmatprep.subr.mxu0 0.0
    %422 = vmatpush2.msra.mxu0 0.0
    %423 = vmatprep.subr.mxu0 0.0
    %424 = vmatpush2.msra.mxu0 0.0
    %425 = vmatprep.subr.mxu0 0.0
    %426 = vmatpush2.msra.mxu0 0.0
    %427 = vmatprep.subr.mxu0 0.0
    %428 = vmatpush2.msra.mxu0 0.0
    %429 = vmatprep.subr.mxu0 0.0
    %430 = vmatpush2.msra.mxu0 0.0
    %431 = vmatprep.subr.mxu0 0.0
    %432 = vmatpush2.msra.mxu0 0.0
    %433 = vmatprep.subr.mxu0 0.0
    %434 = vmatpush2.msra.mxu0 0.0
    %435 = vmatprep.subr.mxu0 0.0
    %436 = vmatpush2.msra.mxu0 0.0
    %437 = vmatprep.subr.mxu0 0.0
    %438 = vmatpush2.msra.mxu0 0.0
    %439 = vmatprep.subr.mxu0 0.0
    %440 = vmatpush2.msra.mxu0 0.0
    %441 = vmatprep.subr.mxu0 0.0
    %442 = vmatpush2.msra.mxu0 0.0
    %443 = vmatprep.subr.mxu0 0.0
    %444 = vmatpush2.msra.mxu0 0.0
    %445 = vmatprep.subr.mxu0 0.0
    %446 = vmatpush2.msra.mxu0 0.0
    %447 = vmatprep.subr.mxu0 0.0
    %448 = vmatpush2.msra.mxu0 0.0
    %449 = vmatprep.subr.mxu0 0.0
    %450 = vmatpush2.msra.mxu0 0.0
    %451 = vmatprep.subr.mxu0 0.0
    %452 = vmatpush2.msra.mxu0 0.0
    %453 = vmatprep.mubr.f32.mxu0 0.0
    %454 = vmatmul.mubr.f32.gmra.mxu0 %v387
    %v455 = vpop.f32.mrf.mxu0
    %v456 = vadd.f32 0.0, %v455
    %v457 = vpop.f32.mrf.mxu0
    %v458 = vadd.f32 0.0, %v457
    %459 = vdwg.mxu0
    %v462 = vcombine.low %v456, %v458
    %v464 = vunpack.c.l.s4 1966171168
    %v465 = vunpack.c.0.s8 %v464
    %v466 = vlaneseq
    %v467 = vshrl.u32 %v466, 7
    %v468 = vsub.s32 %v465, %v467
    %v469 = vrot.slane %v462, %v468
    %v471 = vunpack.c.l.s4 1966171168
    %v472 = vunpack.c.0.s8 %v471
    %v473 = vlaneseq
    %v474 = vshrl.u32 %v473, 7
    %v475 = vsub.s32 %v472, %v474
    %v476 = vrot.slane %v469, %v475
    %v478 = vadd.f32 %v352, %v476
    %s479 = scalar_lea.vmem %s3, 512
    %v480 = vld [vmem:[%s479] sm:$0xff]
    %v481 = vld [vmem:[%s479 + $0x8] sm:$0xff]
    %v482 = vld [vmem:[%s479 + $0x10] sm:$0xff]
    %v483 = vld [vmem:[%s479 + $0x18] sm:$0xff]
    %v484 = vld [vmem:[%s479 + $0x20] sm:$0xff]
    %v485 = vld [vmem:[%s479 + $0x28] sm:$0xff]
    %v486 = vld [vmem:[%s479 + $0x30] sm:$0xff]
    %v487 = vld [vmem:[%s479 + $0x38] sm:$0xff]
    %v488 = vld [vmem:[%s479 + $0x40] sm:$0xff]
    %v489 = vld [vmem:[%s479 + $0x48] sm:$0xff]
    %v490 = vld [vmem:[%s479 + $0x50] sm:$0xff]
    %v491 = vld [vmem:[%s479 + $0x58] sm:$0xff]
    %v492 = vld [vmem:[%s479 + $0x60] sm:$0xff]
    %v493 = vld [vmem:[%s479 + $0x68] sm:$0xff]
    %v494 = vld [vmem:[%s479 + $0x70] sm:$0xff]
    %v495 = vld [vmem:[%s479 + $0x78] sm:$0xff]
    %v496 = vld [vmem:[%s479 + $0x80] sm:$0xff]
    %v497 = vld [vmem:[%s479 + $0x88] sm:$0xff]
    %v498 = vld [vmem:[%s479 + $0x90] sm:$0xff]
    %v499 = vld [vmem:[%s479 + $0x98] sm:$0xff]
    %v500 = vld [vmem:[%s479 + $0xa0] sm:$0xff]
    %v501 = vld [vmem:[%s479 + $0xa8] sm:$0xff]
    %v502 = vld [vmem:[%s479 + $0xb0] sm:$0xff]
    %v503 = vld [vmem:[%s479 + $0xb8] sm:$0xff]
    %v504 = vld [vmem:[%s479 + $0xc0] sm:$0xff]
    %v505 = vld [vmem:[%s479 + $0xc8] sm:$0xff]
    %v506 = vld [vmem:[%s479 + $0xd0] sm:$0xff]
    %v507 = vld [vmem:[%s479 + $0xd8] sm:$0xff]
    %v508 = vld [vmem:[%s479 + $0xe0] sm:$0xff]
    %v509 = vld [vmem:[%s479 + $0xe8] sm:$0xff]
    %v510 = vld [vmem:[%s479 + $0xf0] sm:$0xff]
    %v511 = vld [vmem:[%s479 + $0xf8] sm:$0xff]
    %v512 = vrot.slane %v230, 2
    %514 = vmatprep.subr.mxu0 %v511
    %515 = vmatpush1.msra.mxu0 %v510
    %516 = vmatprep.subr.mxu0 %v509
    %517 = vmatpush1.msra.mxu0 %v508
    %518 = vmatprep.subr.mxu0 %v507
    %519 = vmatpush1.msra.mxu0 %v506
    %520 = vmatprep.subr.mxu0 %v505
    %521 = vmatpush1.msra.mxu0 %v504
    %522 = vmatprep.subr.mxu0 %v503
    %523 = vmatpush1.msra.mxu0 %v502
    %524 = vmatprep.subr.mxu0 %v501
    %525 = vmatpush1.msra.mxu0 %v500
    %526 = vmatprep.subr.mxu0 %v499
    %527 = vmatpush1.msra.mxu0 %v498
    %528 = vmatprep.subr.mxu0 %v497
    %529 = vmatpush1.msra.mxu0 %v496
    %530 = vmatprep.subr.mxu0 %v495
    %531 = vmatpush1.msra.mxu0 %v494
    %532 = vmatprep.subr.mxu0 %v493
    %533 = vmatpush1.msra.mxu0 %v492
    %534 = vmatprep.subr.mxu0 %v491
    %535 = vmatpush1.msra.mxu0 %v490
    %536 = vmatprep.subr.mxu0 %v489
    %537 = vmatpush1.msra.mxu0 %v488
    %538 = vmatprep.subr.mxu0 %v487
    %539 = vmatpush1.msra.mxu0 %v486
    %540 = vmatprep.subr.mxu0 %v485
    %541 = vmatpush1.msra.mxu0 %v484
    %542 = vmatprep.subr.mxu0 %v483
    %543 = vmatpush1.msra.mxu0 %v482
    %544 = vmatprep.subr.mxu0 %v481
    %545 = vmatpush1.msra.mxu0 %v480
    %546 = vmatprep.subr.mxu0 0.0
    %547 = vmatpush2.msra.mxu0 0.0
    %548 = vmatprep.subr.mxu0 0.0
    %549 = vmatpush2.msra.mxu0 0.0
    %550 = vmatprep.subr.mxu0 0.0
    %551 = vmatpush2.msra.mxu0 0.0
    %552 = vmatprep.subr.mxu0 0.0
    %553 = vmatpush2.msra.mxu0 0.0
    %554 = vmatprep.subr.mxu0 0.0
    %555 = vmatpush2.msra.mxu0 0.0
    %556 = vmatprep.subr.mxu0 0.0
    %557 = vmatpush2.msra.mxu0 0.0
    %558 = vmatprep.subr.mxu0 0.0
    %559 = vmatpush2.msra.mxu0 0.0
    %560 = vmatprep.subr.mxu0 0.0
    %561 = vmatpush2.msra.mxu0 0.0
    %562 = vmatprep.subr.mxu0 0.0
    %563 = vmatpush2.msra.mxu0 0.0
    %564 = vmatprep.subr.mxu0 0.0
    %565 = vmatpush2.msra.mxu0 0.0
    %566 = vmatprep.subr.mxu0 0.0
    %567 = vmatpush2.msra.mxu0 0.0
    %568 = vmatprep.subr.mxu0 0.0
    %569 = vmatpush2.msra.mxu0 0.0
    %570 = vmatprep.subr.mxu0 0.0
    %571 = vmatpush2.msra.mxu0 0.0
    %572 = vmatprep.subr.mxu0 0.0
    %573 = vmatpush2.msra.mxu0 0.0
    %574 = vmatprep.subr.mxu0 0.0
    %575 = vmatpush2.msra.mxu0 0.0
    %576 = vmatprep.subr.mxu0 0.0
    %577 = vmatpush2.msra.mxu0 0.0
    %578 = vmatprep.mubr.f32.mxu0 0.0
    %579 = vmatmul.mubr.f32.gmra.mxu0 %v512
    %v580 = vpop.f32.mrf.mxu0
    %v581 = vadd.f32 0.0, %v580
    %v582 = vpop.f32.mrf.mxu0
    %v583 = vadd.f32 0.0, %v582
    %584 = vdwg.mxu0
    %v587 = vcombine.low %v581, %v583
    %v589 = vunpack.c.l.s4 1966171168
    %v590 = vunpack.c.0.s8 %v589
    %v591 = vlaneseq
    %v592 = vshrl.u32 %v591, 7
    %v593 = vsub.s32 %v590, %v592
    %v594 = vrot.slane %v587, %v593
    %v596 = vunpack.c.l.s4 1966171168
    %v597 = vunpack.c.0.s8 %v596
    %v598 = vlaneseq
    %v599 = vshrl.u32 %v598, 7
    %v600 = vsub.s32 %v597, %v599
    %v601 = vrot.slane %v594, %v600
    %v603 = vadd.f32 %v478, %v601
    %s604 = scalar_lea.vmem %s3, 768
    %v605 = vld [vmem:[%s604] sm:$0xff]
    %v606 = vld [vmem:[%s604 + $0x8] sm:$0xff]
    %v607 = vld [vmem:[%s604 + $0x10] sm:$0xff]
    %v608 = vld [vmem:[%s604 + $0x18] sm:$0xff]
    %v609 = vld [vmem:[%s604 + $0x20] sm:$0xff]
    %v610 = vld [vmem:[%s604 + $0x28] sm:$0xff]
    %v611 = vld [vmem:[%s604 + $0x30] sm:$0xff]
    %v612 = vld [vmem:[%s604 + $0x38] sm:$0xff]
    %v613 = vld [vmem:[%s604 + $0x40] sm:$0xff]
    %v614 = vld [vmem:[%s604 + $0x48] sm:$0xff]
    %v615 = vld [vmem:[%s604 + $0x50] sm:$0xff]
    %v616 = vld [vmem:[%s604 + $0x58] sm:$0xff]
    %v617 = vld [vmem:[%s604 + $0x60] sm:$0xff]
    %v618 = vld [vmem:[%s604 + $0x68] sm:$0xff]
    %v619 = vld [vmem:[%s604 + $0x70] sm:$0xff]
    %v620 = vld [vmem:[%s604 + $0x78] sm:$0xff]
    %v621 = vld [vmem:[%s604 + $0x80] sm:$0xff]
    %v622 = vld [vmem:[%s604 + $0x88] sm:$0xff]
    %v623 = vld [vmem:[%s604 + $0x90] sm:$0xff]
    %v624 = vld [vmem:[%s604 + $0x98] sm:$0xff]
    %v625 = vld [vmem:[%s604 + $0xa0] sm:$0xff]
    %v626 = vld [vmem:[%s604 + $0xa8] sm:$0xff]
    %v627 = vld [vmem:[%s604 + $0xb0] sm:$0xff]
    %v628 = vld [vmem:[%s604 + $0xb8] sm:$0xff]
    %v629 = vld [vmem:[%s604 + $0xc0] sm:$0xff]
    %v630 = vld [vmem:[%s604 + $0xc8] sm:$0xff]
    %v631 = vld [vmem:[%s604 + $0xd0] sm:$0xff]
    %v632 = vld [vmem:[%s604 + $0xd8] sm:$0xff]
    %v633 = vld [vmem:[%s604 + $0xe0] sm:$0xff]
    %v634 = vld [vmem:[%s604 + $0xe8] sm:$0xff]
    %v635 = vld [vmem:[%s604 + $0xf0] sm:$0xff]
    %v636 = vld [vmem:[%s604 + $0xf8] sm:$0xff]
    %v637 = vrot.slane %v230, 3
    %639 = vmatprep.subr.mxu0 %v636
    %640 = vmatpush1.msra.mxu0 %v635
    %641 = vmatprep.subr.mxu0 %v634
    %642 = vmatpush1.msra.mxu0 %v633
    %643 = vmatprep.subr.mxu0 %v632
    %644 = vmatpush1.msra.mxu0 %v631
    %645 = vmatprep.subr.mxu0 %v630
    %646 = vmatpush1.msra.mxu0 %v629
    %647 = vmatprep.subr.mxu0 %v628
    %648 = vmatpush1.msra.mxu0 %v627
    %649 = vmatprep.subr.mxu0 %v626
    %650 = vmatpush1.msra.mxu0 %v625
    %651 = vmatprep.subr.mxu0 %v624
    %652 = vmatpush1.msra.mxu0 %v623
    %653 = vmatprep.subr.mxu0 %v622
    %654 = vmatpush1.msra.mxu0 %v621
    %655 = vmatprep.subr.mxu0 %v620
    %656 = vmatpush1.msra.mxu0 %v619
    %657 = vmatprep.subr.mxu0 %v618
    %658 = vmatpush1.msra.mxu0 %v617
    %659 = vmatprep.subr.mxu0 %v616
    %660 = vmatpush1.msra.mxu0 %v615
    %661 = vmatprep.subr.mxu0 %v614
    %662 = vmatpush1.msra.mxu0 %v613
    %663 = vmatprep.subr.mxu0 %v612
    %664 = vmatpush1.msra.mxu0 %v611
    %665 = vmatprep.subr.mxu0 %v610
    %666 = vmatpush1.msra.mxu0 %v609
    %667 = vmatprep.subr.mxu0 %v608
    %668 = vmatpush1.msra.mxu0 %v607
    %669 = vmatprep.subr.mxu0 %v606
    %670 = vmatpush1.msra.mxu0 %v605
    %671 = vmatprep.subr.mxu0 0.0
    %672 = vmatpush2.msra.mxu0 0.0
    %673 = vmatprep.subr.mxu0 0.0
    %674 = vmatpush2.msra.mxu0 0.0
    %675 = vmatprep.subr.mxu0 0.0
    %676 = vmatpush2.msra.mxu0 0.0
    %677 = vmatprep.subr.mxu0 0.0
    %678 = vmatpush2.msra.mxu0 0.0
    %679 = vmatprep.subr.mxu0 0.0
    %680 = vmatpush2.msra.mxu0 0.0
    %681 = vmatprep.subr.mxu0 0.0
    %682 = vmatpush2.msra.mxu0 0.0
    %683 = vmatprep.subr.mxu0 0.0
    %684 = vmatpush2.msra.mxu0 0.0
    %685 = vmatprep.subr.mxu0 0.0
    %686 = vmatpush2.msra.mxu0 0.0
    %687 = vmatprep.subr.mxu0 0.0
    %688 = vmatpush2.msra.mxu0 0.0
    %689 = vmatprep.subr.mxu0 0.0
    %690 = vmatpush2.msra.mxu0 0.0
    %691 = vmatprep.subr.mxu0 0.0
    %692 = vmatpush2.msra.mxu0 0.0
    %693 = vmatprep.subr.mxu0 0.0
    %694 = vmatpush2.msra.mxu0 0.0
    %695 = vmatprep.subr.mxu0 0.0
    %696 = vmatpush2.msra.mxu0 0.0
    %697 = vmatprep.subr.mxu0 0.0
    %698 = vmatpush2.msra.mxu0 0.0
    %699 = vmatprep.subr.mxu0 0.0
    %700 = vmatpush2.msra.mxu0 0.0
    %701 = vmatprep.subr.mxu0 0.0
    %702 = vmatpush2.msra.mxu0 0.0
    %703 = vmatprep.mubr.f32.mxu0 0.0
    %704 = vmatmul.mubr.f32.gmra.mxu0 %v637
    %v705 = vpop.f32.mrf.mxu0
    %v706 = vadd.f32 0.0, %v705
    %v707 = vpop.f32.mrf.mxu0
    %v708 = vadd.f32 0.0, %v707
    %709 = vdwg.mxu0
    %v712 = vcombine.low %v706, %v708
    %v714 = vunpack.c.l.s4 1966171168
    %v715 = vunpack.c.0.s8 %v714
    %v716 = vlaneseq
    %v717 = vshrl.u32 %v716, 7
    %v718 = vsub.s32 %v715, %v717
    %v719 = vrot.slane %v712, %v718
    %v721 = vunpack.c.l.s4 1966171168
    %v722 = vunpack.c.0.s8 %v721
    %v723 = vlaneseq
    %v724 = vshrl.u32 %v723, 7
    %v725 = vsub.s32 %v722, %v724
    %v726 = vrot.slane %v719, %v725
    %v728 = vadd.f32 %v603, %v726
    %s729 = scalar_lea.vmem %s3, 1024
    %v730 = vld [vmem:[%s729] sm:$0xff]
    %v731 = vld [vmem:[%s729 + $0x8] sm:$0xff]
    %v732 = vld [vmem:[%s729 + $0x10] sm:$0xff]
    %v733 = vld [vmem:[%s729 + $0x18] sm:$0xff]
    %v734 = vld [vmem:[%s729 + $0x20] sm:$0xff]
    %v735 = vld [vmem:[%s729 + $0x28] sm:$0xff]
    %v736 = vld [vmem:[%s729 + $0x30] sm:$0xff]
    %v737 = vld [vmem:[%s729 + $0x38] sm:$0xff]
    %v738 = vld [vmem:[%s729 + $0x40] sm:$0xff]
    %v739 = vld [vmem:[%s729 + $0x48] sm:$0xff]
    %v740 = vld [vmem:[%s729 + $0x50] sm:$0xff]
    %v741 = vld [vmem:[%s729 + $0x58] sm:$0xff]
    %v742 = vld [vmem:[%s729 + $0x60] sm:$0xff]
    %v743 = vld [vmem:[%s729 + $0x68] sm:$0xff]
    %v744 = vld [vmem:[%s729 + $0x70] sm:$0xff]
    %v745 = vld [vmem:[%s729 + $0x78] sm:$0xff]
    %v746 = vld [vmem:[%s729 + $0x80] sm:$0xff]
    %v747 = vld [vmem:[%s729 + $0x88] sm:$0xff]
    %v748 = vld [vmem:[%s729 + $0x90] sm:$0xff]
    %v749 = vld [vmem:[%s729 + $0x98] sm:$0xff]
    %v750 = vld [vmem:[%s729 + $0xa0] sm:$0xff]
    %v751 = vld [vmem:[%s729 + $0xa8] sm:$0xff]
    %v752 = vld [vmem:[%s729 + $0xb0] sm:$0xff]
    %v753 = vld [vmem:[%s729 + $0xb8] sm:$0xff]
    %v754 = vld [vmem:[%s729 + $0xc0] sm:$0xff]
    %v755 = vld [vmem:[%s729 + $0xc8] sm:$0xff]
    %v756 = vld [vmem:[%s729 + $0xd0] sm:$0xff]
    %v757 = vld [vmem:[%s729 + $0xd8] sm:$0xff]
    %v758 = vld [vmem:[%s729 + $0xe0] sm:$0xff]
    %v759 = vld [vmem:[%s729 + $0xe8] sm:$0xff]
    %v760 = vld [vmem:[%s729 + $0xf0] sm:$0xff]
    %v761 = vld [vmem:[%s729 + $0xf8] sm:$0xff]
    %v762 = vrot.slane %v230, 4
    %764 = vmatprep.subr.mxu0 %v761
    %765 = vmatpush1.msra.mxu0 %v760
    %766 = vmatprep.subr.mxu0 %v759
    %767 = vmatpush1.msra.mxu0 %v758
    %768 = vmatprep.subr.mxu0 %v757
    %769 = vmatpush1.msra.mxu0 %v756
    %770 = vmatprep.subr.mxu0 %v755
    %771 = vmatpush1.msra.mxu0 %v754
    %772 = vmatprep.subr.mxu0 %v753
    %773 = vmatpush1.msra.mxu0 %v752
    %774 = vmatprep.subr.mxu0 %v751
    %775 = vmatpush1.msra.mxu0 %v750
    %776 = vmatprep.subr.mxu0 %v749
    %777 = vmatpush1.msra.mxu0 %v748
    %778 = vmatprep.subr.mxu0 %v747
    %779 = vmatpush1.msra.mxu0 %v746
    %780 = vmatprep.subr.mxu0 %v745
    %781 = vmatpush1.msra.mxu0 %v744
    %782 = vmatprep.subr.mxu0 %v743
    %783 = vmatpush1.msra.mxu0 %v742
    %784 = vmatprep.subr.mxu0 %v741
    %785 = vmatpush1.msra.mxu0 %v740
    %786 = vmatprep.subr.mxu0 %v739
    %787 = vmatpush1.msra.mxu0 %v738
    %788 = vmatprep.subr.mxu0 %v737
    %789 = vmatpush1.msra.mxu0 %v736
    %790 = vmatprep.subr.mxu0 %v735
    %791 = vmatpush1.msra.mxu0 %v734
    %792 = vmatprep.subr.mxu0 %v733
    %793 = vmatpush1.msra.mxu0 %v732
    %794 = vmatprep.subr.mxu0 %v731
    %795 = vmatpush1.msra.mxu0 %v730
    %796 = vmatprep.subr.mxu0 0.0
    %797 = vmatpush2.msra.mxu0 0.0
    %798 = vmatprep.subr.mxu0 0.0
    %799 = vmatpush2.msra.mxu0 0.0
    %800 = vmatprep.subr.mxu0 0.0
    %801 = vmatpush2.msra.mxu0 0.0
    %802 = vmatprep.subr.mxu0 0.0
    %803 = vmatpush2.msra.mxu0 0.0
    %804 = vmatprep.subr.mxu0 0.0
    %805 = vmatpush2.msra.mxu0 0.0
    %806 = vmatprep.subr.mxu0 0.0
    %807 = vmatpush2.msra.mxu0 0.0
    %808 = vmatprep.subr.mxu0 0.0
    %809 = vmatpush2.msra.mxu0 0.0
    %810 = vmatprep.subr.mxu0 0.0
    %811 = vmatpush2.msra.mxu0 0.0
    %812 = vmatprep.subr.mxu0 0.0
    %813 = vmatpush2.msra.mxu0 0.0
    %814 = vmatprep.subr.mxu0 0.0
    %815 = vmatpush2.msra.mxu0 0.0
    %816 = vmatprep.subr.mxu0 0.0
    %817 = vmatpush2.msra.mxu0 0.0
    %818 = vmatprep.subr.mxu0 0.0
    %819 = vmatpush2.msra.mxu0 0.0
    %820 = vmatprep.subr.mxu0 0.0
    %821 = vmatpush2.msra.mxu0 0.0
    %822 = vmatprep.subr.mxu0 0.0
    %823 = vmatpush2.msra.mxu0 0.0
    %824 = vmatprep.subr.mxu0 0.0
    %825 = vmatpush2.msra.mxu0 0.0
    %826 = vmatprep.subr.mxu0 0.0
    %827 = vmatpush2.msra.mxu0 0.0
    %828 = vmatprep.mubr.f32.mxu0 0.0
    %829 = vmatmul.mubr.f32.gmra.mxu0 %v762
    %v830 = vpop.f32.mrf.mxu0
    %v831 = vadd.f32 0.0, %v830
    %v832 = vpop.f32.mrf.mxu0
    %v833 = vadd.f32 0.0, %v832
    %834 = vdwg.mxu0
    %v837 = vcombine.low %v831, %v833
    %v839 = vunpack.c.l.s4 1966171168
    %v840 = vunpack.c.0.s8 %v839
    %v841 = vlaneseq
    %v842 = vshrl.u32 %v841, 7
    %v843 = vsub.s32 %v840, %v842
    %v844 = vrot.slane %v837, %v843
    %v846 = vunpack.c.l.s4 1966171168
    %v847 = vunpack.c.0.s8 %v846
    %v848 = vlaneseq
    %v849 = vshrl.u32 %v848, 7
    %v850 = vsub.s32 %v847, %v849
    %v851 = vrot.slane %v844, %v850
    %v853 = vadd.f32 %v728, %v851
    %s854 = scalar_lea.vmem %s3, 1280
    %v855 = vld [vmem:[%s854] sm:$0xff]
    %v856 = vld [vmem:[%s854 + $0x8] sm:$0xff]
    %v857 = vld [vmem:[%s854 + $0x10] sm:$0xff]
    %v858 = vld [vmem:[%s854 + $0x18] sm:$0xff]
    %v859 = vld [vmem:[%s854 + $0x20] sm:$0xff]
    %v860 = vld [vmem:[%s854 + $0x28] sm:$0xff]
    %v861 = vld [vmem:[%s854 + $0x30] sm:$0xff]
    %v862 = vld [vmem:[%s854 + $0x38] sm:$0xff]
    %v863 = vld [vmem:[%s854 + $0x40] sm:$0xff]
    %v864 = vld [vmem:[%s854 + $0x48] sm:$0xff]
    %v865 = vld [vmem:[%s854 + $0x50] sm:$0xff]
    %v866 = vld [vmem:[%s854 + $0x58] sm:$0xff]
    %v867 = vld [vmem:[%s854 + $0x60] sm:$0xff]
    %v868 = vld [vmem:[%s854 + $0x68] sm:$0xff]
    %v869 = vld [vmem:[%s854 + $0x70] sm:$0xff]
    %v870 = vld [vmem:[%s854 + $0x78] sm:$0xff]
    %v871 = vld [vmem:[%s854 + $0x80] sm:$0xff]
    %v872 = vld [vmem:[%s854 + $0x88] sm:$0xff]
    %v873 = vld [vmem:[%s854 + $0x90] sm:$0xff]
    %v874 = vld [vmem:[%s854 + $0x98] sm:$0xff]
    %v875 = vld [vmem:[%s854 + $0xa0] sm:$0xff]
    %v876 = vld [vmem:[%s854 + $0xa8] sm:$0xff]
    %v877 = vld [vmem:[%s854 + $0xb0] sm:$0xff]
    %v878 = vld [vmem:[%s854 + $0xb8] sm:$0xff]
    %v879 = vld [vmem:[%s854 + $0xc0] sm:$0xff]
    %v880 = vld [vmem:[%s854 + $0xc8] sm:$0xff]
    %v881 = vld [vmem:[%s854 + $0xd0] sm:$0xff]
    %v882 = vld [vmem:[%s854 + $0xd8] sm:$0xff]
    %v883 = vld [vmem:[%s854 + $0xe0] sm:$0xff]
    %v884 = vld [vmem:[%s854 + $0xe8] sm:$0xff]
    %v885 = vld [vmem:[%s854 + $0xf0] sm:$0xff]
    %v886 = vld [vmem:[%s854 + $0xf8] sm:$0xff]
    %v887 = vrot.slane %v230, 5
    %889 = vmatprep.subr.mxu0 %v886
    %890 = vmatpush1.msra.mxu0 %v885
    %891 = vmatprep.subr.mxu0 %v884
    %892 = vmatpush1.msra.mxu0 %v883
    %893 = vmatprep.subr.mxu0 %v882
    %894 = vmatpush1.msra.mxu0 %v881
    %895 = vmatprep.subr.mxu0 %v880
    %896 = vmatpush1.msra.mxu0 %v879
    %897 = vmatprep.subr.mxu0 %v878
    %898 = vmatpush1.msra.mxu0 %v877
    %899 = vmatprep.subr.mxu0 %v876
    %900 = vmatpush1.msra.mxu0 %v875
    %901 = vmatprep.subr.mxu0 %v874
    %902 = vmatpush1.msra.mxu0 %v873
    %903 = vmatprep.subr.mxu0 %v872
    %904 = vmatpush1.msra.mxu0 %v871
    %905 = vmatprep.subr.mxu0 %v870
    %906 = vmatpush1.msra.mxu0 %v869
    %907 = vmatprep.subr.mxu0 %v868
    %908 = vmatpush1.msra.mxu0 %v867
    %909 = vmatprep.subr.mxu0 %v866
    %910 = vmatpush1.msra.mxu0 %v865
    %911 = vmatprep.subr.mxu0 %v864
    %912 = vmatpush1.msra.mxu0 %v863
    %913 = vmatprep.subr.mxu0 %v862
    %914 = vmatpush1.msra.mxu0 %v861
    %915 = vmatprep.subr.mxu0 %v860
    %916 = vmatpush1.msra.mxu0 %v859
    %917 = vmatprep.subr.mxu0 %v858
    %918 = vmatpush1.msra.mxu0 %v857
    %919 = vmatprep.subr.mxu0 %v856
    %920 = vmatpush1.msra.mxu0 %v855
    %921 = vmatprep.subr.mxu0 0.0
    %922 = vmatpush2.msra.mxu0 0.0
    %923 = vmatprep.subr.mxu0 0.0
    %924 = vmatpush2.msra.mxu0 0.0
    %925 = vmatprep.subr.mxu0 0.0
    %926 = vmatpush2.msra.mxu0 0.0
    %927 = vmatprep.subr.mxu0 0.0
    %928 = vmatpush2.msra.mxu0 0.0
    %929 = vmatprep.subr.mxu0 0.0
    %930 = vmatpush2.msra.mxu0 0.0
    %931 = vmatprep.subr.mxu0 0.0
    %932 = vmatpush2.msra.mxu0 0.0
    %933 = vmatprep.subr.mxu0 0.0
    %934 = vmatpush2.msra.mxu0 0.0
    %935 = vmatprep.subr.mxu0 0.0
    %936 = vmatpush2.msra.mxu0 0.0
    %937 = vmatprep.subr.mxu0 0.0
    %938 = vmatpush2.msra.mxu0 0.0
    %939 = vmatprep.subr.mxu0 0.0
    %940 = vmatpush2.msra.mxu0 0.0
    %941 = vmatprep.subr.mxu0 0.0
    %942 = vmatpush2.msra.mxu0 0.0
    %943 = vmatprep.subr.mxu0 0.0
    %944 = vmatpush2.msra.mxu0 0.0
    %945 = vmatprep.subr.mxu0 0.0
    %946 = vmatpush2.msra.mxu0 0.0
    %947 = vmatprep.subr.mxu0 0.0
    %948 = vmatpush2.msra.mxu0 0.0
    %949 = vmatprep.subr.mxu0 0.0
    %950 = vmatpush2.msra.mxu0 0.0
    %951 = vmatprep.subr.mxu0 0.0
    %952 = vmatpush2.msra.mxu0 0.0
    %953 = vmatprep.mubr.f32.mxu0 0.0
    %954 = vmatmul.mubr.f32.gmra.mxu0 %v887
    %v955 = vpop.f32.mrf.mxu0
    %v956 = vadd.f32 0.0, %v955
    %v957 = vpop.f32.mrf.mxu0
    %v958 = vadd.f32 0.0, %v957
    %959 = vdwg.mxu0
    %v962 = vcombine.low %v956, %v958
    %v964 = vunpack.c.l.s4 1966171168
    %v965 = vunpack.c.0.s8 %v964
    %v966 = vlaneseq
    %v967 = vshrl.u32 %v966, 7
    %v968 = vsub.s32 %v965, %v967
    %v969 = vrot.slane %v962, %v968
    %v971 = vunpack.c.l.s4 1966171168
    %v972 = vunpack.c.0.s8 %v971
    %v973 = vlaneseq
    %v974 = vshrl.u32 %v973, 7
    %v975 = vsub.s32 %v972, %v974
    %v976 = vrot.slane %v969, %v975
    %v978 = vadd.f32 %v853, %v976
    %s979 = scalar_lea.vmem %s3, 1536
    %v980 = vld [vmem:[%s979] sm:$0xff]
    %v981 = vld [vmem:[%s979 + $0x8] sm:$0xff]
    %v982 = vld [vmem:[%s979 + $0x10] sm:$0xff]
    %v983 = vld [vmem:[%s979 + $0x18] sm:$0xff]
    %v984 = vld [vmem:[%s979 + $0x20] sm:$0xff]
    %v985 = vld [vmem:[%s979 + $0x28] sm:$0xff]
    %v986 = vld [vmem:[%s979 + $0x30] sm:$0xff]
    %v987 = vld [vmem:[%s979 + $0x38] sm:$0xff]
    %v988 = vld [vmem:[%s979 + $0x40] sm:$0xff]
    %v989 = vld [vmem:[%s979 + $0x48] sm:$0xff]
    %v990 = vld [vmem:[%s979 + $0x50] sm:$0xff]
    %v991 = vld [vmem:[%s979 + $0x58] sm:$0xff]
    %v992 = vld [vmem:[%s979 + $0x60] sm:$0xff]
    %v993 = vld [vmem:[%s979 + $0x68] sm:$0xff]
    %v994 = vld [vmem:[%s979 + $0x70] sm:$0xff]
    %v995 = vld [vmem:[%s979 + $0x78] sm:$0xff]
    %v996 = vld [vmem:[%s979 + $0x80] sm:$0xff]
    %v997 = vld [vmem:[%s979 + $0x88] sm:$0xff]
    %v998 = vld [vmem:[%s979 + $0x90] sm:$0xff]
    %v999 = vld [vmem:[%s979 + $0x98] sm:$0xff]
    %v1000 = vld [vmem:[%s979 + $0xa0] sm:$0xff]
    %v1001 = vld [vmem:[%s979 + $0xa8] sm:$0xff]
    %v1002 = vld [vmem:[%s979 + $0xb0] sm:$0xff]
    %v1003 = vld [vmem:[%s979 + $0xb8] sm:$0xff]
    %v1004 = vld [vmem:[%s979 + $0xc0] sm:$0xff]
    %v1005 = vld [vmem:[%s979 + $0xc8] sm:$0xff]
    %v1006 = vld [vmem:[%s979 + $0xd0] sm:$0xff]
    %v1007 = vld [vmem:[%s979 + $0xd8] sm:$0xff]
    %v1008 = vld [vmem:[%s979 + $0xe0] sm:$0xff]
    %v1009 = vld [vmem:[%s979 + $0xe8] sm:$0xff]
    %v1010 = vld [vmem:[%s979 + $0xf0] sm:$0xff]
    %v1011 = vld [vmem:[%s979 + $0xf8] sm:$0xff]
    %v1012 = vrot.slane %v230, 6
    %1014 = vmatprep.subr.mxu0 %v1011
    %1015 = vmatpush1.msra.mxu0 %v1010
    %1016 = vmatprep.subr.mxu0 %v1009
    %1017 = vmatpush1.msra.mxu0 %v1008
    %1018 = vmatprep.subr.mxu0 %v1007
    %1019 = vmatpush1.msra.mxu0 %v1006
    %1020 = vmatprep.subr.mxu0 %v1005
    %1021 = vmatpush1.msra.mxu0 %v1004
    %1022 = vmatprep.subr.mxu0 %v1003
    %1023 = vmatpush1.msra.mxu0 %v1002
    %1024 = vmatprep.subr.mxu0 %v1001
    %1025 = vmatpush1.msra.mxu0 %v1000
    %1026 = vmatprep.subr.mxu0 %v999
    %1027 = vmatpush1.msra.mxu0 %v998
    %1028 = vmatprep.subr.mxu0 %v997
    %1029 = vmatpush1.msra.mxu0 %v996
    %1030 = vmatprep.subr.mxu0 %v995
    %1031 = vmatpush1.msra.mxu0 %v994
    %1032 = vmatprep.subr.mxu0 %v993
    %1033 = vmatpush1.msra.mxu0 %v992
    %1034 = vmatprep.subr.mxu0 %v991
    %1035 = vmatpush1.msra.mxu0 %v990
    %1036 = vmatprep.subr.mxu0 %v989
    %1037 = vmatpush1.msra.mxu0 %v988
    %1038 = vmatprep.subr.mxu0 %v987
    %1039 = vmatpush1.msra.mxu0 %v986
    %1040 = vmatprep.subr.mxu0 %v985
    %1041 = vmatpush1.msra.mxu0 %v984
    %1042 = vmatprep.subr.mxu0 %v983
    %1043 = vmatpush1.msra.mxu0 %v982
    %1044 = vmatprep.subr.mxu0 %v981
    %1045 = vmatpush1.msra.mxu0 %v980
    %1046 = vmatprep.subr.mxu0 0.0
    %1047 = vmatpush2.msra.mxu0 0.0
    %1048 = vmatprep.subr.mxu0 0.0
    %1049 = vmatpush2.msra.mxu0 0.0
    %1050 = vmatprep.subr.mxu0 0.0
    %1051 = vmatpush2.msra.mxu0 0.0
    %1052 = vmatprep.subr.mxu0 0.0
    %1053 = vmatpush2.msra.mxu0 0.0
    %1054 = vmatprep.subr.mxu0 0.0
    %1055 = vmatpush2.msra.mxu0 0.0
    %1056 = vmatprep.subr.mxu0 0.0
    %1057 = vmatpush2.msra.mxu0 0.0
    %1058 = vmatprep.subr.mxu0 0.0
    %1059 = vmatpush2.msra.mxu0 0.0
    %1060 = vmatprep.subr.mxu0 0.0
    %1061 = vmatpush2.msra.mxu0 0.0
    %1062 = vmatprep.subr.mxu0 0.0
    %1063 = vmatpush2.msra.mxu0 0.0
    %1064 = vmatprep.subr.mxu0 0.0
    %1065 = vmatpush2.msra.mxu0 0.0
    %1066 = vmatprep.subr.mxu0 0.0
    %1067 = vmatpush2.msra.mxu0 0.0
    %1068 = vmatprep.subr.mxu0 0.0
    %1069 = vmatpush2.msra.mxu0 0.0
    %1070 = vmatprep.subr.mxu0 0.0
    %1071 = vmatpush2.msra.mxu0 0.0
    %1072 = vmatprep.subr.mxu0 0.0
    %1073 = vmatpush2.msra.mxu0 0.0
    %1074 = vmatprep.subr.mxu0 0.0
    %1075 = vmatpush2.msra.mxu0 0.0
    %1076 = vmatprep.subr.mxu0 0.0
    %1077 = vmatpush2.msra.mxu0 0.0
    %1078 = vmatprep.mubr.f32.mxu0 0.0
    %1079 = vmatmul.mubr.f32.gmra.mxu0 %v1012
    %v1080 = vpop.f32.mrf.mxu0
    %v1081 = vadd.f32 0.0, %v1080
    %v1082 = vpop.f32.mrf.mxu0
    %v1083 = vadd.f32 0.0, %v1082
    %1084 = vdwg.mxu0
    %v1087 = vcombine.low %v1081, %v1083
    %v1089 = vunpack.c.l.s4 1966171168
    %v1090 = vunpack.c.0.s8 %v1089
    %v1091 = vlaneseq
    %v1092 = vshrl.u32 %v1091, 7
    %v1093 = vsub.s32 %v1090, %v1092
    %v1094 = vrot.slane %v1087, %v1093
    %v1096 = vunpack.c.l.s4 1966171168
    %v1097 = vunpack.c.0.s8 %v1096
    %v1098 = vlaneseq
    %v1099 = vshrl.u32 %v1098, 7
    %v1100 = vsub.s32 %v1097, %v1099
    %v1101 = vrot.slane %v1094, %v1100
    %v1103 = vadd.f32 %v978, %v1101
    %s1104 = scalar_lea.vmem %s3, 1792
    %v1105 = vld [vmem:[%s1104] sm:$0xff]
    %v1106 = vld [vmem:[%s1104 + $0x8] sm:$0xff]
    %v1107 = vld [vmem:[%s1104 + $0x10] sm:$0xff]
    %v1108 = vld [vmem:[%s1104 + $0x18] sm:$0xff]
    %v1109 = vld [vmem:[%s1104 + $0x20] sm:$0xff]
    %v1110 = vld [vmem:[%s1104 + $0x28] sm:$0xff]
    %v1111 = vld [vmem:[%s1104 + $0x30] sm:$0xff]
    %v1112 = vld [vmem:[%s1104 + $0x38] sm:$0xff]
    %v1113 = vld [vmem:[%s1104 + $0x40] sm:$0xff]
    %v1114 = vld [vmem:[%s1104 + $0x48] sm:$0xff]
    %v1115 = vld [vmem:[%s1104 + $0x50] sm:$0xff]
    %v1116 = vld [vmem:[%s1104 + $0x58] sm:$0xff]
    %v1117 = vld [vmem:[%s1104 + $0x60] sm:$0xff]
    %v1118 = vld [vmem:[%s1104 + $0x68] sm:$0xff]
    %v1119 = vld [vmem:[%s1104 + $0x70] sm:$0xff]
    %v1120 = vld [vmem:[%s1104 + $0x78] sm:$0xff]
    %v1121 = vld [vmem:[%s1104 + $0x80] sm:$0xff]
    %v1122 = vld [vmem:[%s1104 + $0x88] sm:$0xff]
    %v1123 = vld [vmem:[%s1104 + $0x90] sm:$0xff]
    %v1124 = vld [vmem:[%s1104 + $0x98] sm:$0xff]
    %v1125 = vld [vmem:[%s1104 + $0xa0] sm:$0xff]
    %v1126 = vld [vmem:[%s1104 + $0xa8] sm:$0xff]
    %v1127 = vld [vmem:[%s1104 + $0xb0] sm:$0xff]
    %v1128 = vld [vmem:[%s1104 + $0xb8] sm:$0xff]
    %v1129 = vld [vmem:[%s1104 + $0xc0] sm:$0xff]
    %v1130 = vld [vmem:[%s1104 + $0xc8] sm:$0xff]
    %v1131 = vld [vmem:[%s1104 + $0xd0] sm:$0xff]
    %v1132 = vld [vmem:[%s1104 + $0xd8] sm:$0xff]
    %v1133 = vld [vmem:[%s1104 + $0xe0] sm:$0xff]
    %v1134 = vld [vmem:[%s1104 + $0xe8] sm:$0xff]
    %v1135 = vld [vmem:[%s1104 + $0xf0] sm:$0xff]
    %v1136 = vld [vmem:[%s1104 + $0xf8] sm:$0xff]
    %v1137 = vrot.slane %v230, 7
    %1139 = vmatprep.subr.mxu0 %v1136
    %1140 = vmatpush1.msra.mxu0 %v1135
    %1141 = vmatprep.subr.mxu0 %v1134
    %1142 = vmatpush1.msra.mxu0 %v1133
    %1143 = vmatprep.subr.mxu0 %v1132
    %1144 = vmatpush1.msra.mxu0 %v1131
    %1145 = vmatprep.subr.mxu0 %v1130
    %1146 = vmatpush1.msra.mxu0 %v1129
    %1147 = vmatprep.subr.mxu0 %v1128
    %1148 = vmatpush1.msra.mxu0 %v1127
    %1149 = vmatprep.subr.mxu0 %v1126
    %1150 = vmatpush1.msra.mxu0 %v1125
    %1151 = vmatprep.subr.mxu0 %v1124
    %1152 = vmatpush1.msra.mxu0 %v1123
    %1153 = vmatprep.subr.mxu0 %v1122
    %1154 = vmatpush1.msra.mxu0 %v1121
    %1155 = vmatprep.subr.mxu0 %v1120
    %1156 = vmatpush1.msra.mxu0 %v1119
    %1157 = vmatprep.subr.mxu0 %v1118
    %1158 = vmatpush1.msra.mxu0 %v1117
    %1159 = vmatprep.subr.mxu0 %v1116
    %1160 = vmatpush1.msra.mxu0 %v1115
    %1161 = vmatprep.subr.mxu0 %v1114
    %1162 = vmatpush1.msra.mxu0 %v1113
    %1163 = vmatprep.subr.mxu0 %v1112
    %1164 = vmatpush1.msra.mxu0 %v1111
    %1165 = vmatprep.subr.mxu0 %v1110
    %1166 = vmatpush1.msra.mxu0 %v1109
    %1167 = vmatprep.subr.mxu0 %v1108
    %1168 = vmatpush1.msra.mxu0 %v1107
    %1169 = vmatprep.subr.mxu0 %v1106
    %1170 = vmatpush1.msra.mxu0 %v1105
    %1171 = vmatprep.subr.mxu0 0.0
    %1172 = vmatpush2.msra.mxu0 0.0
    %1173 = vmatprep.subr.mxu0 0.0
    %1174 = vmatpush2.msra.mxu0 0.0
    %1175 = vmatprep.subr.mxu0 0.0
    %1176 = vmatpush2.msra.mxu0 0.0
    %1177 = vmatprep.subr.mxu0 0.0
    %1178 = vmatpush2.msra.mxu0 0.0
    %1179 = vmatprep.subr.mxu0 0.0
    %1180 = vmatpush2.msra.mxu0 0.0
    %1181 = vmatprep.subr.mxu0 0.0
    %1182 = vmatpush2.msra.mxu0 0.0
    %1183 = vmatprep.subr.mxu0 0.0
    %1184 = vmatpush2.msra.mxu0 0.0
    %1185 = vmatprep.subr.mxu0 0.0
    %1186 = vmatpush2.msra.mxu0 0.0
    %1187 = vmatprep.subr.mxu0 0.0
    %1188 = vmatpush2.msra.mxu0 0.0
    %1189 = vmatprep.subr.mxu0 0.0
    %1190 = vmatpush2.msra.mxu0 0.0
    %1191 = vmatprep.subr.mxu0 0.0
    %1192 = vmatpush2.msra.mxu0 0.0
    %1193 = vmatprep.subr.mxu0 0.0
    %1194 = vmatpush2.msra.mxu0 0.0
    %1195 = vmatprep.subr.mxu0 0.0
    %1196 = vmatpush2.msra.mxu0 0.0
    %1197 = vmatprep.subr.mxu0 0.0
    %1198 = vmatpush2.msra.mxu0 0.0
    %1199 = vmatprep.subr.mxu0 0.0
    %1200 = vmatpush2.msra.mxu0 0.0
    %1201 = vmatprep.subr.mxu0 0.0
    %1202 = vmatpush2.msra.mxu0 0.0
    %1203 = vmatprep.mubr.f32.mxu0 0.0
    %1204 = vmatmul.mubr.f32.gmra.mxu0 %v1137
    %v1205 = vpop.f32.mrf.mxu0
    %v1206 = vadd.f32 0.0, %v1205
    %v1207 = vpop.f32.mrf.mxu0
    %v1208 = vadd.f32 0.0, %v1207
    %1209 = vdwg.mxu0
    %v1212 = vcombine.low %v1206, %v1208
    %v1214 = vunpack.c.l.s4 1966171168
    %v1215 = vunpack.c.0.s8 %v1214
    %v1216 = vlaneseq
    %v1217 = vshrl.u32 %v1216, 7
    %v1218 = vsub.s32 %v1215, %v1217
    %v1219 = vrot.slane %v1212, %v1218
    %v1221 = vunpack.c.l.s4 1966171168
    %v1222 = vunpack.c.0.s8 %v1221
    %v1223 = vlaneseq
    %v1224 = vshrl.u32 %v1223, 7
    %v1225 = vsub.s32 %v1222, %v1224
    %v1226 = vrot.slane %v1219, %v1225
    %v1228 = vadd.f32 %v1103, %v1226
    %v1229 = vadd.f32 %v1228, 0.0
    %vm1230 = vcmp.gt.f32.partialorder %v1229, 0.5
    %v1231 = vsel %vm1230, 1, 0
    %v1232 = vcvt.s32.f32 %v1231
    %v1233 = vadd.f32 %v1232, 0.0
    %s1234 = scalar_lea.vmem %s0, 160
    %v1235 = vld [vmem:[%s1234] sm:$0xff]
    %v1236 = vld [vmem:[%s1234 + $0x8] sm:$0xff]
    %v1237 = vld [vmem:[%s1234 + $0x10] sm:$0xff]
    %v1238 = vld [vmem:[%s1234 + $0x18] sm:$0xff]
    %v1239 = vld [vmem:[%s1234 + $0x20] sm:$0xff]
    %v1240 = vld [vmem:[%s1234 + $0x28] sm:$0xff]
    %v1241 = vld [vmem:[%s1234 + $0x30] sm:$0xff]
    %v1242 = vld [vmem:[%s1234 + $0x38] sm:$0xff]
    %v1243 = vld [vmem:[%s1234 + $0x40] sm:$0xff]
    %v1244 = vld [vmem:[%s1234 + $0x48] sm:$0xff]
    %v1245 = vld [vmem:[%s1234 + $0x50] sm:$0xff]
    %v1246 = vld [vmem:[%s1234 + $0x58] sm:$0xff]
    %v1247 = vld [vmem:[%s1234 + $0x60] sm:$0xff]
    %v1248 = vld [vmem:[%s1234 + $0x68] sm:$0xff]
    %v1249 = vld [vmem:[%s1234 + $0x70] sm:$0xff]
    %v1250 = vld [vmem:[%s1234 + $0x78] sm:$0xff]
    %v1251 = vld [vmem:[%s1234 + $0x80] sm:$0xf]
    %v1252 = vld [vmem:[%s1234 + $0x88] sm:$0xf]
    %v1253 = vld [vmem:[%s1234 + $0x90] sm:$0xf]
    %v1254 = vld [vmem:[%s1234 + $0x98] sm:$0xf]
    %v1256 = vsel %vm56, %v1251, 0
    %v1259 = vsel %vm56, %v1252, 0
    %v1262 = vsel %vm56, %v1253, 0
    %v1265 = vsel %vm56, %v1254, 0
    %1267 = vmatprep.subr.mxu0 0.0
    %1268 = vmatpush1.msra.mxu0 0.0
    %1269 = vmatprep.subr.mxu0 0.0
    %1270 = vmatpush1.msra.mxu0 0.0
    %1271 = vmatprep.subr.mxu0 0.0
    %1272 = vmatpush1.msra.mxu0 0.0
    %1273 = vmatprep.subr.mxu0 0.0
    %1274 = vmatpush1.msra.mxu0 0.0
    %1275 = vmatprep.subr.mxu0 0.0
    %1276 = vmatpush1.msra.mxu0 0.0
    %1277 = vmatprep.subr.mxu0 0.0
    %1278 = vmatpush1.msra.mxu0 0.0
    %1279 = vmatprep.subr.mxu0 0.0
    %1280 = vmatpush1.msra.mxu0 0.0
    %1281 = vmatprep.subr.mxu0 0.0
    %1282 = vmatpush1.msra.mxu0 0.0
    %1283 = vmatprep.subr.mxu0 0.0
    %1284 = vmatpush1.msra.mxu0 0.0
    %1285 = vmatprep.subr.mxu0 0.0
    %1286 = vmatpush1.msra.mxu0 0.0
    %1287 = vmatprep.subr.mxu0 0.0
    %1288 = vmatpush1.msra.mxu0 0.0
    %1289 = vmatprep.subr.mxu0 %v1259
    %1290 = vmatpush1.msra.mxu0 %v1256
    %1291 = vmatprep.subr.mxu0 %v1248
    %1292 = vmatpush1.msra.mxu0 %v1247
    %1293 = vmatprep.subr.mxu0 %v1244
    %1294 = vmatpush1.msra.mxu0 %v1243
    %1295 = vmatprep.subr.mxu0 %v1240
    %1296 = vmatpush1.msra.mxu0 %v1239
    %1297 = vmatprep.subr.mxu0 %v1236
    %1298 = vmatpush1.msra.mxu0 %v1235
    %1299 = vmatprep.subr.mxu0 0.0
    %1300 = vmatpush2.msra.mxu0 0.0
    %1301 = vmatprep.subr.mxu0 0.0
    %1302 = vmatpush2.msra.mxu0 0.0
    %1303 = vmatprep.subr.mxu0 0.0
    %1304 = vmatpush2.msra.mxu0 0.0
    %1305 = vmatprep.subr.mxu0 0.0
    %1306 = vmatpush2.msra.mxu0 0.0
    %1307 = vmatprep.subr.mxu0 0.0
    %1308 = vmatpush2.msra.mxu0 0.0
    %1309 = vmatprep.subr.mxu0 0.0
    %1310 = vmatpush2.msra.mxu0 0.0
    %1311 = vmatprep.subr.mxu0 0.0
    %1312 = vmatpush2.msra.mxu0 0.0
    %1313 = vmatprep.subr.mxu0 0.0
    %1314 = vmatpush2.msra.mxu0 0.0
    %1315 = vmatprep.subr.mxu0 0.0
    %1316 = vmatpush2.msra.mxu0 0.0
    %1317 = vmatprep.subr.mxu0 0.0
    %1318 = vmatpush2.msra.mxu0 0.0
    %1319 = vmatprep.subr.mxu0 0.0
    %1320 = vmatpush2.msra.mxu0 0.0
    %1321 = vmatprep.subr.mxu0 0.0
    %1322 = vmatpush2.msra.mxu0 0.0
    %1323 = vmatprep.subr.mxu0 0.0
    %1324 = vmatpush2.msra.mxu0 0.0
    %1325 = vmatprep.subr.mxu0 0.0
    %1326 = vmatpush2.msra.mxu0 0.0
    %1327 = vmatprep.subr.mxu0 0.0
    %1328 = vmatpush2.msra.mxu0 0.0
    %1329 = vmatprep.subr.mxu0 0.0
    %1330 = vmatpush2.msra.mxu0 0.0
    %1331 = vmatprep.mubr.f32.mxu0 0.0
    %1332 = vmatmul.mubr.f32.gmra.mxu0 %v54
    %v1333 = vpop.f32.mrf.mxu0
    %v1334 = vadd.f32 %v29, %v1333
    %v1335 = vpop.f32.mrf.mxu0
    %v1336 = vadd.f32 %v29, %v1335
    %1337 = vdwg.mxu0
    %1338 = vmatprep.subr.mxu0 0.0
    %1339 = vmatpush1.msra.mxu0 0.0
    %1340 = vmatprep.subr.mxu0 0.0
    %1341 = vmatpush1.msra.mxu0 0.0
    %1342 = vmatprep.subr.mxu0 0.0
    %1343 = vmatpush1.msra.mxu0 0.0
    %1344 = vmatprep.subr.mxu0 0.0
    %1345 = vmatpush1.msra.mxu0 0.0
    %1346 = vmatprep.subr.mxu0 0.0
    %1347 = vmatpush1.msra.mxu0 0.0
    %1348 = vmatprep.subr.mxu0 0.0
    %1349 = vmatpush1.msra.mxu0 0.0
    %1350 = vmatprep.subr.mxu0 0.0
    %1351 = vmatpush1.msra.mxu0 0.0
    %1352 = vmatprep.subr.mxu0 0.0
    %1353 = vmatpush1.msra.mxu0 0.0
    %1354 = vmatprep.subr.mxu0 0.0
    %1355 = vmatpush1.msra.mxu0 0.0
    %1356 = vmatprep.subr.mxu0 0.0
    %1357 = vmatpush1.msra.mxu0 0.0
    %1358 = vmatprep.subr.mxu0 0.0
    %1359 = vmatpush1.msra.mxu0 0.0
    %1360 = vmatprep.subr.mxu0 %v1265
    %1361 = vmatpush1.msra.mxu0 %v1262
    %1362 = vmatprep.subr.mxu0 %v1250
    %1363 = vmatpush1.msra.mxu0 %v1249
    %1364 = vmatprep.subr.mxu0 %v1246
    %1365 = vmatpush1.msra.mxu0 %v1245
    %1366 = vmatprep.subr.mxu0 %v1242
    %1367 = vmatpush1.msra.mxu0 %v1241
    %1368 = vmatprep.subr.mxu0 %v1238
    %1369 = vmatpush1.msra.mxu0 %v1237
    %1370 = vmatprep.subr.mxu0 0.0
    %1371 = vmatpush2.msra.mxu0 0.0
    %1372 = vmatprep.subr.mxu0 0.0
    %1373 = vmatpush2.msra.mxu0 0.0
    %1374 = vmatprep.subr.mxu0 0.0
    %1375 = vmatpush2.msra.mxu0 0.0
    %1376 = vmatprep.subr.mxu0 0.0
    %1377 = vmatpush2.msra.mxu0 0.0
    %1378 = vmatprep.subr.mxu0 0.0
    %1379 = vmatpush2.msra.mxu0 0.0
    %1380 = vmatprep.subr.mxu0 0.0
    %1381 = vmatpush2.msra.mxu0 0.0
    %1382 = vmatprep.subr.mxu0 0.0
    %1383 = vmatpush2.msra.mxu0 0.0
    %1384 = vmatprep.subr.mxu0 0.0
    %1385 = vmatpush2.msra.mxu0 0.0
    %1386 = vmatprep.subr.mxu0 0.0
    %1387 = vmatpush2.msra.mxu0 0.0
    %1388 = vmatprep.subr.mxu0 0.0
    %1389 = vmatpush2.msra.mxu0 0.0
    %1390 = vmatprep.subr.mxu0 0.0
    %1391 = vmatpush2.msra.mxu0 0.0
    %1392 = vmatprep.subr.mxu0 0.0
    %1393 = vmatpush2.msra.mxu0 0.0
    %1394 = vmatprep.subr.mxu0 0.0
    %1395 = vmatpush2.msra.mxu0 0.0
    %1396 = vmatprep.subr.mxu0 0.0
    %1397 = vmatpush2.msra.mxu0 0.0
    %1398 = vmatprep.subr.mxu0 0.0
    %1399 = vmatpush2.msra.mxu0 0.0
    %1400 = vmatprep.subr.mxu0 0.0
    %1401 = vmatpush2.msra.mxu0 0.0
    %1402 = vmatprep.mubr.f32.mxu0 0.0
    %1403 = vmatmul.mubr.f32.gmra.mxu0 %v54
    %v1404 = vpop.f32.mrf.mxu0
    %v1405 = vadd.f32 %v29, %v1404
    %v1406 = vpop.f32.mrf.mxu0
    %v1407 = vadd.f32 %v29, %v1406
    %1408 = vdwg.mxu0
    %v1409 = vmul.f32 %v211, 0.2
    %v1410 = vmul.f32 %v212, 0.2
    %v1411 = vmul.f32 %v213, 0.2
    %v1412 = vmul.f32 %v214, 0.2
    %v1413 = vsub.f32 1.0, %v223
    %v1414 = vsub.f32 1.0, %v224
    %v1415 = vsub.f32 1.0, %v225
    %v1416 = vsub.f32 1.0, %v226
    %v1417 = vmul.f32 %v1409, %v1413
    %v1418 = vmul.f32 %v1410, %v1414
    %v1419 = vmul.f32 %v1411, %v1415
    %v1420 = vmul.f32 %v1412, %v1416
    %v1421 = vadd.f32 %v1417, %v1334
    %v1422 = vadd.f32 %v1418, %v1336
    %v1423 = vadd.f32 %v1419, %v1405
    %v1424 = vadd.f32 %v1420, %v1407
    %vm1425 = vcmp.gt.f32.partialorder %v1421, 0.5
    %vm1426 = vcmp.gt.f32.partialorder %v1422, 0.5
    %vm1427 = vcmp.gt.f32.partialorder %v1423, 0.5
    %vm1428 = vcmp.gt.f32.partialorder %v1424, 0.5
    %v1429 = vsel %vm1425, 1, 0
    %v1430 = vsel %vm1426, 1, 0
    %v1431 = vsel %vm1427, 1, 0
    %v1432 = vsel %vm1428, 1, 0
    %v1433 = vcvt.s32.f32 %v1429
    %v1434 = vcvt.s32.f32 %v1430
    %v1435 = vcvt.s32.f32 %v1431
    %v1436 = vcvt.s32.f32 %v1432
    %v1437 = vadd.f32 %v1433, %v1434
    %v1438 = vadd.f32 %v1437, %v1435
    %v1439 = vadd.f32 %v1438, %v1436
    %v1440 = vmul.f32 %v1439, 0.25
    %1441 = vmatprep.subr.mxu0 %v262
    %1442 = vmatpush1.msra.mxu0 %v261
    %1443 = vmatprep.subr.mxu0 %v260
    %1444 = vmatpush1.msra.mxu0 %v259
    %1445 = vmatprep.subr.mxu0 %v258
    %1446 = vmatpush1.msra.mxu0 %v257
    %1447 = vmatprep.subr.mxu0 %v256
    %1448 = vmatpush1.msra.mxu0 %v255
    %1449 = vmatprep.subr.mxu0 %v254
    %1450 = vmatpush1.msra.mxu0 %v253
    %1451 = vmatprep.subr.mxu0 %v252
    %1452 = vmatpush1.msra.mxu0 %v251
    %1453 = vmatprep.subr.mxu0 %v250
    %1454 = vmatpush1.msra.mxu0 %v249
    %1455 = vmatprep.subr.mxu0 %v248
    %1456 = vmatpush1.msra.mxu0 %v247
    %1457 = vmatprep.subr.mxu0 %v246
    %1458 = vmatpush1.msra.mxu0 %v245
    %1459 = vmatprep.subr.mxu0 %v244
    %1460 = vmatpush1.msra.mxu0 %v243
    %1461 = vmatprep.subr.mxu0 %v242
    %1462 = vmatpush1.msra.mxu0 %v241
    %1463 = vmatprep.subr.mxu0 %v240
    %1464 = vmatpush1.msra.mxu0 %v239
    %1465 = vmatprep.subr.mxu0 %v238
    %1466 = vmatpush1.msra.mxu0 %v237
    %1467 = vmatprep.subr.mxu0 %v236
    %1468 = vmatpush1.msra.mxu0 %v235
    %1469 = vmatprep.subr.mxu0 %v234
    %1470 = vmatpush1.msra.mxu0 %v233
    %1471 = vmatprep.subr.mxu0 %v232
    %1472 = vmatpush1.msra.mxu0 %v231
    %1473 = vmatprep.subr.mxu0 0.0
    %1474 = vmatpush2.msra.mxu0 0.0
    %1475 = vmatprep.subr.mxu0 0.0
    %1476 = vmatpush2.msra.mxu0 0.0
    %1477 = vmatprep.subr.mxu0 0.0
    %1478 = vmatpush2.msra.mxu0 0.0
    %1479 = vmatprep.subr.mxu0 0.0
    %1480 = vmatpush2.msra.mxu0 0.0
    %1481 = vmatprep.subr.mxu0 0.0
    %1482 = vmatpush2.msra.mxu0 0.0
    %1483 = vmatprep.subr.mxu0 0.0
    %1484 = vmatpush2.msra.mxu0 0.0
    %1485 = vmatprep.subr.mxu0 0.0
    %1486 = vmatpush2.msra.mxu0 0.0
    %1487 = vmatprep.subr.mxu0 0.0
    %1488 = vmatpush2.msra.mxu0 0.0
    %1489 = vmatprep.subr.mxu0 0.0
    %1490 = vmatpush2.msra.mxu0 0.0
    %1491 = vmatprep.subr.mxu0 0.0
    %1492 = vmatpush2.msra.mxu0 0.0
    %1493 = vmatprep.subr.mxu0 0.0
    %1494 = vmatpush2.msra.mxu0 0.0
    %1495 = vmatprep.subr.mxu0 0.0
    %1496 = vmatpush2.msra.mxu0 0.0
    %1497 = vmatprep.subr.mxu0 0.0
    %1498 = vmatpush2.msra.mxu0 0.0
    %1499 = vmatprep.subr.mxu0 0.0
    %1500 = vmatpush2.msra.mxu0 0.0
    %1501 = vmatprep.subr.mxu0 0.0
    %1502 = vmatpush2.msra.mxu0 0.0
    %1503 = vmatprep.subr.mxu0 0.0
    %1504 = vmatpush2.msra.mxu0 0.0
    %1505 = vmatprep.mubr.f32.mxu0 0.0
    %1506 = vmatmul.mubr.f32.gmra.mxu0 %v1440
    %v1507 = vpop.f32.mrf.mxu0
    %v1508 = vadd.f32 0.0, %v1507
    %v1509 = vpop.f32.mrf.mxu0
    %v1510 = vadd.f32 0.0, %v1509
    %1511 = vdwg.mxu0
    %v1514 = vcombine.low %v1508, %v1510
    %v1516 = vunpack.c.l.s4 1966171168
    %v1517 = vunpack.c.0.s8 %v1516
    %v1518 = vlaneseq
    %v1519 = vshrl.u32 %v1518, 7
    %v1520 = vsub.s32 %v1517, %v1519
    %v1521 = vrot.slane %v1514, %v1520
    %v1523 = vunpack.c.l.s4 1966171168
    %v1524 = vunpack.c.0.s8 %v1523
    %v1525 = vlaneseq
    %v1526 = vshrl.u32 %v1525, 7
    %v1527 = vsub.s32 %v1524, %v1526
    %v1528 = vrot.slane %v1521, %v1527
    %v1530 = vadd.f32 %v31, %v1528
    %v1532 = vrot.slane %v1440, 1
    %1534 = vmatprep.subr.mxu0 %v385
    %1535 = vmatpush1.msra.mxu0 %v384
    %1536 = vmatprep.subr.mxu0 %v383
    %1537 = vmatpush1.msra.mxu0 %v382
    %1538 = vmatprep.subr.mxu0 %v381
    %1539 = vmatpush1.msra.mxu0 %v380
    %1540 = vmatprep.subr.mxu0 %v379
    %1541 = vmatpush1.msra.mxu0 %v378
    %1542 = vmatprep.subr.mxu0 %v377
    %1543 = vmatpush1.msra.mxu0 %v376
    %1544 = vmatprep.subr.mxu0 %v375
    %1545 = vmatpush1.msra.mxu0 %v374
    %1546 = vmatprep.subr.mxu0 %v373
    %1547 = vmatpush1.msra.mxu0 %v372
    %1548 = vmatprep.subr.mxu0 %v371
    %1549 = vmatpush1.msra.mxu0 %v370
    %1550 = vmatprep.subr.mxu0 %v369
    %1551 = vmatpush1.msra.mxu0 %v368
    %1552 = vmatprep.subr.mxu0 %v367
    %1553 = vmatpush1.msra.mxu0 %v366
    %1554 = vmatprep.subr.mxu0 %v365
    %1555 = vmatpush1.msra.mxu0 %v364
    %1556 = vmatprep.subr.mxu0 %v363
    %1557 = vmatpush1.msra.mxu0 %v362
    %1558 = vmatprep.subr.mxu0 %v361
    %1559 = vmatpush1.msra.mxu0 %v360
    %1560 = vmatprep.subr.mxu0 %v359
    %1561 = vmatpush1.msra.mxu0 %v358
    %1562 = vmatprep.subr.mxu0 %v357
    %1563 = vmatpush1.msra.mxu0 %v356
    %1564 = vmatprep.subr.mxu0 %v355
    %1565 = vmatpush1.msra.mxu0 %v354
    %1566 = vmatprep.subr.mxu0 0.0
    %1567 = vmatpush2.msra.mxu0 0.0
    %1568 = vmatprep.subr.mxu0 0.0
    %1569 = vmatpush2.msra.mxu0 0.0
    %1570 = vmatprep.subr.mxu0 0.0
    %1571 = vmatpush2.msra.mxu0 0.0
    %1572 = vmatprep.subr.mxu0 0.0
    %1573 = vmatpush2.msra.mxu0 0.0
    %1574 = vmatprep.subr.mxu0 0.0
    %1575 = vmatpush2.msra.mxu0 0.0
    %1576 = vmatprep.subr.mxu0 0.0
    %1577 = vmatpush2.msra.mxu0 0.0
    %1578 = vmatprep.subr.mxu0 0.0
    %1579 = vmatpush2.msra.mxu0 0.0
    %1580 = vmatprep.subr.mxu0 0.0
    %1581 = vmatpush2.msra.mxu0 0.0
    %1582 = vmatprep.subr.mxu0 0.0
    %1583 = vmatpush2.msra.mxu0 0.0
    %1584 = vmatprep.subr.mxu0 0.0
    %1585 = vmatpush2.msra.mxu0 0.0
    %1586 = vmatprep.subr.mxu0 0.0
    %1587 = vmatpush2.msra.mxu0 0.0
    %1588 = vmatprep.subr.mxu0 0.0
    %1589 = vmatpush2.msra.mxu0 0.0
    %1590 = vmatprep.subr.mxu0 0.0
    %1591 = vmatpush2.msra.mxu0 0.0
    %1592 = vmatprep.subr.mxu0 0.0
    %1593 = vmatpush2.msra.mxu0 0.0
    %1594 = vmatprep.subr.mxu0 0.0
    %1595 = vmatpush2.msra.mxu0 0.0
    %1596 = vmatprep.subr.mxu0 0.0
    %1597 = vmatpush2.msra.mxu0 0.0
    %1598 = vmatprep.mubr.f32.mxu0 0.0
    %1599 = vmatmul.mubr.f32.gmra.mxu0 %v1532
    %v1600 = vpop.f32.mrf.mxu0
    %v1601 = vadd.f32 0.0, %v1600
    %v1602 = vpop.f32.mrf.mxu0
    %v1603 = vadd.f32 0.0, %v1602
    %1604 = vdwg.mxu0
    %v1607 = vcombine.low %v1601, %v1603
    %v1609 = vunpack.c.l.s4 1966171168
    %v1610 = vunpack.c.0.s8 %v1609
    %v1611 = vlaneseq
    %v1612 = vshrl.u32 %v1611, 7
    %v1613 = vsub.s32 %v1610, %v1612
    %v1614 = vrot.slane %v1607, %v1613
    %v1616 = vunpack.c.l.s4 1966171168
    %v1617 = vunpack.c.0.s8 %v1616
    %v1618 = vlaneseq
    %v1619 = vshrl.u32 %v1618, 7
    %v1620 = vsub.s32 %v1617, %v1619
    %v1621 = vrot.slane %v1614, %v1620
    %v1623 = vadd.f32 %v1530, %v1621
    %v1624 = vrot.slane %v1440, 2
    %1626 = vmatprep.subr.mxu0 %v511
    %1627 = vmatpush1.msra.mxu0 %v510
    %1628 = vmatprep.subr.mxu0 %v509
    %1629 = vmatpush1.msra.mxu0 %v508
    %1630 = vmatprep.subr.mxu0 %v507
    %1631 = vmatpush1.msra.mxu0 %v506
    %1632 = vmatprep.subr.mxu0 %v505
    %1633 = vmatpush1.msra.mxu0 %v504
    %1634 = vmatprep.subr.mxu0 %v503
    %1635 = vmatpush1.msra.mxu0 %v502
    %1636 = vmatprep.subr.mxu0 %v501
    %1637 = vmatpush1.msra.mxu0 %v500
    %1638 = vmatprep.subr.mxu0 %v499
    %1639 = vmatpush1.msra.mxu0 %v498
    %1640 = vmatprep.subr.mxu0 %v497
    %1641 = vmatpush1.msra.mxu0 %v496
    %1642 = vmatprep.subr.mxu0 %v495
    %1643 = vmatpush1.msra.mxu0 %v494
    %1644 = vmatprep.subr.mxu0 %v493
    %1645 = vmatpush1.msra.mxu0 %v492
    %1646 = vmatprep.subr.mxu0 %v491
    %1647 = vmatpush1.msra.mxu0 %v490
    %1648 = vmatprep.subr.mxu0 %v489
    %1649 = vmatpush1.msra.mxu0 %v488
    %1650 = vmatprep.subr.mxu0 %v487
    %1651 = vmatpush1.msra.mxu0 %v486
    %1652 = vmatprep.subr.mxu0 %v485
    %1653 = vmatpush1.msra.mxu0 %v484
    %1654 = vmatprep.subr.mxu0 %v483
    %1655 = vmatpush1.msra.mxu0 %v482
    %1656 = vmatprep.subr.mxu0 %v481
    %1657 = vmatpush1.msra.mxu0 %v480
    %1658 = vmatprep.subr.mxu0 0.0
    %1659 = vmatpush2.msra.mxu0 0.0
    %1660 = vmatprep.subr.mxu0 0.0
    %1661 = vmatpush2.msra.mxu0 0.0
    %1662 = vmatprep.subr.mxu0 0.0
    %1663 = vmatpush2.msra.mxu0 0.0
    %1664 = vmatprep.subr.mxu0 0.0
    %1665 = vmatpush2.msra.mxu0 0.0
    %1666 = vmatprep.subr.mxu0 0.0
    %1667 = vmatpush2.msra.mxu0 0.0
    %1668 = vmatprep.subr.mxu0 0.0
    %1669 = vmatpush2.msra.mxu0 0.0
    %1670 = vmatprep.subr.mxu0 0.0
    %1671 = vmatpush2.msra.mxu0 0.0
    %1672 = vmatprep.subr.mxu0 0.0
    %1673 = vmatpush2.msra.mxu0 0.0
    %1674 = vmatprep.subr.mxu0 0.0
    %1675 = vmatpush2.msra.mxu0 0.0
    %1676 = vmatprep.subr.mxu0 0.0
    %1677 = vmatpush2.msra.mxu0 0.0
    %1678 = vmatprep.subr.mxu0 0.0
    %1679 = vmatpush2.msra.mxu0 0.0
    %1680 = vmatprep.subr.mxu0 0.0
    %1681 = vmatpush2.msra.mxu0 0.0
    %1682 = vmatprep.subr.mxu0 0.0
    %1683 = vmatpush2.msra.mxu0 0.0
    %1684 = vmatprep.subr.mxu0 0.0
    %1685 = vmatpush2.msra.mxu0 0.0
    %1686 = vmatprep.subr.mxu0 0.0
    %1687 = vmatpush2.msra.mxu0 0.0
    %1688 = vmatprep.subr.mxu0 0.0
    %1689 = vmatpush2.msra.mxu0 0.0
    %1690 = vmatprep.mubr.f32.mxu0 0.0
    %1691 = vmatmul.mubr.f32.gmra.mxu0 %v1624
    %v1692 = vpop.f32.mrf.mxu0
    %v1693 = vadd.f32 0.0, %v1692
    %v1694 = vpop.f32.mrf.mxu0
    %v1695 = vadd.f32 0.0, %v1694
    %1696 = vdwg.mxu0
    %v1699 = vcombine.low %v1693, %v1695
    %v1701 = vunpack.c.l.s4 1966171168
    %v1702 = vunpack.c.0.s8 %v1701
    %v1703 = vlaneseq
    %v1704 = vshrl.u32 %v1703, 7
    %v1705 = vsub.s32 %v1702, %v1704
    %v1706 = vrot.slane %v1699, %v1705
    %v1708 = vunpack.c.l.s4 1966171168
    %v1709 = vunpack.c.0.s8 %v1708
    %v1710 = vlaneseq
    %v1711 = vshrl.u32 %v1710, 7
    %v1712 = vsub.s32 %v1709, %v1711
    %v1713 = vrot.slane %v1706, %v1712
    %v1715 = vadd.f32 %v1623, %v1713
    %v1716 = vrot.slane %v1440, 3
    %1718 = vmatprep.subr.mxu0 %v636
    %1719 = vmatpush1.msra.mxu0 %v635
    %1720 = vmatprep.subr.mxu0 %v634
    %1721 = vmatpush1.msra.mxu0 %v633
    %1722 = vmatprep.subr.mxu0 %v632
    %1723 = vmatpush1.msra.mxu0 %v631
    %1724 = vmatprep.subr.mxu0 %v630
    %1725 = vmatpush1.msra.mxu0 %v629
    %1726 = vmatprep.subr.mxu0 %v628
    %1727 = vmatpush1.msra.mxu0 %v627
    %1728 = vmatprep.subr.mxu0 %v626
    %1729 = vmatpush1.msra.mxu0 %v625
    %1730 = vmatprep.subr.mxu0 %v624
    %1731 = vmatpush1.msra.mxu0 %v623
    %1732 = vmatprep.subr.mxu0 %v622
    %1733 = vmatpush1.msra.mxu0 %v621
    %1734 = vmatprep.subr.mxu0 %v620
    %1735 = vmatpush1.msra.mxu0 %v619
    %1736 = vmatprep.subr.mxu0 %v618
    %1737 = vmatpush1.msra.mxu0 %v617
    %1738 = vmatprep.subr.mxu0 %v616
    %1739 = vmatpush1.msra.mxu0 %v615
    %1740 = vmatprep.subr.mxu0 %v614
    %1741 = vmatpush1.msra.mxu0 %v613
    %1742 = vmatprep.subr.mxu0 %v612
    %1743 = vmatpush1.msra.mxu0 %v611
    %1744 = vmatprep.subr.mxu0 %v610
    %1745 = vmatpush1.msra.mxu0 %v609
    %1746 = vmatprep.subr.mxu0 %v608
    %1747 = vmatpush1.msra.mxu0 %v607
    %1748 = vmatprep.subr.mxu0 %v606
    %1749 = vmatpush1.msra.mxu0 %v605
    %1750 = vmatprep.subr.mxu0 0.0
    %1751 = vmatpush2.msra.mxu0 0.0
    %1752 = vmatprep.subr.mxu0 0.0
    %1753 = vmatpush2.msra.mxu0 0.0
    %1754 = vmatprep.subr.mxu0 0.0
    %1755 = vmatpush2.msra.mxu0 0.0
    %1756 = vmatprep.subr.mxu0 0.0
    %1757 = vmatpush2.msra.mxu0 0.0
    %1758 = vmatprep.subr.mxu0 0.0
    %1759 = vmatpush2.msra.mxu0 0.0
    %1760 = vmatprep.subr.mxu0 0.0
    %1761 = vmatpush2.msra.mxu0 0.0
    %1762 = vmatprep.subr.mxu0 0.0
    %1763 = vmatpush2.msra.mxu0 0.0
    %1764 = vmatprep.subr.mxu0 0.0
    %1765 = vmatpush2.msra.mxu0 0.0
    %1766 = vmatprep.subr.mxu0 0.0
    %1767 = vmatpush2.msra.mxu0 0.0
    %1768 = vmatprep.subr.mxu0 0.0
    %1769 = vmatpush2.msra.mxu0 0.0
    %1770 = vmatprep.subr.mxu0 0.0
    %1771 = vmatpush2.msra.mxu0 0.0
    %1772 = vmatprep.subr.mxu0 0.0
    %1773 = vmatpush2.msra.mxu0 0.0
    %1774 = vmatprep.subr.mxu0 0.0
    %1775 = vmatpush2.msra.mxu0 0.0
    %1776 = vmatprep.subr.mxu0 0.0
    %1777 = vmatpush2.msra.mxu0 0.0
    %1778 = vmatprep.subr.mxu0 0.0
    %1779 = vmatpush2.msra.mxu0 0.0
    %1780 = vmatprep.subr.mxu0 0.0
    %1781 = vmatpush2.msra.mxu0 0.0
    %1782 = vmatprep.mubr.f32.mxu0 0.0
    %1783 = vmatmul.mubr.f32.gmra.mxu0 %v1716
    %v1784 = vpop.f32.mrf.mxu0
    %v1785 = vadd.f32 0.0, %v1784
    %v1786 = vpop.f32.mrf.mxu0
    %v1787 = vadd.f32 0.0, %v1786
    %1788 = vdwg.mxu0
    %v1791 = vcombine.low %v1785, %v1787
    %v1793 = vunpack.c.l.s4 1966171168
    %v1794 = vunpack.c.0.s8 %v1793
    %v1795 = vlaneseq
    %v1796 = vshrl.u32 %v1795, 7
    %v1797 = vsub.s32 %v1794, %v1796
    %v1798 = vrot.slane %v1791, %v1797
    %v1800 = vunpack.c.l.s4 1966171168
    %v1801 = vunpack.c.0.s8 %v1800
    %v1802 = vlaneseq
    %v1803 = vshrl.u32 %v1802, 7
    %v1804 = vsub.s32 %v1801, %v1803
    %v1805 = vrot.slane %v1798, %v1804
    %v1807 = vadd.f32 %v1715, %v1805
    %v1808 = vrot.slane %v1440, 4
    %1810 = vmatprep.subr.mxu0 %v761
    %1811 = vmatpush1.msra.mxu0 %v760
    %1812 = vmatprep.subr.mxu0 %v759
    %1813 = vmatpush1.msra.mxu0 %v758
    %1814 = vmatprep.subr.mxu0 %v757
    %1815 = vmatpush1.msra.mxu0 %v756
    %1816 = vmatprep.subr.mxu0 %v755
    %1817 = vmatpush1.msra.mxu0 %v754
    %1818 = vmatprep.subr.mxu0 %v753
    %1819 = vmatpush1.msra.mxu0 %v752
    %1820 = vmatprep.subr.mxu0 %v751
    %1821 = vmatpush1.msra.mxu0 %v750
    %1822 = vmatprep.subr.mxu0 %v749
    %1823 = vmatpush1.msra.mxu0 %v748
    %1824 = vmatprep.subr.mxu0 %v747
    %1825 = vmatpush1.msra.mxu0 %v746
    %1826 = vmatprep.subr.mxu0 %v745
    %1827 = vmatpush1.msra.mxu0 %v744
    %1828 = vmatprep.subr.mxu0 %v743
    %1829 = vmatpush1.msra.mxu0 %v742
    %1830 = vmatprep.subr.mxu0 %v741
    %1831 = vmatpush1.msra.mxu0 %v740
    %1832 = vmatprep.subr.mxu0 %v739
    %1833 = vmatpush1.msra.mxu0 %v738
    %1834 = vmatprep.subr.mxu0 %v737
    %1835 = vmatpush1.msra.mxu0 %v736
    %1836 = vmatprep.subr.mxu0 %v735
    %1837 = vmatpush1.msra.mxu0 %v734
    %1838 = vmatprep.subr.mxu0 %v733
    %1839 = vmatpush1.msra.mxu0 %v732
    %1840 = vmatprep.subr.mxu0 %v731
    %1841 = vmatpush1.msra.mxu0 %v730
    %1842 = vmatprep.subr.mxu0 0.0
    %1843 = vmatpush2.msra.mxu0 0.0
    %1844 = vmatprep.subr.mxu0 0.0
    %1845 = vmatpush2.msra.mxu0 0.0
    %1846 = vmatprep.subr.mxu0 0.0
    %1847 = vmatpush2.msra.mxu0 0.0
    %1848 = vmatprep.subr.mxu0 0.0
    %1849 = vmatpush2.msra.mxu0 0.0
    %1850 = vmatprep.subr.mxu0 0.0
    %1851 = vmatpush2.msra.mxu0 0.0
    %1852 = vmatprep.subr.mxu0 0.0
    %1853 = vmatpush2.msra.mxu0 0.0
    %1854 = vmatprep.subr.mxu0 0.0
    %1855 = vmatpush2.msra.mxu0 0.0
    %1856 = vmatprep.subr.mxu0 0.0
    %1857 = vmatpush2.msra.mxu0 0.0
    %1858 = vmatprep.subr.mxu0 0.0
    %1859 = vmatpush2.msra.mxu0 0.0
    %1860 = vmatprep.subr.mxu0 0.0
    %1861 = vmatpush2.msra.mxu0 0.0
    %1862 = vmatprep.subr.mxu0 0.0
    %1863 = vmatpush2.msra.mxu0 0.0
    %1864 = vmatprep.subr.mxu0 0.0
    %1865 = vmatpush2.msra.mxu0 0.0
    %1866 = vmatprep.subr.mxu0 0.0
    %1867 = vmatpush2.msra.mxu0 0.0
    %1868 = vmatprep.subr.mxu0 0.0
    %1869 = vmatpush2.msra.mxu0 0.0
    %1870 = vmatprep.subr.mxu0 0.0
    %1871 = vmatpush2.msra.mxu0 0.0
    %1872 = vmatprep.subr.mxu0 0.0
    %1873 = vmatpush2.msra.mxu0 0.0
    %1874 = vmatprep.mubr.f32.mxu0 0.0
    %1875 = vmatmul.mubr.f32.gmra.mxu0 %v1808
    %v1876 = vpop.f32.mrf.mxu0
    %v1877 = vadd.f32 0.0, %v1876
    %v1878 = vpop.f32.mrf.mxu0
    %v1879 = vadd.f32 0.0, %v1878
    %1880 = vdwg.mxu0
    %v1883 = vcombine.low %v1877, %v1879
    %v1885 = vunpack.c.l.s4 1966171168
    %v1886 = vunpack.c.0.s8 %v1885
    %v1887 = vlaneseq
    %v1888 = vshrl.u32 %v1887, 7
    %v1889 = vsub.s32 %v1886, %v1888
    %v1890 = vrot.slane %v1883, %v1889
    %v1892 = vunpack.c.l.s4 1966171168
    %v1893 = vunpack.c.0.s8 %v1892
    %v1894 = vlaneseq
    %v1895 = vshrl.u32 %v1894, 7
    %v1896 = vsub.s32 %v1893, %v1895
    %v1897 = vrot.slane %v1890, %v1896
    %v1899 = vadd.f32 %v1807, %v1897
    %v1900 = vrot.slane %v1440, 5
    %1902 = vmatprep.subr.mxu0 %v886
    %1903 = vmatpush1.msra.mxu0 %v885
    %1904 = vmatprep.subr.mxu0 %v884
    %1905 = vmatpush1.msra.mxu0 %v883
    %1906 = vmatprep.subr.mxu0 %v882
    %1907 = vmatpush1.msra.mxu0 %v881
    %1908 = vmatprep.subr.mxu0 %v880
    %1909 = vmatpush1.msra.mxu0 %v879
    %1910 = vmatprep.subr.mxu0 %v878
    %1911 = vmatpush1.msra.mxu0 %v877
    %1912 = vmatprep.subr.mxu0 %v876
    %1913 = vmatpush1.msra.mxu0 %v875
    %1914 = vmatprep.subr.mxu0 %v874
    %1915 = vmatpush1.msra.mxu0 %v873
    %1916 = vmatprep.subr.mxu0 %v872
    %1917 = vmatpush1.msra.mxu0 %v871
    %1918 = vmatprep.subr.mxu0 %v870
    %1919 = vmatpush1.msra.mxu0 %v869
    %1920 = vmatprep.subr.mxu0 %v868
    %1921 = vmatpush1.msra.mxu0 %v867
    %1922 = vmatprep.subr.mxu0 %v866
    %1923 = vmatpush1.msra.mxu0 %v865
    %1924 = vmatprep.subr.mxu0 %v864
    %1925 = vmatpush1.msra.mxu0 %v863
    %1926 = vmatprep.subr.mxu0 %v862
    %1927 = vmatpush1.msra.mxu0 %v861
    %1928 = vmatprep.subr.mxu0 %v860
    %1929 = vmatpush1.msra.mxu0 %v859
    %1930 = vmatprep.subr.mxu0 %v858
    %1931 = vmatpush1.msra.mxu0 %v857
    %1932 = vmatprep.subr.mxu0 %v856
    %1933 = vmatpush1.msra.mxu0 %v855
    %1934 = vmatprep.subr.mxu0 0.0
    %1935 = vmatpush2.msra.mxu0 0.0
    %1936 = vmatprep.subr.mxu0 0.0
    %1937 = vmatpush2.msra.mxu0 0.0
    %1938 = vmatprep.subr.mxu0 0.0
    %1939 = vmatpush2.msra.mxu0 0.0
    %1940 = vmatprep.subr.mxu0 0.0
    %1941 = vmatpush2.msra.mxu0 0.0
    %1942 = vmatprep.subr.mxu0 0.0
    %1943 = vmatpush2.msra.mxu0 0.0
    %1944 = vmatprep.subr.mxu0 0.0
    %1945 = vmatpush2.msra.mxu0 0.0
    %1946 = vmatprep.subr.mxu0 0.0
    %1947 = vmatpush2.msra.mxu0 0.0
    %1948 = vmatprep.subr.mxu0 0.0
    %1949 = vmatpush2.msra.mxu0 0.0
    %1950 = vmatprep.subr.mxu0 0.0
    %1951 = vmatpush2.msra.mxu0 0.0
    %1952 = vmatprep.subr.mxu0 0.0
    %1953 = vmatpush2.msra.mxu0 0.0
    %1954 = vmatprep.subr.mxu0 0.0
    %1955 = vmatpush2.msra.mxu0 0.0
    %1956 = vmatprep.subr.mxu0 0.0
    %1957 = vmatpush2.msra.mxu0 0.0
    %1958 = vmatprep.subr.mxu0 0.0
    %1959 = vmatpush2.msra.mxu0 0.0
    %1960 = vmatprep.subr.mxu0 0.0
    %1961 = vmatpush2.msra.mxu0 0.0
    %1962 = vmatprep.subr.mxu0 0.0
    %1963 = vmatpush2.msra.mxu0 0.0
    %1964 = vmatprep.subr.mxu0 0.0
    %1965 = vmatpush2.msra.mxu0 0.0
    %1966 = vmatprep.mubr.f32.mxu0 0.0
    %1967 = vmatmul.mubr.f32.gmra.mxu0 %v1900
    %v1968 = vpop.f32.mrf.mxu0
    %v1969 = vadd.f32 0.0, %v1968
    %v1970 = vpop.f32.mrf.mxu0
    %v1971 = vadd.f32 0.0, %v1970
    %1972 = vdwg.mxu0
    %v1975 = vcombine.low %v1969, %v1971
    %v1977 = vunpack.c.l.s4 1966171168
    %v1978 = vunpack.c.0.s8 %v1977
    %v1979 = vlaneseq
    %v1980 = vshrl.u32 %v1979, 7
    %v1981 = vsub.s32 %v1978, %v1980
    %v1982 = vrot.slane %v1975, %v1981
    %v1984 = vunpack.c.l.s4 1966171168
    %v1985 = vunpack.c.0.s8 %v1984
    %v1986 = vlaneseq
    %v1987 = vshrl.u32 %v1986, 7
    %v1988 = vsub.s32 %v1985, %v1987
    %v1989 = vrot.slane %v1982, %v1988
    %v1991 = vadd.f32 %v1899, %v1989
    %v1992 = vrot.slane %v1440, 6
    %1994 = vmatprep.subr.mxu0 %v1011
    %1995 = vmatpush1.msra.mxu0 %v1010
    %1996 = vmatprep.subr.mxu0 %v1009
    %1997 = vmatpush1.msra.mxu0 %v1008
    %1998 = vmatprep.subr.mxu0 %v1007
    %1999 = vmatpush1.msra.mxu0 %v1006
    %2000 = vmatprep.subr.mxu0 %v1005
    %2001 = vmatpush1.msra.mxu0 %v1004
    %2002 = vmatprep.subr.mxu0 %v1003
    %2003 = vmatpush1.msra.mxu0 %v1002
    %2004 = vmatprep.subr.mxu0 %v1001
    %2005 = vmatpush1.msra.mxu0 %v1000
    %2006 = vmatprep.subr.mxu0 %v999
    %2007 = vmatpush1.msra.mxu0 %v998
    %2008 = vmatprep.subr.mxu0 %v997
    %2009 = vmatpush1.msra.mxu0 %v996
    %2010 = vmatprep.subr.mxu0 %v995
    %2011 = vmatpush1.msra.mxu0 %v994
    %2012 = vmatprep.subr.mxu0 %v993
    %2013 = vmatpush1.msra.mxu0 %v992
    %2014 = vmatprep.subr.mxu0 %v991
    %2015 = vmatpush1.msra.mxu0 %v990
    %2016 = vmatprep.subr.mxu0 %v989
    %2017 = vmatpush1.msra.mxu0 %v988
    %2018 = vmatprep.subr.mxu0 %v987
    %2019 = vmatpush1.msra.mxu0 %v986
    %2020 = vmatprep.subr.mxu0 %v985
    %2021 = vmatpush1.msra.mxu0 %v984
    %2022 = vmatprep.subr.mxu0 %v983
    %2023 = vmatpush1.msra.mxu0 %v982
    %2024 = vmatprep.subr.mxu0 %v981
    %2025 = vmatpush1.msra.mxu0 %v980
    %2026 = vmatprep.subr.mxu0 0.0
    %2027 = vmatpush2.msra.mxu0 0.0
    %2028 = vmatprep.subr.mxu0 0.0
    %2029 = vmatpush2.msra.mxu0 0.0
    %2030 = vmatprep.subr.mxu0 0.0
    %2031 = vmatpush2.msra.mxu0 0.0
    %2032 = vmatprep.subr.mxu0 0.0
    %2033 = vmatpush2.msra.mxu0 0.0
    %2034 = vmatprep.subr.mxu0 0.0
    %2035 = vmatpush2.msra.mxu0 0.0
    %2036 = vmatprep.subr.mxu0 0.0
    %2037 = vmatpush2.msra.mxu0 0.0
    %2038 = vmatprep.subr.mxu0 0.0
    %2039 = vmatpush2.msra.mxu0 0.0
    %2040 = vmatprep.subr.mxu0 0.0
    %2041 = vmatpush2.msra.mxu0 0.0
    %2042 = vmatprep.subr.mxu0 0.0
    %2043 = vmatpush2.msra.mxu0 0.0
    %2044 = vmatprep.subr.mxu0 0.0
    %2045 = vmatpush2.msra.mxu0 0.0
    %2046 = vmatprep.subr.mxu0 0.0
    %2047 = vmatpush2.msra.mxu0 0.0
    %2048 = vmatprep.subr.mxu0 0.0
    %2049 = vmatpush2.msra.mxu0 0.0
    %2050 = vmatprep.subr.mxu0 0.0
    %2051 = vmatpush2.msra.mxu0 0.0
    %2052 = vmatprep.subr.mxu0 0.0
    %2053 = vmatpush2.msra.mxu0 0.0
    %2054 = vmatprep.subr.mxu0 0.0
    %2055 = vmatpush2.msra.mxu0 0.0
    %2056 = vmatprep.subr.mxu0 0.0
    %2057 = vmatpush2.msra.mxu0 0.0
    %2058 = vmatprep.mubr.f32.mxu0 0.0
    %2059 = vmatmul.mubr.f32.gmra.mxu0 %v1992
    %v2060 = vpop.f32.mrf.mxu0
    %v2061 = vadd.f32 0.0, %v2060
    %v2062 = vpop.f32.mrf.mxu0
    %v2063 = vadd.f32 0.0, %v2062
    %2064 = vdwg.mxu0
    %v2067 = vcombine.low %v2061, %v2063
    %v2069 = vunpack.c.l.s4 1966171168
    %v2070 = vunpack.c.0.s8 %v2069
    %v2071 = vlaneseq
    %v2072 = vshrl.u32 %v2071, 7
    %v2073 = vsub.s32 %v2070, %v2072
    %v2074 = vrot.slane %v2067, %v2073
    %v2076 = vunpack.c.l.s4 1966171168
    %v2077 = vunpack.c.0.s8 %v2076
    %v2078 = vlaneseq
    %v2079 = vshrl.u32 %v2078, 7
    %v2080 = vsub.s32 %v2077, %v2079
    %v2081 = vrot.slane %v2074, %v2080
    %v2083 = vadd.f32 %v1991, %v2081
    %v2084 = vrot.slane %v1440, 7
    %2086 = vmatprep.subr.mxu0 %v1136
    %2087 = vmatpush1.msra.mxu0 %v1135
    %2088 = vmatprep.subr.mxu0 %v1134
    %2089 = vmatpush1.msra.mxu0 %v1133
    %2090 = vmatprep.subr.mxu0 %v1132
    %2091 = vmatpush1.msra.mxu0 %v1131
    %2092 = vmatprep.subr.mxu0 %v1130
    %2093 = vmatpush1.msra.mxu0 %v1129
    %2094 = vmatprep.subr.mxu0 %v1128
    %2095 = vmatpush1.msra.mxu0 %v1127
    %2096 = vmatprep.subr.mxu0 %v1126
    %2097 = vmatpush1.msra.mxu0 %v1125
    %2098 = vmatprep.subr.mxu0 %v1124
    %2099 = vmatpush1.msra.mxu0 %v1123
    %2100 = vmatprep.subr.mxu0 %v1122
    %2101 = vmatpush1.msra.mxu0 %v1121
    %2102 = vmatprep.subr.mxu0 %v1120
    %2103 = vmatpush1.msra.mxu0 %v1119
    %2104 = vmatprep.subr.mxu0 %v1118
    %2105 = vmatpush1.msra.mxu0 %v1117
    %2106 = vmatprep.subr.mxu0 %v1116
    %2107 = vmatpush1.msra.mxu0 %v1115
    %2108 = vmatprep.subr.mxu0 %v1114
    %2109 = vmatpush1.msra.mxu0 %v1113
    %2110 = vmatprep.subr.mxu0 %v1112
    %2111 = vmatpush1.msra.mxu0 %v1111
    %2112 = vmatprep.subr.mxu0 %v1110
    %2113 = vmatpush1.msra.mxu0 %v1109
    %2114 = vmatprep.subr.mxu0 %v1108
    %2115 = vmatpush1.msra.mxu0 %v1107
    %2116 = vmatprep.subr.mxu0 %v1106
    %2117 = vmatpush1.msra.mxu0 %v1105
    %2118 = vmatprep.subr.mxu0 0.0
    %2119 = vmatpush2.msra.mxu0 0.0
    %2120 = vmatprep.subr.mxu0 0.0
    %2121 = vmatpush2.msra.mxu0 0.0
    %2122 = vmatprep.subr.mxu0 0.0
    %2123 = vmatpush2.msra.mxu0 0.0
    %2124 = vmatprep.subr.mxu0 0.0
    %2125 = vmatpush2.msra.mxu0 0.0
    %2126 = vmatprep.subr.mxu0 0.0
    %2127 = vmatpush2.msra.mxu0 0.0
    %2128 = vmatprep.subr.mxu0 0.0
    %2129 = vmatpush2.msra.mxu0 0.0
    %2130 = vmatprep.subr.mxu0 0.0
    %2131 = vmatpush2.msra.mxu0 0.0
    %2132 = vmatprep.subr.mxu0 0.0
    %2133 = vmatpush2.msra.mxu0 0.0
    %2134 = vmatprep.subr.mxu0 0.0
    %2135 = vmatpush2.msra.mxu0 0.0
    %2136 = vmatprep.subr.mxu0 0.0
    %2137 = vmatpush2.msra.mxu0 0.0
    %2138 = vmatprep.subr.mxu0 0.0
    %2139 = vmatpush2.msra.mxu0 0.0
    %2140 = vmatprep.subr.mxu0 0.0
    %2141 = vmatpush2.msra.mxu0 0.0
    %2142 = vmatprep.subr.mxu0 0.0
    %2143 = vmatpush2.msra.mxu0 0.0
    %2144 = vmatprep.subr.mxu0 0.0
    %2145 = vmatpush2.msra.mxu0 0.0
    %2146 = vmatprep.subr.mxu0 0.0
    %2147 = vmatpush2.msra.mxu0 0.0
    %2148 = vmatprep.subr.mxu0 0.0
    %2149 = vmatpush2.msra.mxu0 0.0
    %2150 = vmatprep.mubr.f32.mxu0 0.0
    %2151 = vmatmul.mubr.f32.gmra.mxu0 %v2084
    %v2152 = vpop.f32.mrf.mxu0
    %v2153 = vadd.f32 0.0, %v2152
    %v2154 = vpop.f32.mrf.mxu0
    %v2155 = vadd.f32 0.0, %v2154
    %2156 = vdwg.mxu0
    %v2159 = vcombine.low %v2153, %v2155
    %v2161 = vunpack.c.l.s4 1966171168
    %v2162 = vunpack.c.0.s8 %v2161
    %v2163 = vlaneseq
    %v2164 = vshrl.u32 %v2163, 7
    %v2165 = vsub.s32 %v2162, %v2164
    %v2166 = vrot.slane %v2159, %v2165
    %v2168 = vunpack.c.l.s4 1966171168
    %v2169 = vunpack.c.0.s8 %v2168
    %v2170 = vlaneseq
    %v2171 = vshrl.u32 %v2170, 7
    %v2172 = vsub.s32 %v2169, %v2171
    %v2173 = vrot.slane %v2166, %v2172
    %v2175 = vadd.f32 %v2083, %v2173
    %v2176 = vmul.f32 %v1229, 0.2
    %v2177 = vsub.f32 1.0, %v1232
    %v2178 = vmul.f32 %v2176, %v2177
    %v2179 = vadd.f32 %v2178, %v2175
    %vm2180 = vcmp.gt.f32.partialorder %v2179, 0.5
    %v2181 = vsel %vm2180, 1, 0
    %v2182 = vcvt.s32.f32 %v2181
    %v2183 = vadd.f32 %v1233, %v2182
    %s2184 = scalar_lea.vmem %s0, 320
    %v2185 = vld [vmem:[%s2184] sm:$0xff]
    %v2186 = vld [vmem:[%s2184 + $0x8] sm:$0xff]
    %v2187 = vld [vmem:[%s2184 + $0x10] sm:$0xff]
    %v2188 = vld [vmem:[%s2184 + $0x18] sm:$0xff]
    %v2189 = vld [vmem:[%s2184 + $0x20] sm:$0xff]
    %v2190 = vld [vmem:[%s2184 + $0x28] sm:$0xff]
    %v2191 = vld [vmem:[%s2184 + $0x30] sm:$0xff]
    %v2192 = vld [vmem:[%s2184 + $0x38] sm:$0xff]
    %v2193 = vld [vmem:[%s2184 + $0x40] sm:$0xff]
    %v2194 = vld [vmem:[%s2184 + $0x48] sm:$0xff]
    %v2195 = vld [vmem:[%s2184 + $0x50] sm:$0xff]
    %v2196 = vld [vmem:[%s2184 + $0x58] sm:$0xff]
    %v2197 = vld [vmem:[%s2184 + $0x60] sm:$0xff]
    %v2198 = vld [vmem:[%s2184 + $0x68] sm:$0xff]
    %v2199 = vld [vmem:[%s2184 + $0x70] sm:$0xff]
    %v2200 = vld [vmem:[%s2184 + $0x78] sm:$0xff]
    %v2201 = vld [vmem:[%s2184 + $0x80] sm:$0xf]
    %v2202 = vld [vmem:[%s2184 + $0x88] sm:$0xf]
    %v2203 = vld [vmem:[%s2184 + $0x90] sm:$0xf]
    %v2204 = vld [vmem:[%s2184 + $0x98] sm:$0xf]
    %v2206 = vsel %vm56, %v2201, 0
    %v2209 = vsel %vm56, %v2202, 0
    %v2212 = vsel %vm56, %v2203, 0
    %v2215 = vsel %vm56, %v2204, 0
    %2217 = vmatprep.subr.mxu0 0.0
    %2218 = vmatpush1.msra.mxu0 0.0
    %2219 = vmatprep.subr.mxu0 0.0
    %2220 = vmatpush1.msra.mxu0 0.0
    %2221 = vmatprep.subr.mxu0 0.0
    %2222 = vmatpush1.msra.mxu0 0.0
    %2223 = vmatprep.subr.mxu0 0.0
    %2224 = vmatpush1.msra.mxu0 0.0
    %2225 = vmatprep.subr.mxu0 0.0
    %2226 = vmatpush1.msra.mxu0 0.0
    %2227 = vmatprep.subr.mxu0 0.0
    %2228 = vmatpush1.msra.mxu0 0.0
    %2229 = vmatprep.subr.mxu0 0.0
    %2230 = vmatpush1.msra.mxu0 0.0
    %2231 = vmatprep.subr.mxu0 0.0
    %2232 = vmatpush1.msra.mxu0 0.0
    %2233 = vmatprep.subr.mxu0 0.0
    %2234 = vmatpush1.msra.mxu0 0.0
    %2235 = vmatprep.subr.mxu0 0.0
    %2236 = vmatpush1.msra.mxu0 0.0
    %2237 = vmatprep.subr.mxu0 0.0
    %2238 = vmatpush1.msra.mxu0 0.0
    %2239 = vmatprep.subr.mxu0 %v2209
    %2240 = vmatpush1.msra.mxu0 %v2206
    %2241 = vmatprep.subr.mxu0 %v2198
    %2242 = vmatpush1.msra.mxu0 %v2197
    %2243 = vmatprep.subr.mxu0 %v2194
    %2244 = vmatpush1.msra.mxu0 %v2193
    %2245 = vmatprep.subr.mxu0 %v2190
    %2246 = vmatpush1.msra.mxu0 %v2189
    %2247 = vmatprep.subr.mxu0 %v2186
    %2248 = vmatpush1.msra.mxu0 %v2185
    %2249 = vmatprep.subr.mxu0 0.0
    %2250 = vmatpush2.msra.mxu0 0.0
    %2251 = vmatprep.subr.mxu0 0.0
    %2252 = vmatpush2.msra.mxu0 0.0
    %2253 = vmatprep.subr.mxu0 0.0
    %2254 = vmatpush2.msra.mxu0 0.0
    %2255 = vmatprep.subr.mxu0 0.0
    %2256 = vmatpush2.msra.mxu0 0.0
    %2257 = vmatprep.subr.mxu0 0.0
    %2258 = vmatpush2.msra.mxu0 0.0
    %2259 = vmatprep.subr.mxu0 0.0
    %2260 = vmatpush2.msra.mxu0 0.0
    %2261 = vmatprep.subr.mxu0 0.0
    %2262 = vmatpush2.msra.mxu0 0.0
    %2263 = vmatprep.subr.mxu0 0.0
    %2264 = vmatpush2.msra.mxu0 0.0
    %2265 = vmatprep.subr.mxu0 0.0
    %2266 = vmatpush2.msra.mxu0 0.0
    %2267 = vmatprep.subr.mxu0 0.0
    %2268 = vmatpush2.msra.mxu0 0.0
    %2269 = vmatprep.subr.mxu0 0.0
    %2270 = vmatpush2.msra.mxu0 0.0
    %2271 = vmatprep.subr.mxu0 0.0
    %2272 = vmatpush2.msra.mxu0 0.0
    %2273 = vmatprep.subr.mxu0 0.0
    %2274 = vmatpush2.msra.mxu0 0.0
    %2275 = vmatprep.subr.mxu0 0.0
    %2276 = vmatpush2.msra.mxu0 0.0
    %2277 = vmatprep.subr.mxu0 0.0
    %2278 = vmatpush2.msra.mxu0 0.0
    %2279 = vmatprep.subr.mxu0 0.0
    %2280 = vmatpush2.msra.mxu0 0.0
    %2281 = vmatprep.mubr.f32.mxu0 0.0
    %2282 = vmatmul.mubr.f32.gmra.mxu0 %v54
    %v2283 = vpop.f32.mrf.mxu0
    %v2284 = vadd.f32 %v29, %v2283
    %v2285 = vpop.f32.mrf.mxu0
    %v2286 = vadd.f32 %v29, %v2285
    %2287 = vdwg.mxu0
    %2288 = vmatprep.subr.mxu0 0.0
    %2289 = vmatpush1.msra.mxu0 0.0
    %2290 = vmatprep.subr.mxu0 0.0
    %2291 = vmatpush1.msra.mxu0 0.0
    %2292 = vmatprep.subr.mxu0 0.0
    %2293 = vmatpush1.msra.mxu0 0.0
    %2294 = vmatprep.subr.mxu0 0.0
    %2295 = vmatpush1.msra.mxu0 0.0
    %2296 = vmatprep.subr.mxu0 0.0
    %2297 = vmatpush1.msra.mxu0 0.0
    %2298 = vmatprep.subr.mxu0 0.0
    %2299 = vmatpush1.msra.mxu0 0.0
    %2300 = vmatprep.subr.mxu0 0.0
    %2301 = vmatpush1.msra.mxu0 0.0
    %2302 = vmatprep.subr.mxu0 0.0
    %2303 = vmatpush1.msra.mxu0 0.0
    %2304 = vmatprep.subr.mxu0 0.0
    %2305 = vmatpush1.msra.mxu0 0.0
    %2306 = vmatprep.subr.mxu0 0.0
    %2307 = vmatpush1.msra.mxu0 0.0
    %2308 = vmatprep.subr.mxu0 0.0
    %2309 = vmatpush1.msra.mxu0 0.0
    %2310 = vmatprep.subr.mxu0 %v2215
    %2311 = vmatpush1.msra.mxu0 %v2212
    %2312 = vmatprep.subr.mxu0 %v2200
    %2313 = vmatpush1.msra.mxu0 %v2199
    %2314 = vmatprep.subr.mxu0 %v2196
    %2315 = vmatpush1.msra.mxu0 %v2195
    %2316 = vmatprep.subr.mxu0 %v2192
    %2317 = vmatpush1.msra.mxu0 %v2191
    %2318 = vmatprep.subr.mxu0 %v2188
    %2319 = vmatpush1.msra.mxu0 %v2187
    %2320 = vmatprep.subr.mxu0 0.0
    %2321 = vmatpush2.msra.mxu0 0.0
    %2322 = vmatprep.subr.mxu0 0.0
    %2323 = vmatpush2.msra.mxu0 0.0
    %2324 = vmatprep.subr.mxu0 0.0
    %2325 = vmatpush2.msra.mxu0 0.0
    %2326 = vmatprep.subr.mxu0 0.0
    %2327 = vmatpush2.msra.mxu0 0.0
    %2328 = vmatprep.subr.mxu0 0.0
    %2329 = vmatpush2.msra.mxu0 0.0
    %2330 = vmatprep.subr.mxu0 0.0
    %2331 = vmatpush2.msra.mxu0 0.0
    %2332 = vmatprep.subr.mxu0 0.0
    %2333 = vmatpush2.msra.mxu0 0.0
    %2334 = vmatprep.subr.mxu0 0.0
    %2335 = vmatpush2.msra.mxu0 0.0
    %2336 = vmatprep.subr.mxu0 0.0
    %2337 = vmatpush2.msra.mxu0 0.0
    %2338 = vmatprep.subr.mxu0 0.0
    %2339 = vmatpush2.msra.mxu0 0.0
    %2340 = vmatprep.subr.mxu0 0.0
    %2341 = vmatpush2.msra.mxu0 0.0
    %2342 = vmatprep.subr.mxu0 0.0
    %2343 = vmatpush2.msra.mxu0 0.0
    %2344 = vmatprep.subr.mxu0 0.0
    %2345 = vmatpush2.msra.mxu0 0.0
    %2346 = vmatprep.subr.mxu0 0.0
    %2347 = vmatpush2.msra.mxu0 0.0
    %2348 = vmatprep.subr.mxu0 0.0
    %2349 = vmatpush2.msra.mxu0 0.0
    %2350 = vmatprep.subr.mxu0 0.0
    %2351 = vmatpush2.msra.mxu0 0.0
    %2352 = vmatprep.mubr.f32.mxu0 0.0
    %2353 = vmatmul.mubr.f32.gmra.mxu0 %v54
    %v2354 = vpop.f32.mrf.mxu0
    %v2355 = vadd.f32 %v29, %v2354
    %v2356 = vpop.f32.mrf.mxu0
    %v2357 = vadd.f32 %v29, %v2356
    %2358 = vdwg.mxu0
    %v2359 = vmul.f32 %v1421, 0.2
    %v2360 = vmul.f32 %v1422, 0.2
    %v2361 = vmul.f32 %v1423, 0.2
    %v2362 = vmul.f32 %v1424, 0.2
    %v2363 = vsub.f32 1.0, %v1433
    %v2364 = vsub.f32 1.0, %v1434
    %v2365 = vsub.f32 1.0, %v1435
    %v2366 = vsub.f32 1.0, %v1436
    %v2367 = vmul.f32 %v2359, %v2363
    %v2368 = vmul.f32 %v2360, %v2364
    %v2369 = vmul.f32 %v2361, %v2365
    %v2370 = vmul.f32 %v2362, %v2366
    %v2371 = vadd.f32 %v2367, %v2284
    %v2372 = vadd.f32 %v2368, %v2286
    %v2373 = vadd.f32 %v2369, %v2355
    %v2374 = vadd.f32 %v2370, %v2357
    %vm2375 = vcmp.gt.f32.partialorder %v2371, 0.5
    %vm2376 = vcmp.gt.f32.partialorder %v2372, 0.5
    %vm2377 = vcmp.gt.f32.partialorder %v2373, 0.5
    %vm2378 = vcmp.gt.f32.partialorder %v2374, 0.5
    %v2379 = vsel %vm2375, 1, 0
    %v2380 = vsel %vm2376, 1, 0
    %v2381 = vsel %vm2377, 1, 0
    %v2382 = vsel %vm2378, 1, 0
    %v2383 = vcvt.s32.f32 %v2379
    %v2384 = vcvt.s32.f32 %v2380
    %v2385 = vcvt.s32.f32 %v2381
    %v2386 = vcvt.s32.f32 %v2382
    %v2387 = vadd.f32 %v2383, %v2384
    %v2388 = vadd.f32 %v2387, %v2385
    %v2389 = vadd.f32 %v2388, %v2386
    %v2390 = vmul.f32 %v2389, 0.25
    %2391 = vmatprep.subr.mxu0 %v262
    %2392 = vmatpush1.msra.mxu0 %v261
    %2393 = vmatprep.subr.mxu0 %v260
    %2394 = vmatpush1.msra.mxu0 %v259
    %2395 = vmatprep.subr.mxu0 %v258
    %2396 = vmatpush1.msra.mxu0 %v257
    %2397 = vmatprep.subr.mxu0 %v256
    %2398 = vmatpush1.msra.mxu0 %v255
    %2399 = vmatprep.subr.mxu0 %v254
    %2400 = vmatpush1.msra.mxu0 %v253
    %2401 = vmatprep.subr.mxu0 %v252
    %2402 = vmatpush1.msra.mxu0 %v251
    %2403 = vmatprep.subr.mxu0 %v250
    %2404 = vmatpush1.msra.mxu0 %v249
    %2405 = vmatprep.subr.mxu0 %v248
    %2406 = vmatpush1.msra.mxu0 %v247
    %2407 = vmatprep.subr.mxu0 %v246
    %2408 = vmatpush1.msra.mxu0 %v245
    %2409 = vmatprep.subr.mxu0 %v244
    %2410 = vmatpush1.msra.mxu0 %v243
    %2411 = vmatprep.subr.mxu0 %v242
    %2412 = vmatpush1.msra.mxu0 %v241
    %2413 = vmatprep.subr.mxu0 %v240
    %2414 = vmatpush1.msra.mxu0 %v239
    %2415 = vmatprep.subr.mxu0 %v238
    %2416 = vmatpush1.msra.mxu0 %v237
    %2417 = vmatprep.subr.mxu0 %v236
    %2418 = vmatpush1.msra.mxu0 %v235
    %2419 = vmatprep.subr.mxu0 %v234
    %2420 = vmatpush1.msra.mxu0 %v233
    %2421 = vmatprep.subr.mxu0 %v232
    %2422 = vmatpush1.msra.mxu0 %v231
    %2423 = vmatprep.subr.mxu0 0.0
    %2424 = vmatpush2.msra.mxu0 0.0
    %2425 = vmatprep.subr.mxu0 0.0
    %2426 = vmatpush2.msra.mxu0 0.0
    %2427 = vmatprep.subr.mxu0 0.0
    %2428 = vmatpush2.msra.mxu0 0.0
    %2429 = vmatprep.subr.mxu0 0.0
    %2430 = vmatpush2.msra.mxu0 0.0
    %2431 = vmatprep.subr.mxu0 0.0
    %2432 = vmatpush2.msra.mxu0 0.0
    %2433 = vmatprep.subr.mxu0 0.0
    %2434 = vmatpush2.msra.mxu0 0.0
    %2435 = vmatprep.subr.mxu0 0.0
    %2436 = vmatpush2.msra.mxu0 0.0
    %2437 = vmatprep.subr.mxu0 0.0
    %2438 = vmatpush2.msra.mxu0 0.0
    %2439 = vmatprep.subr.mxu0 0.0
    %2440 = vmatpush2.msra.mxu0 0.0
    %2441 = vmatprep.subr.mxu0 0.0
    %2442 = vmatpush2.msra.mxu0 0.0
    %2443 = vmatprep.subr.mxu0 0.0
    %2444 = vmatpush2.msra.mxu0 0.0
    %2445 = vmatprep.subr.mxu0 0.0
    %2446 = vmatpush2.msra.mxu0 0.0
    %2447 = vmatprep.subr.mxu0 0.0
    %2448 = vmatpush2.msra.mxu0 0.0
    %2449 = vmatprep.subr.mxu0 0.0
    %2450 = vmatpush2.msra.mxu0 0.0
    %2451 = vmatprep.subr.mxu0 0.0
    %2452 = vmatpush2.msra.mxu0 0.0
    %2453 = vmatprep.subr.mxu0 0.0
    %2454 = vmatpush2.msra.mxu0 0.0
    %2455 = vmatprep.mubr.f32.mxu0 0.0
    %2456 = vmatmul.mubr.f32.gmra.mxu0 %v2390
    %v2457 = vpop.f32.mrf.mxu0
    %v2458 = vadd.f32 0.0, %v2457
    %v2459 = vpop.f32.mrf.mxu0
    %v2460 = vadd.f32 0.0, %v2459
    %2461 = vdwg.mxu0
    %v2464 = vcombine.low %v2458, %v2460
    %v2466 = vunpack.c.l.s4 1966171168
    %v2467 = vunpack.c.0.s8 %v2466
    %v2468 = vlaneseq
    %v2469 = vshrl.u32 %v2468, 7
    %v2470 = vsub.s32 %v2467, %v2469
    %v2471 = vrot.slane %v2464, %v2470
    %v2473 = vunpack.c.l.s4 1966171168
    %v2474 = vunpack.c.0.s8 %v2473
    %v2475 = vlaneseq
    %v2476 = vshrl.u32 %v2475, 7
    %v2477 = vsub.s32 %v2474, %v2476
    %v2478 = vrot.slane %v2471, %v2477
    %v2480 = vadd.f32 %v31, %v2478
    %v2482 = vrot.slane %v2390, 1
    %2484 = vmatprep.subr.mxu0 %v385
    %2485 = vmatpush1.msra.mxu0 %v384
    %2486 = vmatprep.subr.mxu0 %v383
    %2487 = vmatpush1.msra.mxu0 %v382
    %2488 = vmatprep.subr.mxu0 %v381
    %2489 = vmatpush1.msra.mxu0 %v380
    %2490 = vmatprep.subr.mxu0 %v379
    %2491 = vmatpush1.msra.mxu0 %v378
    %2492 = vmatprep.subr.mxu0 %v377
    %2493 = vmatpush1.msra.mxu0 %v376
    %2494 = vmatprep.subr.mxu0 %v375
    %2495 = vmatpush1.msra.mxu0 %v374
    %2496 = vmatprep.subr.mxu0 %v373
    %2497 = vmatpush1.msra.mxu0 %v372
    %2498 = vmatprep.subr.mxu0 %v371
    %2499 = vmatpush1.msra.mxu0 %v370
    %2500 = vmatprep.subr.mxu0 %v369
    %2501 = vmatpush1.msra.mxu0 %v368
    %2502 = vmatprep.subr.mxu0 %v367
    %2503 = vmatpush1.msra.mxu0 %v366
    %2504 = vmatprep.subr.mxu0 %v365
    %2505 = vmatpush1.msra.mxu0 %v364
    %2506 = vmatprep.subr.mxu0 %v363
    %2507 = vmatpush1.msra.mxu0 %v362
    %2508 = vmatprep.subr.mxu0 %v361
    %2509 = vmatpush1.msra.mxu0 %v360
    %2510 = vmatprep.subr.mxu0 %v359
    %2511 = vmatpush1.msra.mxu0 %v358
    %2512 = vmatprep.subr.mxu0 %v357
    %2513 = vmatpush1.msra.mxu0 %v356
    %2514 = vmatprep.subr.mxu0 %v355
    %2515 = vmatpush1.msra.mxu0 %v354
    %2516 = vmatprep.subr.mxu0 0.0
    %2517 = vmatpush2.msra.mxu0 0.0
    %2518 = vmatprep.subr.mxu0 0.0
    %2519 = vmatpush2.msra.mxu0 0.0
    %2520 = vmatprep.subr.mxu0 0.0
    %2521 = vmatpush2.msra.mxu0 0.0
    %2522 = vmatprep.subr.mxu0 0.0
    %2523 = vmatpush2.msra.mxu0 0.0
    %2524 = vmatprep.subr.mxu0 0.0
    %2525 = vmatpush2.msra.mxu0 0.0
    %2526 = vmatprep.subr.mxu0 0.0
    %2527 = vmatpush2.msra.mxu0 0.0
    %2528 = vmatprep.subr.mxu0 0.0
    %2529 = vmatpush2.msra.mxu0 0.0
    %2530 = vmatprep.subr.mxu0 0.0
    %2531 = vmatpush2.msra.mxu0 0.0
    %2532 = vmatprep.subr.mxu0 0.0
    %2533 = vmatpush2.msra.mxu0 0.0
    %2534 = vmatprep.subr.mxu0 0.0
    %2535 = vmatpush2.msra.mxu0 0.0
    %2536 = vmatprep.subr.mxu0 0.0
    %2537 = vmatpush2.msra.mxu0 0.0
    %2538 = vmatprep.subr.mxu0 0.0
    %2539 = vmatpush2.msra.mxu0 0.0
    %2540 = vmatprep.subr.mxu0 0.0
    %2541 = vmatpush2.msra.mxu0 0.0
    %2542 = vmatprep.subr.mxu0 0.0
    %2543 = vmatpush2.msra.mxu0 0.0
    %2544 = vmatprep.subr.mxu0 0.0
    %2545 = vmatpush2.msra.mxu0 0.0
    %2546 = vmatprep.subr.mxu0 0.0
    %2547 = vmatpush2.msra.mxu0 0.0
    %2548 = vmatprep.mubr.f32.mxu0 0.0
    %2549 = vmatmul.mubr.f32.gmra.mxu0 %v2482
    %v2550 = vpop.f32.mrf.mxu0
    %v2551 = vadd.f32 0.0, %v2550
    %v2552 = vpop.f32.mrf.mxu0
    %v2553 = vadd.f32 0.0, %v2552
    %2554 = vdwg.mxu0
    %v2557 = vcombine.low %v2551, %v2553
    %v2559 = vunpack.c.l.s4 1966171168
    %v2560 = vunpack.c.0.s8 %v2559
    %v2561 = vlaneseq
    %v2562 = vshrl.u32 %v2561, 7
    %v2563 = vsub.s32 %v2560, %v2562
    %v2564 = vrot.slane %v2557, %v2563
    %v2566 = vunpack.c.l.s4 1966171168
    %v2567 = vunpack.c.0.s8 %v2566
    %v2568 = vlaneseq
    %v2569 = vshrl.u32 %v2568, 7
    %v2570 = vsub.s32 %v2567, %v2569
    %v2571 = vrot.slane %v2564, %v2570
    %v2573 = vadd.f32 %v2480, %v2571
    %v2574 = vrot.slane %v2390, 2
    %2576 = vmatprep.subr.mxu0 %v511
    %2577 = vmatpush1.msra.mxu0 %v510
    %2578 = vmatprep.subr.mxu0 %v509
    %2579 = vmatpush1.msra.mxu0 %v508
    %2580 = vmatprep.subr.mxu0 %v507
    %2581 = vmatpush1.msra.mxu0 %v506
    %2582 = vmatprep.subr.mxu0 %v505
    %2583 = vmatpush1.msra.mxu0 %v504
    %2584 = vmatprep.subr.mxu0 %v503
    %2585 = vmatpush1.msra.mxu0 %v502
    %2586 = vmatprep.subr.mxu0 %v501
    %2587 = vmatpush1.msra.mxu0 %v500
    %2588 = vmatprep.subr.mxu0 %v499
    %2589 = vmatpush1.msra.mxu0 %v498
    %2590 = vmatprep.subr.mxu0 %v497
    %2591 = vmatpush1.msra.mxu0 %v496
    %2592 = vmatprep.subr.mxu0 %v495
    %2593 = vmatpush1.msra.mxu0 %v494
    %2594 = vmatprep.subr.mxu0 %v493
    %2595 = vmatpush1.msra.mxu0 %v492
    %2596 = vmatprep.subr.mxu0 %v491
    %2597 = vmatpush1.msra.mxu0 %v490
    %2598 = vmatprep.subr.mxu0 %v489
    %2599 = vmatpush1.msra.mxu0 %v488
    %2600 = vmatprep.subr.mxu0 %v487
    %2601 = vmatpush1.msra.mxu0 %v486
    %2602 = vmatprep.subr.mxu0 %v485
    %2603 = vmatpush1.msra.mxu0 %v484
    %2604 = vmatprep.subr.mxu0 %v483
    %2605 = vmatpush1.msra.mxu0 %v482
    %2606 = vmatprep.subr.mxu0 %v481
    %2607 = vmatpush1.msra.mxu0 %v480
    %2608 = vmatprep.subr.mxu0 0.0
    %2609 = vmatpush2.msra.mxu0 0.0
    %2610 = vmatprep.subr.mxu0 0.0
    %2611 = vmatpush2.msra.mxu0 0.0
    %2612 = vmatprep.subr.mxu0 0.0
    %2613 = vmatpush2.msra.mxu0 0.0
    %2614 = vmatprep.subr.mxu0 0.0
    %2615 = vmatpush2.msra.mxu0 0.0
    %2616 = vmatprep.subr.mxu0 0.0
    %2617 = vmatpush2.msra.mxu0 0.0
    %2618 = vmatprep.subr.mxu0 0.0
    %2619 = vmatpush2.msra.mxu0 0.0
    %2620 = vmatprep.subr.mxu0 0.0
    %2621 = vmatpush2.msra.mxu0 0.0
    %2622 = vmatprep.subr.mxu0 0.0
    %2623 = vmatpush2.msra.mxu0 0.0
    %2624 = vmatprep.subr.mxu0 0.0
    %2625 = vmatpush2.msra.mxu0 0.0
    %2626 = vmatprep.subr.mxu0 0.0
    %2627 = vmatpush2.msra.mxu0 0.0
    %2628 = vmatprep.subr.mxu0 0.0
    %2629 = vmatpush2.msra.mxu0 0.0
    %2630 = vmatprep.subr.mxu0 0.0
    %2631 = vmatpush2.msra.mxu0 0.0
    %2632 = vmatprep.subr.mxu0 0.0
    %2633 = vmatpush2.msra.mxu0 0.0
    %2634 = vmatprep.subr.mxu0 0.0
    %2635 = vmatpush2.msra.mxu0 0.0
    %2636 = vmatprep.subr.mxu0 0.0
    %2637 = vmatpush2.msra.mxu0 0.0
    %2638 = vmatprep.subr.mxu0 0.0
    %2639 = vmatpush2.msra.mxu0 0.0
    %2640 = vmatprep.mubr.f32.mxu0 0.0
    %2641 = vmatmul.mubr.f32.gmra.mxu0 %v2574
    %v2642 = vpop.f32.mrf.mxu0
    %v2643 = vadd.f32 0.0, %v2642
    %v2644 = vpop.f32.mrf.mxu0
    %v2645 = vadd.f32 0.0, %v2644
    %2646 = vdwg.mxu0
    %v2649 = vcombine.low %v2643, %v2645
    %v2651 = vunpack.c.l.s4 1966171168
    %v2652 = vunpack.c.0.s8 %v2651
    %v2653 = vlaneseq
    %v2654 = vshrl.u32 %v2653, 7
    %v2655 = vsub.s32 %v2652, %v2654
    %v2656 = vrot.slane %v2649, %v2655
    %v2658 = vunpack.c.l.s4 1966171168
    %v2659 = vunpack.c.0.s8 %v2658
    %v2660 = vlaneseq
    %v2661 = vshrl.u32 %v2660, 7
    %v2662 = vsub.s32 %v2659, %v2661
    %v2663 = vrot.slane %v2656, %v2662
    %v2665 = vadd.f32 %v2573, %v2663
    %v2666 = vrot.slane %v2390, 3
    %2668 = vmatprep.subr.mxu0 %v636
    %2669 = vmatpush1.msra.mxu0 %v635
    %2670 = vmatprep.subr.mxu0 %v634
    %2671 = vmatpush1.msra.mxu0 %v633
    %2672 = vmatprep.subr.mxu0 %v632
    %2673 = vmatpush1.msra.mxu0 %v631
    %2674 = vmatprep.subr.mxu0 %v630
    %2675 = vmatpush1.msra.mxu0 %v629
    %2676 = vmatprep.subr.mxu0 %v628
    %2677 = vmatpush1.msra.mxu0 %v627
    %2678 = vmatprep.subr.mxu0 %v626
    %2679 = vmatpush1.msra.mxu0 %v625
    %2680 = vmatprep.subr.mxu0 %v624
    %2681 = vmatpush1.msra.mxu0 %v623
    %2682 = vmatprep.subr.mxu0 %v622
    %2683 = vmatpush1.msra.mxu0 %v621
    %2684 = vmatprep.subr.mxu0 %v620
    %2685 = vmatpush1.msra.mxu0 %v619
    %2686 = vmatprep.subr.mxu0 %v618
    %2687 = vmatpush1.msra.mxu0 %v617
    %2688 = vmatprep.subr.mxu0 %v616
    %2689 = vmatpush1.msra.mxu0 %v615
    %2690 = vmatprep.subr.mxu0 %v614
    %2691 = vmatpush1.msra.mxu0 %v613
    %2692 = vmatprep.subr.mxu0 %v612
    %2693 = vmatpush1.msra.mxu0 %v611
    %2694 = vmatprep.subr.mxu0 %v610
    %2695 = vmatpush1.msra.mxu0 %v609
    %2696 = vmatprep.subr.mxu0 %v608
    %2697 = vmatpush1.msra.mxu0 %v607
    %2698 = vmatprep.subr.mxu0 %v606
    %2699 = vmatpush1.msra.mxu0 %v605
    %2700 = vmatprep.subr.mxu0 0.0
    %2701 = vmatpush2.msra.mxu0 0.0
    %2702 = vmatprep.subr.mxu0 0.0
    %2703 = vmatpush2.msra.mxu0 0.0
    %2704 = vmatprep.subr.mxu0 0.0
    %2705 = vmatpush2.msra.mxu0 0.0
    %2706 = vmatprep.subr.mxu0 0.0
    %2707 = vmatpush2.msra.mxu0 0.0
    %2708 = vmatprep.subr.mxu0 0.0
    %2709 = vmatpush2.msra.mxu0 0.0
    %2710 = vmatprep.subr.mxu0 0.0
    %2711 = vmatpush2.msra.mxu0 0.0
    %2712 = vmatprep.subr.mxu0 0.0
    %2713 = vmatpush2.msra.mxu0 0.0
    %2714 = vmatprep.subr.mxu0 0.0
    %2715 = vmatpush2.msra.mxu0 0.0
    %2716 = vmatprep.subr.mxu0 0.0
    %2717 = vmatpush2.msra.mxu0 0.0
    %2718 = vmatprep.subr.mxu0 0.0
    %2719 = vmatpush2.msra.mxu0 0.0
    %2720 = vmatprep.subr.mxu0 0.0
    %2721 = vmatpush2.msra.mxu0 0.0
    %2722 = vmatprep.subr.mxu0 0.0
    %2723 = vmatpush2.msra.mxu0 0.0
    %2724 = vmatprep.subr.mxu0 0.0
    %2725 = vmatpush2.msra.mxu0 0.0
    %2726 = vmatprep.subr.mxu0 0.0
    %2727 = vmatpush2.msra.mxu0 0.0
    %2728 = vmatprep.subr.mxu0 0.0
    %2729 = vmatpush2.msra.mxu0 0.0
    %2730 = vmatprep.subr.mxu0 0.0
    %2731 = vmatpush2.msra.mxu0 0.0
    %2732 = vmatprep.mubr.f32.mxu0 0.0
    %2733 = vmatmul.mubr.f32.gmra.mxu0 %v2666
    %v2734 = vpop.f32.mrf.mxu0
    %v2735 = vadd.f32 0.0, %v2734
    %v2736 = vpop.f32.mrf.mxu0
    %v2737 = vadd.f32 0.0, %v2736
    %2738 = vdwg.mxu0
    %v2741 = vcombine.low %v2735, %v2737
    %v2743 = vunpack.c.l.s4 1966171168
    %v2744 = vunpack.c.0.s8 %v2743
    %v2745 = vlaneseq
    %v2746 = vshrl.u32 %v2745, 7
    %v2747 = vsub.s32 %v2744, %v2746
    %v2748 = vrot.slane %v2741, %v2747
    %v2750 = vunpack.c.l.s4 1966171168
    %v2751 = vunpack.c.0.s8 %v2750
    %v2752 = vlaneseq
    %v2753 = vshrl.u32 %v2752, 7
    %v2754 = vsub.s32 %v2751, %v2753
    %v2755 = vrot.slane %v2748, %v2754
    %v2757 = vadd.f32 %v2665, %v2755
    %v2758 = vrot.slane %v2390, 4
    %2760 = vmatprep.subr.mxu0 %v761
    %2761 = vmatpush1.msra.mxu0 %v760
    %2762 = vmatprep.subr.mxu0 %v759
    %2763 = vmatpush1.msra.mxu0 %v758
    %2764 = vmatprep.subr.mxu0 %v757
    %2765 = vmatpush1.msra.mxu0 %v756
    %2766 = vmatprep.subr.mxu0 %v755
    %2767 = vmatpush1.msra.mxu0 %v754
    %2768 = vmatprep.subr.mxu0 %v753
    %2769 = vmatpush1.msra.mxu0 %v752
    %2770 = vmatprep.subr.mxu0 %v751
    %2771 = vmatpush1.msra.mxu0 %v750
    %2772 = vmatprep.subr.mxu0 %v749
    %2773 = vmatpush1.msra.mxu0 %v748
    %2774 = vmatprep.subr.mxu0 %v747
    %2775 = vmatpush1.msra.mxu0 %v746
    %2776 = vmatprep.subr.mxu0 %v745
    %2777 = vmatpush1.msra.mxu0 %v744
    %2778 = vmatprep.subr.mxu0 %v743
    %2779 = vmatpush1.msra.mxu0 %v742
    %2780 = vmatprep.subr.mxu0 %v741
    %2781 = vmatpush1.msra.mxu0 %v740
    %2782 = vmatprep.subr.mxu0 %v739
    %2783 = vmatpush1.msra.mxu0 %v738
    %2784 = vmatprep.subr.mxu0 %v737
    %2785 = vmatpush1.msra.mxu0 %v736
    %2786 = vmatprep.subr.mxu0 %v735
    %2787 = vmatpush1.msra.mxu0 %v734
    %2788 = vmatprep.subr.mxu0 %v733
    %2789 = vmatpush1.msra.mxu0 %v732
    %2790 = vmatprep.subr.mxu0 %v731
    %2791 = vmatpush1.msra.mxu0 %v730
    %2792 = vmatprep.subr.mxu0 0.0
    %2793 = vmatpush2.msra.mxu0 0.0
    %2794 = vmatprep.subr.mxu0 0.0
    %2795 = vmatpush2.msra.mxu0 0.0
    %2796 = vmatprep.subr.mxu0 0.0
    %2797 = vmatpush2.msra.mxu0 0.0
    %2798 = vmatprep.subr.mxu0 0.0
    %2799 = vmatpush2.msra.mxu0 0.0
    %2800 = vmatprep.subr.mxu0 0.0
    %2801 = vmatpush2.msra.mxu0 0.0
    %2802 = vmatprep.subr.mxu0 0.0
    %2803 = vmatpush2.msra.mxu0 0.0
    %2804 = vmatprep.subr.mxu0 0.0
    %2805 = vmatpush2.msra.mxu0 0.0
    %2806 = vmatprep.subr.mxu0 0.0
    %2807 = vmatpush2.msra.mxu0 0.0
    %2808 = vmatprep.subr.mxu0 0.0
    %2809 = vmatpush2.msra.mxu0 0.0
    %2810 = vmatprep.subr.mxu0 0.0
    %2811 = vmatpush2.msra.mxu0 0.0
    %2812 = vmatprep.subr.mxu0 0.0
    %2813 = vmatpush2.msra.mxu0 0.0
    %2814 = vmatprep.subr.mxu0 0.0
    %2815 = vmatpush2.msra.mxu0 0.0
    %2816 = vmatprep.subr.mxu0 0.0
    %2817 = vmatpush2.msra.mxu0 0.0
    %2818 = vmatprep.subr.mxu0 0.0
    %2819 = vmatpush2.msra.mxu0 0.0
    %2820 = vmatprep.subr.mxu0 0.0
    %2821 = vmatpush2.msra.mxu0 0.0
    %2822 = vmatprep.subr.mxu0 0.0
    %2823 = vmatpush2.msra.mxu0 0.0
    %2824 = vmatprep.mubr.f32.mxu0 0.0
    %2825 = vmatmul.mubr.f32.gmra.mxu0 %v2758
    %v2826 = vpop.f32.mrf.mxu0
    %v2827 = vadd.f32 0.0, %v2826
    %v2828 = vpop.f32.mrf.mxu0
    %v2829 = vadd.f32 0.0, %v2828
    %2830 = vdwg.mxu0
    %v2833 = vcombine.low %v2827, %v2829
    %v2835 = vunpack.c.l.s4 1966171168
    %v2836 = vunpack.c.0.s8 %v2835
    %v2837 = vlaneseq
    %v2838 = vshrl.u32 %v2837, 7
    %v2839 = vsub.s32 %v2836, %v2838
    %v2840 = vrot.slane %v2833, %v2839
    %v2842 = vunpack.c.l.s4 1966171168
    %v2843 = vunpack.c.0.s8 %v2842
    %v2844 = vlaneseq
    %v2845 = vshrl.u32 %v2844, 7
    %v2846 = vsub.s32 %v2843, %v2845
    %v2847 = vrot.slane %v2840, %v2846
    %v2849 = vadd.f32 %v2757, %v2847
    %v2850 = vrot.slane %v2390, 5
    %2852 = vmatprep.subr.mxu0 %v886
    %2853 = vmatpush1.msra.mxu0 %v885
    %2854 = vmatprep.subr.mxu0 %v884
    %2855 = vmatpush1.msra.mxu0 %v883
    %2856 = vmatprep.subr.mxu0 %v882
    %2857 = vmatpush1.msra.mxu0 %v881
    %2858 = vmatprep.subr.mxu0 %v880
    %2859 = vmatpush1.msra.mxu0 %v879
    %2860 = vmatprep.subr.mxu0 %v878
    %2861 = vmatpush1.msra.mxu0 %v877
    %2862 = vmatprep.subr.mxu0 %v876
    %2863 = vmatpush1.msra.mxu0 %v875
    %2864 = vmatprep.subr.mxu0 %v874
    %2865 = vmatpush1.msra.mxu0 %v873
    %2866 = vmatprep.subr.mxu0 %v872
    %2867 = vmatpush1.msra.mxu0 %v871
    %2868 = vmatprep.subr.mxu0 %v870
    %2869 = vmatpush1.msra.mxu0 %v869
    %2870 = vmatprep.subr.mxu0 %v868
    %2871 = vmatpush1.msra.mxu0 %v867
    %2872 = vmatprep.subr.mxu0 %v866
    %2873 = vmatpush1.msra.mxu0 %v865
    %2874 = vmatprep.subr.mxu0 %v864
    %2875 = vmatpush1.msra.mxu0 %v863
    %2876 = vmatprep.subr.mxu0 %v862
    %2877 = vmatpush1.msra.mxu0 %v861
    %2878 = vmatprep.subr.mxu0 %v860
    %2879 = vmatpush1.msra.mxu0 %v859
    %2880 = vmatprep.subr.mxu0 %v858
    %2881 = vmatpush1.msra.mxu0 %v857
    %2882 = vmatprep.subr.mxu0 %v856
    %2883 = vmatpush1.msra.mxu0 %v855
    %2884 = vmatprep.subr.mxu0 0.0
    %2885 = vmatpush2.msra.mxu0 0.0
    %2886 = vmatprep.subr.mxu0 0.0
    %2887 = vmatpush2.msra.mxu0 0.0
    %2888 = vmatprep.subr.mxu0 0.0
    %2889 = vmatpush2.msra.mxu0 0.0
    %2890 = vmatprep.subr.mxu0 0.0
    %2891 = vmatpush2.msra.mxu0 0.0
    %2892 = vmatprep.subr.mxu0 0.0
    %2893 = vmatpush2.msra.mxu0 0.0
    %2894 = vmatprep.subr.mxu0 0.0
    %2895 = vmatpush2.msra.mxu0 0.0
    %2896 = vmatprep.subr.mxu0 0.0
    %2897 = vmatpush2.msra.mxu0 0.0
    %2898 = vmatprep.subr.mxu0 0.0
    %2899 = vmatpush2.msra.mxu0 0.0
    %2900 = vmatprep.subr.mxu0 0.0
    %2901 = vmatpush2.msra.mxu0 0.0
    %2902 = vmatprep.subr.mxu0 0.0
    %2903 = vmatpush2.msra.mxu0 0.0
    %2904 = vmatprep.subr.mxu0 0.0
    %2905 = vmatpush2.msra.mxu0 0.0
    %2906 = vmatprep.subr.mxu0 0.0
    %2907 = vmatpush2.msra.mxu0 0.0
    %2908 = vmatprep.subr.mxu0 0.0
    %2909 = vmatpush2.msra.mxu0 0.0
    %2910 = vmatprep.subr.mxu0 0.0
    %2911 = vmatpush2.msra.mxu0 0.0
    %2912 = vmatprep.subr.mxu0 0.0
    %2913 = vmatpush2.msra.mxu0 0.0
    %2914 = vmatprep.subr.mxu0 0.0
    %2915 = vmatpush2.msra.mxu0 0.0
    %2916 = vmatprep.mubr.f32.mxu0 0.0
    %2917 = vmatmul.mubr.f32.gmra.mxu0 %v2850
    %v2918 = vpop.f32.mrf.mxu0
    %v2919 = vadd.f32 0.0, %v2918
    %v2920 = vpop.f32.mrf.mxu0
    %v2921 = vadd.f32 0.0, %v2920
    %2922 = vdwg.mxu0
    %v2925 = vcombine.low %v2919, %v2921
    %v2927 = vunpack.c.l.s4 1966171168
    %v2928 = vunpack.c.0.s8 %v2927
    %v2929 = vlaneseq
    %v2930 = vshrl.u32 %v2929, 7
    %v2931 = vsub.s32 %v2928, %v2930
    %v2932 = vrot.slane %v2925, %v2931
    %v2934 = vunpack.c.l.s4 1966171168
    %v2935 = vunpack.c.0.s8 %v2934
    %v2936 = vlaneseq
    %v2937 = vshrl.u32 %v2936, 7
    %v2938 = vsub.s32 %v2935, %v2937
    %v2939 = vrot.slane %v2932, %v2938
    %v2941 = vadd.f32 %v2849, %v2939
    %v2942 = vrot.slane %v2390, 6
    %2944 = vmatprep.subr.mxu0 %v1011
    %2945 = vmatpush1.msra.mxu0 %v1010
    %2946 = vmatprep.subr.mxu0 %v1009
    %2947 = vmatpush1.msra.mxu0 %v1008
    %2948 = vmatprep.subr.mxu0 %v1007
    %2949 = vmatpush1.msra.mxu0 %v1006
    %2950 = vmatprep.subr.mxu0 %v1005
    %2951 = vmatpush1.msra.mxu0 %v1004
    %2952 = vmatprep.subr.mxu0 %v1003
    %2953 = vmatpush1.msra.mxu0 %v1002
    %2954 = vmatprep.subr.mxu0 %v1001
    %2955 = vmatpush1.msra.mxu0 %v1000
    %2956 = vmatprep.subr.mxu0 %v999
    %2957 = vmatpush1.msra.mxu0 %v998
    %2958 = vmatprep.subr.mxu0 %v997
    %2959 = vmatpush1.msra.mxu0 %v996
    %2960 = vmatprep.subr.mxu0 %v995
    %2961 = vmatpush1.msra.mxu0 %v994
    %2962 = vmatprep.subr.mxu0 %v993
    %2963 = vmatpush1.msra.mxu0 %v992
    %2964 = vmatprep.subr.mxu0 %v991
    %2965 = vmatpush1.msra.mxu0 %v990
    %2966 = vmatprep.subr.mxu0 %v989
    %2967 = vmatpush1.msra.mxu0 %v988
    %2968 = vmatprep.subr.mxu0 %v987
    %2969 = vmatpush1.msra.mxu0 %v986
    %2970 = vmatprep.subr.mxu0 %v985
    %2971 = vmatpush1.msra.mxu0 %v984
    %2972 = vmatprep.subr.mxu0 %v983
    %2973 = vmatpush1.msra.mxu0 %v982
    %2974 = vmatprep.subr.mxu0 %v981
    %2975 = vmatpush1.msra.mxu0 %v980
    %2976 = vmatprep.subr.mxu0 0.0
    %2977 = vmatpush2.msra.mxu0 0.0
    %2978 = vmatprep.subr.mxu0 0.0
    %2979 = vmatpush2.msra.mxu0 0.0
    %2980 = vmatprep.subr.mxu0 0.0
    %2981 = vmatpush2.msra.mxu0 0.0
    %2982 = vmatprep.subr.mxu0 0.0
    %2983 = vmatpush2.msra.mxu0 0.0
    %2984 = vmatprep.subr.mxu0 0.0
    %2985 = vmatpush2.msra.mxu0 0.0
    %2986 = vmatprep.subr.mxu0 0.0
    %2987 = vmatpush2.msra.mxu0 0.0
    %2988 = vmatprep.subr.mxu0 0.0
    %2989 = vmatpush2.msra.mxu0 0.0
    %2990 = vmatprep.subr.mxu0 0.0
    %2991 = vmatpush2.msra.mxu0 0.0
    %2992 = vmatprep.subr.mxu0 0.0
    %2993 = vmatpush2.msra.mxu0 0.0
    %2994 = vmatprep.subr.mxu0 0.0
    %2995 = vmatpush2.msra.mxu0 0.0
    %2996 = vmatprep.subr.mxu0 0.0
    %2997 = vmatpush2.msra.mxu0 0.0
    %2998 = vmatprep.subr.mxu0 0.0
    %2999 = vmatpush2.msra.mxu0 0.0
    %3000 = vmatprep.subr.mxu0 0.0
    %3001 = vmatpush2.msra.mxu0 0.0
    %3002 = vmatprep.subr.mxu0 0.0
    %3003 = vmatpush2.msra.mxu0 0.0
    %3004 = vmatprep.subr.mxu0 0.0
    %3005 = vmatpush2.msra.mxu0 0.0
    %3006 = vmatprep.subr.mxu0 0.0
    %3007 = vmatpush2.msra.mxu0 0.0
    %3008 = vmatprep.mubr.f32.mxu0 0.0
    %3009 = vmatmul.mubr.f32.gmra.mxu0 %v2942
    %v3010 = vpop.f32.mrf.mxu0
    %v3011 = vadd.f32 0.0, %v3010
    %v3012 = vpop.f32.mrf.mxu0
    %v3013 = vadd.f32 0.0, %v3012
    %3014 = vdwg.mxu0
    %v3017 = vcombine.low %v3011, %v3013
    %v3019 = vunpack.c.l.s4 1966171168
    %v3020 = vunpack.c.0.s8 %v3019
    %v3021 = vlaneseq
    %v3022 = vshrl.u32 %v3021, 7
    %v3023 = vsub.s32 %v3020, %v3022
    %v3024 = vrot.slane %v3017, %v3023
    %v3026 = vunpack.c.l.s4 1966171168
    %v3027 = vunpack.c.0.s8 %v3026
    %v3028 = vlaneseq
    %v3029 = vshrl.u32 %v3028, 7
    %v3030 = vsub.s32 %v3027, %v3029
    %v3031 = vrot.slane %v3024, %v3030
    %v3033 = vadd.f32 %v2941, %v3031
    %v3034 = vrot.slane %v2390, 7
    %3036 = vmatprep.subr.mxu0 %v1136
    %3037 = vmatpush1.msra.mxu0 %v1135
    %3038 = vmatprep.subr.mxu0 %v1134
    %3039 = vmatpush1.msra.mxu0 %v1133
    %3040 = vmatprep.subr.mxu0 %v1132
    %3041 = vmatpush1.msra.mxu0 %v1131
    %3042 = vmatprep.subr.mxu0 %v1130
    %3043 = vmatpush1.msra.mxu0 %v1129
    %3044 = vmatprep.subr.mxu0 %v1128
    %3045 = vmatpush1.msra.mxu0 %v1127
    %3046 = vmatprep.subr.mxu0 %v1126
    %3047 = vmatpush1.msra.mxu0 %v1125
    %3048 = vmatprep.subr.mxu0 %v1124
    %3049 = vmatpush1.msra.mxu0 %v1123
    %3050 = vmatprep.subr.mxu0 %v1122
    %3051 = vmatpush1.msra.mxu0 %v1121
    %3052 = vmatprep.subr.mxu0 %v1120
    %3053 = vmatpush1.msra.mxu0 %v1119
    %3054 = vmatprep.subr.mxu0 %v1118
    %3055 = vmatpush1.msra.mxu0 %v1117
    %3056 = vmatprep.subr.mxu0 %v1116
    %3057 = vmatpush1.msra.mxu0 %v1115
    %3058 = vmatprep.subr.mxu0 %v1114
    %3059 = vmatpush1.msra.mxu0 %v1113
    %3060 = vmatprep.subr.mxu0 %v1112
    %3061 = vmatpush1.msra.mxu0 %v1111
    %3062 = vmatprep.subr.mxu0 %v1110
    %3063 = vmatpush1.msra.mxu0 %v1109
    %3064 = vmatprep.subr.mxu0 %v1108
    %3065 = vmatpush1.msra.mxu0 %v1107
    %3066 = vmatprep.subr.mxu0 %v1106
    %3067 = vmatpush1.msra.mxu0 %v1105
    %3068 = vmatprep.subr.mxu0 0.0
    %3069 = vmatpush2.msra.mxu0 0.0
    %3070 = vmatprep.subr.mxu0 0.0
    %3071 = vmatpush2.msra.mxu0 0.0
    %3072 = vmatprep.subr.mxu0 0.0
    %3073 = vmatpush2.msra.mxu0 0.0
    %3074 = vmatprep.subr.mxu0 0.0
    %3075 = vmatpush2.msra.mxu0 0.0
    %3076 = vmatprep.subr.mxu0 0.0
    %3077 = vmatpush2.msra.mxu0 0.0
    %3078 = vmatprep.subr.mxu0 0.0
    %3079 = vmatpush2.msra.mxu0 0.0
    %3080 = vmatprep.subr.mxu0 0.0
    %3081 = vmatpush2.msra.mxu0 0.0
    %3082 = vmatprep.subr.mxu0 0.0
    %3083 = vmatpush2.msra.mxu0 0.0
    %3084 = vmatprep.subr.mxu0 0.0
    %3085 = vmatpush2.msra.mxu0 0.0
    %3086 = vmatprep.subr.mxu0 0.0
    %3087 = vmatpush2.msra.mxu0 0.0
    %3088 = vmatprep.subr.mxu0 0.0
    %3089 = vmatpush2.msra.mxu0 0.0
    %3090 = vmatprep.subr.mxu0 0.0
    %3091 = vmatpush2.msra.mxu0 0.0
    %3092 = vmatprep.subr.mxu0 0.0
    %3093 = vmatpush2.msra.mxu0 0.0
    %3094 = vmatprep.subr.mxu0 0.0
    %3095 = vmatpush2.msra.mxu0 0.0
    %3096 = vmatprep.subr.mxu0 0.0
    %3097 = vmatpush2.msra.mxu0 0.0
    %3098 = vmatprep.subr.mxu0 0.0
    %3099 = vmatpush2.msra.mxu0 0.0
    %3100 = vmatprep.mubr.f32.mxu0 0.0
    %3101 = vmatmul.mubr.f32.gmra.mxu0 %v3034
    %v3102 = vpop.f32.mrf.mxu0
    %v3103 = vadd.f32 0.0, %v3102
    %v3104 = vpop.f32.mrf.mxu0
    %v3105 = vadd.f32 0.0, %v3104
    %3106 = vdwg.mxu0
    %v3109 = vcombine.low %v3103, %v3105
    %v3111 = vunpack.c.l.s4 1966171168
    %v3112 = vunpack.c.0.s8 %v3111
    %v3113 = vlaneseq
    %v3114 = vshrl.u32 %v3113, 7
    %v3115 = vsub.s32 %v3112, %v3114
    %v3116 = vrot.slane %v3109, %v3115
    %v3118 = vunpack.c.l.s4 1966171168
    %v3119 = vunpack.c.0.s8 %v3118
    %v3120 = vlaneseq
    %v3121 = vshrl.u32 %v3120, 7
    %v3122 = vsub.s32 %v3119, %v3121
    %v3123 = vrot.slane %v3116, %v3122
    %v3125 = vadd.f32 %v3033, %v3123
    %v3126 = vmul.f32 %v2179, 0.2
    %v3127 = vsub.f32 1.0, %v2182
    %v3128 = vmul.f32 %v3126, %v3127
    %v3129 = vadd.f32 %v3128, %v3125
    %vm3130 = vcmp.gt.f32.partialorder %v3129, 0.5
    %v3131 = vsel %vm3130, 1, 0
    %v3132 = vcvt.s32.f32 %v3131
    %v3133 = vadd.f32 %v2183, %v3132
    %s3134 = scalar_lea.vmem %s0, 480
    %v3135 = vld [vmem:[%s3134] sm:$0xff]
    %v3136 = vld [vmem:[%s3134 + $0x8] sm:$0xff]
    %v3137 = vld [vmem:[%s3134 + $0x10] sm:$0xff]
    %v3138 = vld [vmem:[%s3134 + $0x18] sm:$0xff]
    %v3139 = vld [vmem:[%s3134 + $0x20] sm:$0xff]
    %v3140 = vld [vmem:[%s3134 + $0x28] sm:$0xff]
    %v3141 = vld [vmem:[%s3134 + $0x30] sm:$0xff]
    %v3142 = vld [vmem:[%s3134 + $0x38] sm:$0xff]
    %v3143 = vld [vmem:[%s3134 + $0x40] sm:$0xff]
    %v3144 = vld [vmem:[%s3134 + $0x48] sm:$0xff]
    %v3145 = vld [vmem:[%s3134 + $0x50] sm:$0xff]
    %v3146 = vld [vmem:[%s3134 + $0x58] sm:$0xff]
    %v3147 = vld [vmem:[%s3134 + $0x60] sm:$0xff]
    %v3148 = vld [vmem:[%s3134 + $0x68] sm:$0xff]
    %v3149 = vld [vmem:[%s3134 + $0x70] sm:$0xff]
    %v3150 = vld [vmem:[%s3134 + $0x78] sm:$0xff]
    %v3151 = vld [vmem:[%s3134 + $0x80] sm:$0xf]
    %v3152 = vld [vmem:[%s3134 + $0x88] sm:$0xf]
    %v3153 = vld [vmem:[%s3134 + $0x90] sm:$0xf]
    %v3154 = vld [vmem:[%s3134 + $0x98] sm:$0xf]
    %v3156 = vsel %vm56, %v3151, 0
    %v3159 = vsel %vm56, %v3152, 0
    %v3162 = vsel %vm56, %v3153, 0
    %v3165 = vsel %vm56, %v3154, 0
    %3167 = vmatprep.subr.mxu0 0.0
    %3168 = vmatpush1.msra.mxu0 0.0
    %3169 = vmatprep.subr.mxu0 0.0
    %3170 = vmatpush1.msra.mxu0 0.0
    %3171 = vmatprep.subr.mxu0 0.0
    %3172 = vmatpush1.msra.mxu0 0.0
    %3173 = vmatprep.subr.mxu0 0.0
    %3174 = vmatpush1.msra.mxu0 0.0
    %3175 = vmatprep.subr.mxu0 0.0
    %3176 = vmatpush1.msra.mxu0 0.0
    %3177 = vmatprep.subr.mxu0 0.0
    %3178 = vmatpush1.msra.mxu0 0.0
    %3179 = vmatprep.subr.mxu0 0.0
    %3180 = vmatpush1.msra.mxu0 0.0
    %3181 = vmatprep.subr.mxu0 0.0
    %3182 = vmatpush1.msra.mxu0 0.0
    %3183 = vmatprep.subr.mxu0 0.0
    %3184 = vmatpush1.msra.mxu0 0.0
    %3185 = vmatprep.subr.mxu0 0.0
    %3186 = vmatpush1.msra.mxu0 0.0
    %3187 = vmatprep.subr.mxu0 0.0
    %3188 = vmatpush1.msra.mxu0 0.0
    %3189 = vmatprep.subr.mxu0 %v3159
    %3190 = vmatpush1.msra.mxu0 %v3156
    %3191 = vmatprep.subr.mxu0 %v3148
    %3192 = vmatpush1.msra.mxu0 %v3147
    %3193 = vmatprep.subr.mxu0 %v3144
    %3194 = vmatpush1.msra.mxu0 %v3143
    %3195 = vmatprep.subr.mxu0 %v3140
    %3196 = vmatpush1.msra.mxu0 %v3139
    %3197 = vmatprep.subr.mxu0 %v3136
    %3198 = vmatpush1.msra.mxu0 %v3135
    %3199 = vmatprep.subr.mxu0 0.0
    %3200 = vmatpush2.msra.mxu0 0.0
    %3201 = vmatprep.subr.mxu0 0.0
    %3202 = vmatpush2.msra.mxu0 0.0
    %3203 = vmatprep.subr.mxu0 0.0
    %3204 = vmatpush2.msra.mxu0 0.0
    %3205 = vmatprep.subr.mxu0 0.0
    %3206 = vmatpush2.msra.mxu0 0.0
    %3207 = vmatprep.subr.mxu0 0.0
    %3208 = vmatpush2.msra.mxu0 0.0
    %3209 = vmatprep.subr.mxu0 0.0
    %3210 = vmatpush2.msra.mxu0 0.0
    %3211 = vmatprep.subr.mxu0 0.0
    %3212 = vmatpush2.msra.mxu0 0.0
    %3213 = vmatprep.subr.mxu0 0.0
    %3214 = vmatpush2.msra.mxu0 0.0
    %3215 = vmatprep.subr.mxu0 0.0
    %3216 = vmatpush2.msra.mxu0 0.0
    %3217 = vmatprep.subr.mxu0 0.0
    %3218 = vmatpush2.msra.mxu0 0.0
    %3219 = vmatprep.subr.mxu0 0.0
    %3220 = vmatpush2.msra.mxu0 0.0
    %3221 = vmatprep.subr.mxu0 0.0
    %3222 = vmatpush2.msra.mxu0 0.0
    %3223 = vmatprep.subr.mxu0 0.0
    %3224 = vmatpush2.msra.mxu0 0.0
    %3225 = vmatprep.subr.mxu0 0.0
    %3226 = vmatpush2.msra.mxu0 0.0
    %3227 = vmatprep.subr.mxu0 0.0
    %3228 = vmatpush2.msra.mxu0 0.0
    %3229 = vmatprep.subr.mxu0 0.0
    %3230 = vmatpush2.msra.mxu0 0.0
    %3231 = vmatprep.mubr.f32.mxu0 0.0
    %3232 = vmatmul.mubr.f32.gmra.mxu0 %v54
    %v3233 = vpop.f32.mrf.mxu0
    %v3234 = vadd.f32 %v29, %v3233
    %v3235 = vpop.f32.mrf.mxu0
    %v3236 = vadd.f32 %v29, %v3235
    %3237 = vdwg.mxu0
    %3238 = vmatprep.subr.mxu0 0.0
    %3239 = vmatpush1.msra.mxu0 0.0
    %3240 = vmatprep.subr.mxu0 0.0
    %3241 = vmatpush1.msra.mxu0 0.0
    %3242 = vmatprep.subr.mxu0 0.0
    %3243 = vmatpush1.msra.mxu0 0.0
    %3244 = vmatprep.subr.mxu0 0.0
    %3245 = vmatpush1.msra.mxu0 0.0
    %3246 = vmatprep.subr.mxu0 0.0
    %3247 = vmatpush1.msra.mxu0 0.0
    %3248 = vmatprep.subr.mxu0 0.0
    %3249 = vmatpush1.msra.mxu0 0.0
    %3250 = vmatprep.subr.mxu0 0.0
    %3251 = vmatpush1.msra.mxu0 0.0
    %3252 = vmatprep.subr.mxu0 0.0
    %3253 = vmatpush1.msra.mxu0 0.0
    %3254 = vmatprep.subr.mxu0 0.0
    %3255 = vmatpush1.msra.mxu0 0.0
    %3256 = vmatprep.subr.mxu0 0.0
    %3257 = vmatpush1.msra.mxu0 0.0
    %3258 = vmatprep.subr.mxu0 0.0
    %3259 = vmatpush1.msra.mxu0 0.0
    %3260 = vmatprep.subr.mxu0 %v3165
    %3261 = vmatpush1.msra.mxu0 %v3162
    %3262 = vmatprep.subr.mxu0 %v3150
    %3263 = vmatpush1.msra.mxu0 %v3149
    %3264 = vmatprep.subr.mxu0 %v3146
    %3265 = vmatpush1.msra.mxu0 %v3145
    %3266 = vmatprep.subr.mxu0 %v3142
    %3267 = vmatpush1.msra.mxu0 %v3141
    %3268 = vmatprep.subr.mxu0 %v3138
    %3269 = vmatpush1.msra.mxu0 %v3137
    %3270 = vmatprep.subr.mxu0 0.0
    %3271 = vmatpush2.msra.mxu0 0.0
    %3272 = vmatprep.subr.mxu0 0.0
    %3273 = vmatpush2.msra.mxu0 0.0
    %3274 = vmatprep.subr.mxu0 0.0
    %3275 = vmatpush2.msra.mxu0 0.0
    %3276 = vmatprep.subr.mxu0 0.0
    %3277 = vmatpush2.msra.mxu0 0.0
    %3278 = vmatprep.subr.mxu0 0.0
    %3279 = vmatpush2.msra.mxu0 0.0
    %3280 = vmatprep.subr.mxu0 0.0
    %3281 = vmatpush2.msra.mxu0 0.0
    %3282 = vmatprep.subr.mxu0 0.0
    %3283 = vmatpush2.msra.mxu0 0.0
    %3284 = vmatprep.subr.mxu0 0.0
    %3285 = vmatpush2.msra.mxu0 0.0
    %3286 = vmatprep.subr.mxu0 0.0
    %3287 = vmatpush2.msra.mxu0 0.0
    %3288 = vmatprep.subr.mxu0 0.0
    %3289 = vmatpush2.msra.mxu0 0.0
    %3290 = vmatprep.subr.mxu0 0.0
    %3291 = vmatpush2.msra.mxu0 0.0
    %3292 = vmatprep.subr.mxu0 0.0
    %3293 = vmatpush2.msra.mxu0 0.0
    %3294 = vmatprep.subr.mxu0 0.0
    %3295 = vmatpush2.msra.mxu0 0.0
    %3296 = vmatprep.subr.mxu0 0.0
    %3297 = vmatpush2.msra.mxu0 0.0
    %3298 = vmatprep.subr.mxu0 0.0
    %3299 = vmatpush2.msra.mxu0 0.0
    %3300 = vmatprep.subr.mxu0 0.0
    %3301 = vmatpush2.msra.mxu0 0.0
    %3302 = vmatprep.mubr.f32.mxu0 0.0
    %3303 = vmatmul.mubr.f32.gmra.mxu0 %v54
    %v3304 = vpop.f32.mrf.mxu0
    %v3305 = vadd.f32 %v29, %v3304
    %v3306 = vpop.f32.mrf.mxu0
    %v3307 = vadd.f32 %v29, %v3306
    %3308 = vdwg.mxu0
    %v3309 = vmul.f32 %v2371, 0.2
    %v3310 = vmul.f32 %v2372, 0.2
    %v3311 = vmul.f32 %v2373, 0.2
    %v3312 = vmul.f32 %v2374, 0.2
    %v3313 = vsub.f32 1.0, %v2383
    %v3314 = vsub.f32 1.0, %v2384
    %v3315 = vsub.f32 1.0, %v2385
    %v3316 = vsub.f32 1.0, %v2386
    %v3317 = vmul.f32 %v3309, %v3313
    %v3318 = vmul.f32 %v3310, %v3314
    %v3319 = vmul.f32 %v3311, %v3315
    %v3320 = vmul.f32 %v3312, %v3316
    %v3321 = vadd.f32 %v3317, %v3234
    %v3322 = vadd.f32 %v3318, %v3236
    %v3323 = vadd.f32 %v3319, %v3305
    %v3324 = vadd.f32 %v3320, %v3307
    %vm3325 = vcmp.gt.f32.partialorder %v3321, 0.5
    %vm3326 = vcmp.gt.f32.partialorder %v3322, 0.5
    %vm3327 = vcmp.gt.f32.partialorder %v3323, 0.5
    %vm3328 = vcmp.gt.f32.partialorder %v3324, 0.5
    %v3329 = vsel %vm3325, 1, 0
    %v3330 = vsel %vm3326, 1, 0
    %v3331 = vsel %vm3327, 1, 0
    %v3332 = vsel %vm3328, 1, 0
    %v3333 = vcvt.s32.f32 %v3329
    %v3334 = vcvt.s32.f32 %v3330
    %v3335 = vcvt.s32.f32 %v3331
    %v3336 = vcvt.s32.f32 %v3332
    %v3337 = vadd.f32 %v3333, %v3334
    %v3338 = vadd.f32 %v3337, %v3335
    %v3339 = vadd.f32 %v3338, %v3336
    %v3340 = vmul.f32 %v3339, 0.25
    %3341 = vmatprep.subr.mxu0 %v262
    %3342 = vmatpush1.msra.mxu0 %v261
    %3343 = vmatprep.subr.mxu0 %v260
    %3344 = vmatpush1.msra.mxu0 %v259
    %3345 = vmatprep.subr.mxu0 %v258
    %3346 = vmatpush1.msra.mxu0 %v257
    %3347 = vmatprep.subr.mxu0 %v256
    %3348 = vmatpush1.msra.mxu0 %v255
    %3349 = vmatprep.subr.mxu0 %v254
    %3350 = vmatpush1.msra.mxu0 %v253
    %3351 = vmatprep.subr.mxu0 %v252
    %3352 = vmatpush1.msra.mxu0 %v251
    %3353 = vmatprep.subr.mxu0 %v250
    %3354 = vmatpush1.msra.mxu0 %v249
    %3355 = vmatprep.subr.mxu0 %v248
    %3356 = vmatpush1.msra.mxu0 %v247
    %3357 = vmatprep.subr.mxu0 %v246
    %3358 = vmatpush1.msra.mxu0 %v245
    %3359 = vmatprep.subr.mxu0 %v244
    %3360 = vmatpush1.msra.mxu0 %v243
    %3361 = vmatprep.subr.mxu0 %v242
    %3362 = vmatpush1.msra.mxu0 %v241
    %3363 = vmatprep.subr.mxu0 %v240
    %3364 = vmatpush1.msra.mxu0 %v239
    %3365 = vmatprep.subr.mxu0 %v238
    %3366 = vmatpush1.msra.mxu0 %v237
    %3367 = vmatprep.subr.mxu0 %v236
    %3368 = vmatpush1.msra.mxu0 %v235
    %3369 = vmatprep.subr.mxu0 %v234
    %3370 = vmatpush1.msra.mxu0 %v233
    %3371 = vmatprep.subr.mxu0 %v232
    %3372 = vmatpush1.msra.mxu0 %v231
    %3373 = vmatprep.subr.mxu0 0.0
    %3374 = vmatpush2.msra.mxu0 0.0
    %3375 = vmatprep.subr.mxu0 0.0
    %3376 = vmatpush2.msra.mxu0 0.0
    %3377 = vmatprep.subr.mxu0 0.0
    %3378 = vmatpush2.msra.mxu0 0.0
    %3379 = vmatprep.subr.mxu0 0.0
    %3380 = vmatpush2.msra.mxu0 0.0
    %3381 = vmatprep.subr.mxu0 0.0
    %3382 = vmatpush2.msra.mxu0 0.0
    %3383 = vmatprep.subr.mxu0 0.0
    %3384 = vmatpush2.msra.mxu0 0.0
    %3385 = vmatprep.subr.mxu0 0.0
    %3386 = vmatpush2.msra.mxu0 0.0
    %3387 = vmatprep.subr.mxu0 0.0
    %3388 = vmatpush2.msra.mxu0 0.0
    %3389 = vmatprep.subr.mxu0 0.0
    %3390 = vmatpush2.msra.mxu0 0.0
    %3391 = vmatprep.subr.mxu0 0.0
    %3392 = vmatpush2.msra.mxu0 0.0
    %3393 = vmatprep.subr.mxu0 0.0
    %3394 = vmatpush2.msra.mxu0 0.0
    %3395 = vmatprep.subr.mxu0 0.0
    %3396 = vmatpush2.msra.mxu0 0.0
    %3397 = vmatprep.subr.mxu0 0.0
    %3398 = vmatpush2.msra.mxu0 0.0
    %3399 = vmatprep.subr.mxu0 0.0
    %3400 = vmatpush2.msra.mxu0 0.0
    %3401 = vmatprep.subr.mxu0 0.0
    %3402 = vmatpush2.msra.mxu0 0.0
    %3403 = vmatprep.subr.mxu0 0.0
    %3404 = vmatpush2.msra.mxu0 0.0
    %3405 = vmatprep.mubr.f32.mxu0 0.0
    %3406 = vmatmul.mubr.f32.gmra.mxu0 %v3340
    %v3407 = vpop.f32.mrf.mxu0
    %v3408 = vadd.f32 0.0, %v3407
    %v3409 = vpop.f32.mrf.mxu0
    %v3410 = vadd.f32 0.0, %v3409
    %3411 = vdwg.mxu0
    %v3414 = vcombine.low %v3408, %v3410
    %v3416 = vunpack.c.l.s4 1966171168
    %v3417 = vunpack.c.0.s8 %v3416
    %v3418 = vlaneseq
    %v3419 = vshrl.u32 %v3418, 7
    %v3420 = vsub.s32 %v3417, %v3419
    %v3421 = vrot.slane %v3414, %v3420
    %v3423 = vunpack.c.l.s4 1966171168
    %v3424 = vunpack.c.0.s8 %v3423
    %v3425 = vlaneseq
    %v3426 = vshrl.u32 %v3425, 7
    %v3427 = vsub.s32 %v3424, %v3426
    %v3428 = vrot.slane %v3421, %v3427
    %v3430 = vadd.f32 %v31, %v3428
    %v3432 = vrot.slane %v3340, 1
    %3434 = vmatprep.subr.mxu0 %v385
    %3435 = vmatpush1.msra.mxu0 %v384
    %3436 = vmatprep.subr.mxu0 %v383
    %3437 = vmatpush1.msra.mxu0 %v382
    %3438 = vmatprep.subr.mxu0 %v381
    %3439 = vmatpush1.msra.mxu0 %v380
    %3440 = vmatprep.subr.mxu0 %v379
    %3441 = vmatpush1.msra.mxu0 %v378
    %3442 = vmatprep.subr.mxu0 %v377
    %3443 = vmatpush1.msra.mxu0 %v376
    %3444 = vmatprep.subr.mxu0 %v375
    %3445 = vmatpush1.msra.mxu0 %v374
    %3446 = vmatprep.subr.mxu0 %v373
    %3447 = vmatpush1.msra.mxu0 %v372
    %3448 = vmatprep.subr.mxu0 %v371
    %3449 = vmatpush1.msra.mxu0 %v370
    %3450 = vmatprep.subr.mxu0 %v369
    %3451 = vmatpush1.msra.mxu0 %v368
    %3452 = vmatprep.subr.mxu0 %v367
    %3453 = vmatpush1.msra.mxu0 %v366
    %3454 = vmatprep.subr.mxu0 %v365
    %3455 = vmatpush1.msra.mxu0 %v364
    %3456 = vmatprep.subr.mxu0 %v363
    %3457 = vmatpush1.msra.mxu0 %v362
    %3458 = vmatprep.subr.mxu0 %v361
    %3459 = vmatpush1.msra.mxu0 %v360
    %3460 = vmatprep.subr.mxu0 %v359
    %3461 = vmatpush1.msra.mxu0 %v358
    %3462 = vmatprep.subr.mxu0 %v357
    %3463 = vmatpush1.msra.mxu0 %v356
    %3464 = vmatprep.subr.mxu0 %v355
    %3465 = vmatpush1.msra.mxu0 %v354
    %3466 = vmatprep.subr.mxu0 0.0
    %3467 = vmatpush2.msra.mxu0 0.0
    %3468 = vmatprep.subr.mxu0 0.0
    %3469 = vmatpush2.msra.mxu0 0.0
    %3470 = vmatprep.subr.mxu0 0.0
    %3471 = vmatpush2.msra.mxu0 0.0
    %3472 = vmatprep.subr.mxu0 0.0
    %3473 = vmatpush2.msra.mxu0 0.0
    %3474 = vmatprep.subr.mxu0 0.0
    %3475 = vmatpush2.msra.mxu0 0.0
    %3476 = vmatprep.subr.mxu0 0.0
    %3477 = vmatpush2.msra.mxu0 0.0
    %3478 = vmatprep.subr.mxu0 0.0
    %3479 = vmatpush2.msra.mxu0 0.0
    %3480 = vmatprep.subr.mxu0 0.0
    %3481 = vmatpush2.msra.mxu0 0.0
    %3482 = vmatprep.subr.mxu0 0.0
    %3483 = vmatpush2.msra.mxu0 0.0
    %3484 = vmatprep.subr.mxu0 0.0
    %3485 = vmatpush2.msra.mxu0 0.0
    %3486 = vmatprep.subr.mxu0 0.0
    %3487 = vmatpush2.msra.mxu0 0.0
    %3488 = vmatprep.subr.mxu0 0.0
    %3489 = vmatpush2.msra.mxu0 0.0
    %3490 = vmatprep.subr.mxu0 0.0
    %3491 = vmatpush2.msra.mxu0 0.0
    %3492 = vmatprep.subr.mxu0 0.0
    %3493 = vmatpush2.msra.mxu0 0.0
    %3494 = vmatprep.subr.mxu0 0.0
    %3495 = vmatpush2.msra.mxu0 0.0
    %3496 = vmatprep.subr.mxu0 0.0
    %3497 = vmatpush2.msra.mxu0 0.0
    %3498 = vmatprep.mubr.f32.mxu0 0.0
    %3499 = vmatmul.mubr.f32.gmra.mxu0 %v3432
    %v3500 = vpop.f32.mrf.mxu0
    %v3501 = vadd.f32 0.0, %v3500
    %v3502 = vpop.f32.mrf.mxu0
    %v3503 = vadd.f32 0.0, %v3502
    %3504 = vdwg.mxu0
    %v3507 = vcombine.low %v3501, %v3503
    %v3509 = vunpack.c.l.s4 1966171168
    %v3510 = vunpack.c.0.s8 %v3509
    %v3511 = vlaneseq
    %v3512 = vshrl.u32 %v3511, 7
    %v3513 = vsub.s32 %v3510, %v3512
    %v3514 = vrot.slane %v3507, %v3513
    %v3516 = vunpack.c.l.s4 1966171168
    %v3517 = vunpack.c.0.s8 %v3516
    %v3518 = vlaneseq
    %v3519 = vshrl.u32 %v3518, 7
    %v3520 = vsub.s32 %v3517, %v3519
    %v3521 = vrot.slane %v3514, %v3520
    %v3523 = vadd.f32 %v3430, %v3521
    %v3524 = vrot.slane %v3340, 2
    %3526 = vmatprep.subr.mxu0 %v511
    %3527 = vmatpush1.msra.mxu0 %v510
    %3528 = vmatprep.subr.mxu0 %v509
    %3529 = vmatpush1.msra.mxu0 %v508
    %3530 = vmatprep.subr.mxu0 %v507
    %3531 = vmatpush1.msra.mxu0 %v506
    %3532 = vmatprep.subr.mxu0 %v505
    %3533 = vmatpush1.msra.mxu0 %v504
    %3534 = vmatprep.subr.mxu0 %v503
    %3535 = vmatpush1.msra.mxu0 %v502
    %3536 = vmatprep.subr.mxu0 %v501
    %3537 = vmatpush1.msra.mxu0 %v500
    %3538 = vmatprep.subr.mxu0 %v499
    %3539 = vmatpush1.msra.mxu0 %v498
    %3540 = vmatprep.subr.mxu0 %v497
    %3541 = vmatpush1.msra.mxu0 %v496
    %3542 = vmatprep.subr.mxu0 %v495
    %3543 = vmatpush1.msra.mxu0 %v494
    %3544 = vmatprep.subr.mxu0 %v493
    %3545 = vmatpush1.msra.mxu0 %v492
    %3546 = vmatprep.subr.mxu0 %v491
    %3547 = vmatpush1.msra.mxu0 %v490
    %3548 = vmatprep.subr.mxu0 %v489
    %3549 = vmatpush1.msra.mxu0 %v488
    %3550 = vmatprep.subr.mxu0 %v487
    %3551 = vmatpush1.msra.mxu0 %v486
    %3552 = vmatprep.subr.mxu0 %v485
    %3553 = vmatpush1.msra.mxu0 %v484
    %3554 = vmatprep.subr.mxu0 %v483
    %3555 = vmatpush1.msra.mxu0 %v482
    %3556 = vmatprep.subr.mxu0 %v481
    %3557 = vmatpush1.msra.mxu0 %v480
    %3558 = vmatprep.subr.mxu0 0.0
    %3559 = vmatpush2.msra.mxu0 0.0
    %3560 = vmatprep.subr.mxu0 0.0
    %3561 = vmatpush2.msra.mxu0 0.0
    %3562 = vmatprep.subr.mxu0 0.0
    %3563 = vmatpush2.msra.mxu0 0.0
    %3564 = vmatprep.subr.mxu0 0.0
    %3565 = vmatpush2.msra.mxu0 0.0
    %3566 = vmatprep.subr.mxu0 0.0
    %3567 = vmatpush2.msra.mxu0 0.0
    %3568 = vmatprep.subr.mxu0 0.0
    %3569 = vmatpush2.msra.mxu0 0.0
    %3570 = vmatprep.subr.mxu0 0.0
    %3571 = vmatpush2.msra.mxu0 0.0
    %3572 = vmatprep.subr.mxu0 0.0
    %3573 = vmatpush2.msra.mxu0 0.0
    %3574 = vmatprep.subr.mxu0 0.0
    %3575 = vmatpush2.msra.mxu0 0.0
    %3576 = vmatprep.subr.mxu0 0.0
    %3577 = vmatpush2.msra.mxu0 0.0
    %3578 = vmatprep.subr.mxu0 0.0
    %3579 = vmatpush2.msra.mxu0 0.0
    %3580 = vmatprep.subr.mxu0 0.0
    %3581 = vmatpush2.msra.mxu0 0.0
    %3582 = vmatprep.subr.mxu0 0.0
    %3583 = vmatpush2.msra.mxu0 0.0
    %3584 = vmatprep.subr.mxu0 0.0
    %3585 = vmatpush2.msra.mxu0 0.0
    %3586 = vmatprep.subr.mxu0 0.0
    %3587 = vmatpush2.msra.mxu0 0.0
    %3588 = vmatprep.subr.mxu0 0.0
    %3589 = vmatpush2.msra.mxu0 0.0
    %3590 = vmatprep.mubr.f32.mxu0 0.0
    %3591 = vmatmul.mubr.f32.gmra.mxu0 %v3524
    %v3592 = vpop.f32.mrf.mxu0
    %v3593 = vadd.f32 0.0, %v3592
    %v3594 = vpop.f32.mrf.mxu0
    %v3595 = vadd.f32 0.0, %v3594
    %3596 = vdwg.mxu0
    %v3599 = vcombine.low %v3593, %v3595
    %v3601 = vunpack.c.l.s4 1966171168
    %v3602 = vunpack.c.0.s8 %v3601
    %v3603 = vlaneseq
    %v3604 = vshrl.u32 %v3603, 7
    %v3605 = vsub.s32 %v3602, %v3604
    %v3606 = vrot.slane %v3599, %v3605
    %v3608 = vunpack.c.l.s4 1966171168
    %v3609 = vunpack.c.0.s8 %v3608
    %v3610 = vlaneseq
    %v3611 = vshrl.u32 %v3610, 7
    %v3612 = vsub.s32 %v3609, %v3611
    %v3613 = vrot.slane %v3606, %v3612
    %v3615 = vadd.f32 %v3523, %v3613
    %v3616 = vrot.slane %v3340, 3
    %3618 = vmatprep.subr.mxu0 %v636
    %3619 = vmatpush1.msra.mxu0 %v635
    %3620 = vmatprep.subr.mxu0 %v634
    %3621 = vmatpush1.msra.mxu0 %v633
    %3622 = vmatprep.subr.mxu0 %v632
    %3623 = vmatpush1.msra.mxu0 %v631
    %3624 = vmatprep.subr.mxu0 %v630
    %3625 = vmatpush1.msra.mxu0 %v629
    %3626 = vmatprep.subr.mxu0 %v628
    %3627 = vmatpush1.msra.mxu0 %v627
    %3628 = vmatprep.subr.mxu0 %v626
    %3629 = vmatpush1.msra.mxu0 %v625
    %3630 = vmatprep.subr.mxu0 %v624
    %3631 = vmatpush1.msra.mxu0 %v623
    %3632 = vmatprep.subr.mxu0 %v622
    %3633 = vmatpush1.msra.mxu0 %v621
    %3634 = vmatprep.subr.mxu0 %v620
    %3635 = vmatpush1.msra.mxu0 %v619
    %3636 = vmatprep.subr.mxu0 %v618
    %3637 = vmatpush1.msra.mxu0 %v617
    %3638 = vmatprep.subr.mxu0 %v616
    %3639 = vmatpush1.msra.mxu0 %v615
    %3640 = vmatprep.subr.mxu0 %v614
    %3641 = vmatpush1.msra.mxu0 %v613
    %3642 = vmatprep.subr.mxu0 %v612
    %3643 = vmatpush1.msra.mxu0 %v611
    %3644 = vmatprep.subr.mxu0 %v610
    %3645 = vmatpush1.msra.mxu0 %v609
    %3646 = vmatprep.subr.mxu0 %v608
    %3647 = vmatpush1.msra.mxu0 %v607
    %3648 = vmatprep.subr.mxu0 %v606
    %3649 = vmatpush1.msra.mxu0 %v605
    %3650 = vmatprep.subr.mxu0 0.0
    %3651 = vmatpush2.msra.mxu0 0.0
    %3652 = vmatprep.subr.mxu0 0.0
    %3653 = vmatpush2.msra.mxu0 0.0
    %3654 = vmatprep.subr.mxu0 0.0
    %3655 = vmatpush2.msra.mxu0 0.0
    %3656 = vmatprep.subr.mxu0 0.0
    %3657 = vmatpush2.msra.mxu0 0.0
    %3658 = vmatprep.subr.mxu0 0.0
    %3659 = vmatpush2.msra.mxu0 0.0
    %3660 = vmatprep.subr.mxu0 0.0
    %3661 = vmatpush2.msra.mxu0 0.0
    %3662 = vmatprep.subr.mxu0 0.0
    %3663 = vmatpush2.msra.mxu0 0.0
    %3664 = vmatprep.subr.mxu0 0.0
    %3665 = vmatpush2.msra.mxu0 0.0
    %3666 = vmatprep.subr.mxu0 0.0
    %3667 = vmatpush2.msra.mxu0 0.0
    %3668 = vmatprep.subr.mxu0 0.0
    %3669 = vmatpush2.msra.mxu0 0.0
    %3670 = vmatprep.subr.mxu0 0.0
    %3671 = vmatpush2.msra.mxu0 0.0
    %3672 = vmatprep.subr.mxu0 0.0
    %3673 = vmatpush2.msra.mxu0 0.0
    %3674 = vmatprep.subr.mxu0 0.0
    %3675 = vmatpush2.msra.mxu0 0.0
    %3676 = vmatprep.subr.mxu0 0.0
    %3677 = vmatpush2.msra.mxu0 0.0
    %3678 = vmatprep.subr.mxu0 0.0
    %3679 = vmatpush2.msra.mxu0 0.0
    %3680 = vmatprep.subr.mxu0 0.0
    %3681 = vmatpush2.msra.mxu0 0.0
    %3682 = vmatprep.mubr.f32.mxu0 0.0
    %3683 = vmatmul.mubr.f32.gmra.mxu0 %v3616
    %v3684 = vpop.f32.mrf.mxu0
    %v3685 = vadd.f32 0.0, %v3684
    %v3686 = vpop.f32.mrf.mxu0
    %v3687 = vadd.f32 0.0, %v3686
    %3688 = vdwg.mxu0
    %v3691 = vcombine.low %v3685, %v3687
    %v3693 = vunpack.c.l.s4 1966171168
    %v3694 = vunpack.c.0.s8 %v3693
    %v3695 = vlaneseq
    %v3696 = vshrl.u32 %v3695, 7
    %v3697 = vsub.s32 %v3694, %v3696
    %v3698 = vrot.slane %v3691, %v3697
    %v3700 = vunpack.c.l.s4 1966171168
    %v3701 = vunpack.c.0.s8 %v3700
    %v3702 = vlaneseq
    %v3703 = vshrl.u32 %v3702, 7
    %v3704 = vsub.s32 %v3701, %v3703
    %v3705 = vrot.slane %v3698, %v3704
    %v3707 = vadd.f32 %v3615, %v3705
    %v3708 = vrot.slane %v3340, 4
    %3710 = vmatprep.subr.mxu0 %v761
    %3711 = vmatpush1.msra.mxu0 %v760
    %3712 = vmatprep.subr.mxu0 %v759
    %3713 = vmatpush1.msra.mxu0 %v758
    %3714 = vmatprep.subr.mxu0 %v757
    %3715 = vmatpush1.msra.mxu0 %v756
    %3716 = vmatprep.subr.mxu0 %v755
    %3717 = vmatpush1.msra.mxu0 %v754
    %3718 = vmatprep.subr.mxu0 %v753
    %3719 = vmatpush1.msra.mxu0 %v752
    %3720 = vmatprep.subr.mxu0 %v751
    %3721 = vmatpush1.msra.mxu0 %v750
    %3722 = vmatprep.subr.mxu0 %v749
    %3723 = vmatpush1.msra.mxu0 %v748
    %3724 = vmatprep.subr.mxu0 %v747
    %3725 = vmatpush1.msra.mxu0 %v746
    %3726 = vmatprep.subr.mxu0 %v745
    %3727 = vmatpush1.msra.mxu0 %v744
    %3728 = vmatprep.subr.mxu0 %v743
    %3729 = vmatpush1.msra.mxu0 %v742
    %3730 = vmatprep.subr.mxu0 %v741
    %3731 = vmatpush1.msra.mxu0 %v740
    %3732 = vmatprep.subr.mxu0 %v739
    %3733 = vmatpush1.msra.mxu0 %v738
    %3734 = vmatprep.subr.mxu0 %v737
    %3735 = vmatpush1.msra.mxu0 %v736
    %3736 = vmatprep.subr.mxu0 %v735
    %3737 = vmatpush1.msra.mxu0 %v734
    %3738 = vmatprep.subr.mxu0 %v733
    %3739 = vmatpush1.msra.mxu0 %v732
    %3740 = vmatprep.subr.mxu0 %v731
    %3741 = vmatpush1.msra.mxu0 %v730
    %3742 = vmatprep.subr.mxu0 0.0
    %3743 = vmatpush2.msra.mxu0 0.0
    %3744 = vmatprep.subr.mxu0 0.0
    %3745 = vmatpush2.msra.mxu0 0.0
    %3746 = vmatprep.subr.mxu0 0.0
    %3747 = vmatpush2.msra.mxu0 0.0
    %3748 = vmatprep.subr.mxu0 0.0
    %3749 = vmatpush2.msra.mxu0 0.0
    %3750 = vmatprep.subr.mxu0 0.0
    %3751 = vmatpush2.msra.mxu0 0.0
    %3752 = vmatprep.subr.mxu0 0.0
    %3753 = vmatpush2.msra.mxu0 0.0
    %3754 = vmatprep.subr.mxu0 0.0
    %3755 = vmatpush2.msra.mxu0 0.0
    %3756 = vmatprep.subr.mxu0 0.0
    %3757 = vmatpush2.msra.mxu0 0.0
    %3758 = vmatprep.subr.mxu0 0.0
    %3759 = vmatpush2.msra.mxu0 0.0
    %3760 = vmatprep.subr.mxu0 0.0
    %3761 = vmatpush2.msra.mxu0 0.0
    %3762 = vmatprep.subr.mxu0 0.0
    %3763 = vmatpush2.msra.mxu0 0.0
    %3764 = vmatprep.subr.mxu0 0.0
    %3765 = vmatpush2.msra.mxu0 0.0
    %3766 = vmatprep.subr.mxu0 0.0
    %3767 = vmatpush2.msra.mxu0 0.0
    %3768 = vmatprep.subr.mxu0 0.0
    %3769 = vmatpush2.msra.mxu0 0.0
    %3770 = vmatprep.subr.mxu0 0.0
    %3771 = vmatpush2.msra.mxu0 0.0
    %3772 = vmatprep.subr.mxu0 0.0
    %3773 = vmatpush2.msra.mxu0 0.0
    %3774 = vmatprep.mubr.f32.mxu0 0.0
    %3775 = vmatmul.mubr.f32.gmra.mxu0 %v3708
    %v3776 = vpop.f32.mrf.mxu0
    %v3777 = vadd.f32 0.0, %v3776
    %v3778 = vpop.f32.mrf.mxu0
    %v3779 = vadd.f32 0.0, %v3778
    %3780 = vdwg.mxu0
    %v3783 = vcombine.low %v3777, %v3779
    %v3785 = vunpack.c.l.s4 1966171168
    %v3786 = vunpack.c.0.s8 %v3785
    %v3787 = vlaneseq
    %v3788 = vshrl.u32 %v3787, 7
    %v3789 = vsub.s32 %v3786, %v3788
    %v3790 = vrot.slane %v3783, %v3789
    %v3792 = vunpack.c.l.s4 1966171168
    %v3793 = vunpack.c.0.s8 %v3792
    %v3794 = vlaneseq
    %v3795 = vshrl.u32 %v3794, 7
    %v3796 = vsub.s32 %v3793, %v3795
    %v3797 = vrot.slane %v3790, %v3796
    %v3799 = vadd.f32 %v3707, %v3797
    %v3800 = vrot.slane %v3340, 5
    %3802 = vmatprep.subr.mxu0 %v886
    %3803 = vmatpush1.msra.mxu0 %v885
    %3804 = vmatprep.subr.mxu0 %v884
    %3805 = vmatpush1.msra.mxu0 %v883
    %3806 = vmatprep.subr.mxu0 %v882
    %3807 = vmatpush1.msra.mxu0 %v881
    %3808 = vmatprep.subr.mxu0 %v880
    %3809 = vmatpush1.msra.mxu0 %v879
    %3810 = vmatprep.subr.mxu0 %v878
    %3811 = vmatpush1.msra.mxu0 %v877
    %3812 = vmatprep.subr.mxu0 %v876
    %3813 = vmatpush1.msra.mxu0 %v875
    %3814 = vmatprep.subr.mxu0 %v874
    %3815 = vmatpush1.msra.mxu0 %v873
    %3816 = vmatprep.subr.mxu0 %v872
    %3817 = vmatpush1.msra.mxu0 %v871
    %3818 = vmatprep.subr.mxu0 %v870
    %3819 = vmatpush1.msra.mxu0 %v869
    %3820 = vmatprep.subr.mxu0 %v868
    %3821 = vmatpush1.msra.mxu0 %v867
    %3822 = vmatprep.subr.mxu0 %v866
    %3823 = vmatpush1.msra.mxu0 %v865
    %3824 = vmatprep.subr.mxu0 %v864
    %3825 = vmatpush1.msra.mxu0 %v863
    %3826 = vmatprep.subr.mxu0 %v862
    %3827 = vmatpush1.msra.mxu0 %v861
    %3828 = vmatprep.subr.mxu0 %v860
    %3829 = vmatpush1.msra.mxu0 %v859
    %3830 = vmatprep.subr.mxu0 %v858
    %3831 = vmatpush1.msra.mxu0 %v857
    %3832 = vmatprep.subr.mxu0 %v856
    %3833 = vmatpush1.msra.mxu0 %v855
    %3834 = vmatprep.subr.mxu0 0.0
    %3835 = vmatpush2.msra.mxu0 0.0
    %3836 = vmatprep.subr.mxu0 0.0
    %3837 = vmatpush2.msra.mxu0 0.0
    %3838 = vmatprep.subr.mxu0 0.0
    %3839 = vmatpush2.msra.mxu0 0.0
    %3840 = vmatprep.subr.mxu0 0.0
    %3841 = vmatpush2.msra.mxu0 0.0
    %3842 = vmatprep.subr.mxu0 0.0
    %3843 = vmatpush2.msra.mxu0 0.0
    %3844 = vmatprep.subr.mxu0 0.0
    %3845 = vmatpush2.msra.mxu0 0.0
    %3846 = vmatprep.subr.mxu0 0.0
    %3847 = vmatpush2.msra.mxu0 0.0
    %3848 = vmatprep.subr.mxu0 0.0
    %3849 = vmatpush2.msra.mxu0 0.0
    %3850 = vmatprep.subr.mxu0 0.0
    %3851 = vmatpush2.msra.mxu0 0.0
    %3852 = vmatprep.subr.mxu0 0.0
    %3853 = vmatpush2.msra.mxu0 0.0
    %3854 = vmatprep.subr.mxu0 0.0
    %3855 = vmatpush2.msra.mxu0 0.0
    %3856 = vmatprep.subr.mxu0 0.0
    %3857 = vmatpush2.msra.mxu0 0.0
    %3858 = vmatprep.subr.mxu0 0.0
    %3859 = vmatpush2.msra.mxu0 0.0
    %3860 = vmatprep.subr.mxu0 0.0
    %3861 = vmatpush2.msra.mxu0 0.0
    %3862 = vmatprep.subr.mxu0 0.0
    %3863 = vmatpush2.msra.mxu0 0.0
    %3864 = vmatprep.subr.mxu0 0.0
    %3865 = vmatpush2.msra.mxu0 0.0
    %3866 = vmatprep.mubr.f32.mxu0 0.0
    %3867 = vmatmul.mubr.f32.gmra.mxu0 %v3800
    %v3868 = vpop.f32.mrf.mxu0
    %v3869 = vadd.f32 0.0, %v3868
    %v3870 = vpop.f32.mrf.mxu0
    %v3871 = vadd.f32 0.0, %v3870
    %3872 = vdwg.mxu0
    %v3875 = vcombine.low %v3869, %v3871
    %v3877 = vunpack.c.l.s4 1966171168
    %v3878 = vunpack.c.0.s8 %v3877
    %v3879 = vlaneseq
    %v3880 = vshrl.u32 %v3879, 7
    %v3881 = vsub.s32 %v3878, %v3880
    %v3882 = vrot.slane %v3875, %v3881
    %v3884 = vunpack.c.l.s4 1966171168
    %v3885 = vunpack.c.0.s8 %v3884
    %v3886 = vlaneseq
    %v3887 = vshrl.u32 %v3886, 7
    %v3888 = vsub.s32 %v3885, %v3887
    %v3889 = vrot.slane %v3882, %v3888
    %v3891 = vadd.f32 %v3799, %v3889
    %v3892 = vrot.slane %v3340, 6
    %3894 = vmatprep.subr.mxu0 %v1011
    %3895 = vmatpush1.msra.mxu0 %v1010
    %3896 = vmatprep.subr.mxu0 %v1009
    %3897 = vmatpush1.msra.mxu0 %v1008
    %3898 = vmatprep.subr.mxu0 %v1007
    %3899 = vmatpush1.msra.mxu0 %v1006
    %3900 = vmatprep.subr.mxu0 %v1005
    %3901 = vmatpush1.msra.mxu0 %v1004
    %3902 = vmatprep.subr.mxu0 %v1003
    %3903 = vmatpush1.msra.mxu0 %v1002
    %3904 = vmatprep.subr.mxu0 %v1001
    %3905 = vmatpush1.msra.mxu0 %v1000
    %3906 = vmatprep.subr.mxu0 %v999
    %3907 = vmatpush1.msra.mxu0 %v998
    %3908 = vmatprep.subr.mxu0 %v997
    %3909 = vmatpush1.msra.mxu0 %v996
    %3910 = vmatprep.subr.mxu0 %v995
    %3911 = vmatpush1.msra.mxu0 %v994
    %3912 = vmatprep.subr.mxu0 %v993
    %3913 = vmatpush1.msra.mxu0 %v992
    %3914 = vmatprep.subr.mxu0 %v991
    %3915 = vmatpush1.msra.mxu0 %v990
    %3916 = vmatprep.subr.mxu0 %v989
    %3917 = vmatpush1.msra.mxu0 %v988
    %3918 = vmatprep.subr.mxu0 %v987
    %3919 = vmatpush1.msra.mxu0 %v986
    %3920 = vmatprep.subr.mxu0 %v985
    %3921 = vmatpush1.msra.mxu0 %v984
    %3922 = vmatprep.subr.mxu0 %v983
    %3923 = vmatpush1.msra.mxu0 %v982
    %3924 = vmatprep.subr.mxu0 %v981
    %3925 = vmatpush1.msra.mxu0 %v980
    %3926 = vmatprep.subr.mxu0 0.0
    %3927 = vmatpush2.msra.mxu0 0.0
    %3928 = vmatprep.subr.mxu0 0.0
    %3929 = vmatpush2.msra.mxu0 0.0
    %3930 = vmatprep.subr.mxu0 0.0
    %3931 = vmatpush2.msra.mxu0 0.0
    %3932 = vmatprep.subr.mxu0 0.0
    %3933 = vmatpush2.msra.mxu0 0.0
    %3934 = vmatprep.subr.mxu0 0.0
    %3935 = vmatpush2.msra.mxu0 0.0
    %3936 = vmatprep.subr.mxu0 0.0
    %3937 = vmatpush2.msra.mxu0 0.0
    %3938 = vmatprep.subr.mxu0 0.0
    %3939 = vmatpush2.msra.mxu0 0.0
    %3940 = vmatprep.subr.mxu0 0.0
    %3941 = vmatpush2.msra.mxu0 0.0
    %3942 = vmatprep.subr.mxu0 0.0
    %3943 = vmatpush2.msra.mxu0 0.0
    %3944 = vmatprep.subr.mxu0 0.0
    %3945 = vmatpush2.msra.mxu0 0.0
    %3946 = vmatprep.subr.mxu0 0.0
    %3947 = vmatpush2.msra.mxu0 0.0
    %3948 = vmatprep.subr.mxu0 0.0
    %3949 = vmatpush2.msra.mxu0 0.0
    %3950 = vmatprep.subr.mxu0 0.0
    %3951 = vmatpush2.msra.mxu0 0.0
    %3952 = vmatprep.subr.mxu0 0.0
    %3953 = vmatpush2.msra.mxu0 0.0
    %3954 = vmatprep.subr.mxu0 0.0
    %3955 = vmatpush2.msra.mxu0 0.0
    %3956 = vmatprep.subr.mxu0 0.0
    %3957 = vmatpush2.msra.mxu0 0.0
    %3958 = vmatprep.mubr.f32.mxu0 0.0
    %3959 = vmatmul.mubr.f32.gmra.mxu0 %v3892
    %v3960 = vpop.f32.mrf.mxu0
    %v3961 = vadd.f32 0.0, %v3960
    %v3962 = vpop.f32.mrf.mxu0
    %v3963 = vadd.f32 0.0, %v3962
    %3964 = vdwg.mxu0
    %v3967 = vcombine.low %v3961, %v3963
    %v3969 = vunpack.c.l.s4 1966171168
    %v3970 = vunpack.c.0.s8 %v3969
    %v3971 = vlaneseq
    %v3972 = vshrl.u32 %v3971, 7
    %v3973 = vsub.s32 %v3970, %v3972
    %v3974 = vrot.slane %v3967, %v3973
    %v3976 = vunpack.c.l.s4 1966171168
    %v3977 = vunpack.c.0.s8 %v3976
    %v3978 = vlaneseq
    %v3979 = vshrl.u32 %v3978, 7
    %v3980 = vsub.s32 %v3977, %v3979
    %v3981 = vrot.slane %v3974, %v3980
    %v3983 = vadd.f32 %v3891, %v3981
    %v3984 = vrot.slane %v3340, 7
    %3986 = vmatprep.subr.mxu0 %v1136
    %3987 = vmatpush1.msra.mxu0 %v1135
    %3988 = vmatprep.subr.mxu0 %v1134
    %3989 = vmatpush1.msra.mxu0 %v1133
    %3990 = vmatprep.subr.mxu0 %v1132
    %3991 = vmatpush1.msra.mxu0 %v1131
    %3992 = vmatprep.subr.mxu0 %v1130
    %3993 = vmatpush1.msra.mxu0 %v1129
    %3994 = vmatprep.subr.mxu0 %v1128
    %3995 = vmatpush1.msra.mxu0 %v1127
    %3996 = vmatprep.subr.mxu0 %v1126
    %3997 = vmatpush1.msra.mxu0 %v1125
    %3998 = vmatprep.subr.mxu0 %v1124
    %3999 = vmatpush1.msra.mxu0 %v1123
    %4000 = vmatprep.subr.mxu0 %v1122
    %4001 = vmatpush1.msra.mxu0 %v1121
    %4002 = vmatprep.subr.mxu0 %v1120
    %4003 = vmatpush1.msra.mxu0 %v1119
    %4004 = vmatprep.subr.mxu0 %v1118
    %4005 = vmatpush1.msra.mxu0 %v1117
    %4006 = vmatprep.subr.mxu0 %v1116
    %4007 = vmatpush1.msra.mxu0 %v1115
    %4008 = vmatprep.subr.mxu0 %v1114
    %4009 = vmatpush1.msra.mxu0 %v1113
    %4010 = vmatprep.subr.mxu0 %v1112
    %4011 = vmatpush1.msra.mxu0 %v1111
    %4012 = vmatprep.subr.mxu0 %v1110
    %4013 = vmatpush1.msra.mxu0 %v1109
    %4014 = vmatprep.subr.mxu0 %v1108
    %4015 = vmatpush1.msra.mxu0 %v1107
    %4016 = vmatprep.subr.mxu0 %v1106
    %4017 = vmatpush1.msra.mxu0 %v1105
    %4018 = vmatprep.subr.mxu0 0.0
    %4019 = vmatpush2.msra.mxu0 0.0
    %4020 = vmatprep.subr.mxu0 0.0
    %4021 = vmatpush2.msra.mxu0 0.0
    %4022 = vmatprep.subr.mxu0 0.0
    %4023 = vmatpush2.msra.mxu0 0.0
    %4024 = vmatprep.subr.mxu0 0.0
    %4025 = vmatpush2.msra.mxu0 0.0
    %4026 = vmatprep.subr.mxu0 0.0
    %4027 = vmatpush2.msra.mxu0 0.0
    %4028 = vmatprep.subr.mxu0 0.0
    %4029 = vmatpush2.msra.mxu0 0.0
    %4030 = vmatprep.subr.mxu0 0.0
    %4031 = vmatpush2.msra.mxu0 0.0
    %4032 = vmatprep.subr.mxu0 0.0
    %4033 = vmatpush2.msra.mxu0 0.0
    %4034 = vmatprep.subr.mxu0 0.0
    %4035 = vmatpush2.msra.mxu0 0.0
    %4036 = vmatprep.subr.mxu0 0.0
    %4037 = vmatpush2.msra.mxu0 0.0
    %4038 = vmatprep.subr.mxu0 0.0
    %4039 = vmatpush2.msra.mxu0 0.0
    %4040 = vmatprep.subr.mxu0 0.0
    %4041 = vmatpush2.msra.mxu0 0.0
    %4042 = vmatprep.subr.mxu0 0.0
    %4043 = vmatpush2.msra.mxu0 0.0
    %4044 = vmatprep.subr.mxu0 0.0
    %4045 = vmatpush2.msra.mxu0 0.0
    %4046 = vmatprep.subr.mxu0 0.0
    %4047 = vmatpush2.msra.mxu0 0.0
    %4048 = vmatprep.subr.mxu0 0.0
    %4049 = vmatpush2.msra.mxu0 0.0
    %4050 = vmatprep.mubr.f32.mxu0 0.0
    %4051 = vmatmul.mubr.f32.gmra.mxu0 %v3984
    %v4052 = vpop.f32.mrf.mxu0
    %v4053 = vadd.f32 0.0, %v4052
    %v4054 = vpop.f32.mrf.mxu0
    %v4055 = vadd.f32 0.0, %v4054
    %4056 = vdwg.mxu0
    %v4059 = vcombine.low %v4053, %v4055
    %v4061 = vunpack.c.l.s4 1966171168
    %v4062 = vunpack.c.0.s8 %v4061
    %v4063 = vlaneseq
    %v4064 = vshrl.u32 %v4063, 7
    %v4065 = vsub.s32 %v4062, %v4064
    %v4066 = vrot.slane %v4059, %v4065
    %v4068 = vunpack.c.l.s4 1966171168
    %v4069 = vunpack.c.0.s8 %v4068
    %v4070 = vlaneseq
    %v4071 = vshrl.u32 %v4070, 7
    %v4072 = vsub.s32 %v4069, %v4071
    %v4073 = vrot.slane %v4066, %v4072
    %v4075 = vadd.f32 %v3983, %v4073
    %v4076 = vmul.f32 %v3129, 0.2
    %v4077 = vsub.f32 1.0, %v3132
    %v4078 = vmul.f32 %v4076, %v4077
    %v4079 = vadd.f32 %v4078, %v4075
    %vm4080 = vcmp.gt.f32.partialorder %v4079, 0.5
    %v4081 = vsel %vm4080, 1, 0
    %v4082 = vcvt.s32.f32 %v4081
    %v4083 = vadd.f32 %v3133, %v4082
    %v4084 = vmul.f32 %v4083, 0.25
    %v4085 = vlaneseq
    %vm4086 = vcmp.ge.s32.totalorder %v4085, 0
    %vm4087 = vcmp.lt.s32.totalorder %v4085, 256
    %vm4088 = vmand %vm4086, %vm4087
    %4089 = vst.msk [vmem:[#allocation2] sm:$0x3] %vm4088, %v4084
    %4090 = vst [vmem:[#allocation4] sm:$0xff] %v211
    %4091 = vst [vmem:[#allocation4 + $0x8] sm:$0xff] %v212
    %4092 = vst [vmem:[#allocation4 + $0x10] sm:$0xff] %v213
    %4093 = vst [vmem:[#allocation4 + $0x18] sm:$0xff] %v214
    // Predicated region
    $region22: #{snn_forward.1} parent=1 // pred_check
      _
    $region23: #{snn_forward.1} parent=1 // pred_check_branch
      %4095 = sbr.rel (0) target = $region25
    $region24: #{snn_forward.1} parent=1 // pred_region
      %s4097 = ssub.s32 32, 32
      %4098 = vsyncadd [#allocation3], %s4097
      %s4100 = sshll.u32 [#allocation2], 4
      %s4101 = int_to_ptr.vmem [resolvable:$true] %s4100
      %4103 = dma.vmem_to_hbm [thread:$0]  %s4101, 32, %s5, [#allocation3]
    $region25: #{snn_forward.1} parent=1 // pred_fallthru
      _
    // Predicated region
    $region26: #{snn_forward.1} parent=1 // pred_check
      _
    $region27: #{snn_forward.1} parent=1 // pred_check_branch
      %4105 = sbr.rel (0) target = $region29
    $region28: #{snn_forward.1} parent=1 // pred_region
      %s4107 = ssub.s32 512, 512
      %4108 = vsyncadd [#allocation5], %s4107
      %s4110 = sshll.u32 [#allocation4], 4
      %s4111 = int_to_ptr.vmem [resolvable:$true] %s4110
      %4113 = dma.vmem_to_hbm [thread:$0]  %s4111, 512, %s6, [#allocation5]
    $region29: #{snn_forward.1} parent=1 // pred_fallthru
      _
    // Predicated region
    $region30: #{snn_forward.1} parent=1 // pred_check
      _
    $region31: #{snn_forward.1} parent=1 // pred_check_branch
      %4115 = sbr.rel (0) target = $region33
    $region32: #{snn_forward.1} parent=1 // pred_region
      %4116 = dma.done [#allocation3], 32
    $region33: #{snn_forward.1} parent=1 // pred_fallthru
      _
    // Predicated region
    $region34: #{snn_forward.1} parent=1 // pred_check
      _
    $region35: #{snn_forward.1} parent=1 // pred_check_branch
      %4118 = sbr.rel (0) target = $region37
    $region36: #{snn_forward.1} parent=1 // pred_region
      %4119 = dma.done [#allocation5], 512
    $region37: #{snn_forward.1} parent=1 // pred_fallthru
      _
    %4120 = vsyncpa [#allocation3], 1
    %4121 = vsyncpa [#allocation5], 1

</llo_original>
